<compile_context>
chip_gen: v7x
topology: tpu7x:2x2x1
jax: 0.10.0
libtpu: 0.0.40
codegen_flags: <defaults>
</compile_context>

<pallas_src>
import math

import jax
import jax.numpy as jnp
from jax import lax
from jax.experimental import pallas as pl
from jax.experimental.pallas import tpu as pltpu

MXU_DTYPE = jnp.bfloat16      # matmul operand dtype (f32 accumulation on the MXU)
LN_EPS = 1e-6                 # module uses LayerNorm(..., eps=1e-06)
SCAN_CHUNK = 128              # timesteps per selective-scan chunk
ROW_TILE = 256                # row tile for the pointwise (LN / FFN) kernels


# ----------------------------- small helpers (in-kernel) -----------------------------

def _silu(x):
    return x * jax.nn.sigmoid(x)


def _softplus(x):
    return jnp.maximum(x, 0.0) + jnp.log(1.0 + jnp.exp(-jnp.abs(x)))


def _mxdot(a, b):
    """MXU matmul with bf16 operands and f32 accumulation."""
    return jnp.dot(a.astype(MXU_DTYPE), b.astype(MXU_DTYPE),
                   preferred_element_type=jnp.float32)


# --------------------------------- Mamba core kernel ---------------------------------

def _make_mamba_kernel(L, L_out, d_inner, d_state, d_conv, dt_rank, chunk):
    """Build a fused Mamba-block kernel for one batch element.

    The kernel computes, for an (L, d_model) sequence, the Mamba output for the
    last `L_out` timesteps (L_out == L for the self path; L_out == L_tgt for the
    cross path, skipping gate/out_proj work on the memory prefix).
    """
    offset = L - L_out
    n_chunks = -(-L // chunk)
    L_pad = n_chunks * chunk

    def kernel(x_ref, wx_ref, wz_ref, convw_ref, convb_ref,
               wfused_ref, dtw_ref, dtb_ref, a_ref, dskip_ref, wout_ref,
               o_ref,
               xpad_scr, xc_scr, dt_scr, b_scr, c_scr, y_scr, da_scr, dbh_scr):
        x_in = x_ref[...]                                        # (L, d_model) f32

        # ---- in_proj (x branch) + causal depthwise conv + SiLU -------------------
        x_part = _mxdot(x_in, wx_ref[...])                       # (L, d_inner) f32
        xpad_scr[0:d_conv - 1, :] = jnp.zeros((d_conv - 1, d_inner), jnp.float32)
        xpad_scr[d_conv - 1:d_conv - 1 + L, :] = x_part
        cw = convw_ref[...]                                      # (d_conv, d_inner)
        acc = jnp.zeros((L, d_inner), jnp.float32)
        for k in range(d_conv):                                  # small static unroll
            acc = acc + xpad_scr[k:k + L, :] * cw[k:k + 1, :]
        xc = _silu(acc + convb_ref[...])                         # (L, d_inner)
        xc_scr[0:L, :] = xc

        # ---- fused dt/B/C projection (single MXU matmul, split in-register) ------
        proj = jnp.dot(xc, wfused_ref[...], preferred_element_type=jnp.float32)
        dt = _softplus(jnp.dot(proj[:, 0:dt_rank], dtw_ref[...],
                               preferred_element_type=jnp.float32) + dtb_ref[...])
        dt_scr[0:L, :] = dt
        b_scr[0:L, :] = proj[:, dt_rank:dt_rank + d_state]
        c_scr[0:L, :] = proj[:, dt_rank + d_state:dt_rank + 2 * d_state]
        if L_pad > L:     # keep padded scan steps inert (dA = 1, dB*x = 0, y = 0)
            pad = L_pad - L
            dt_scr[L:L_pad, :] = jnp.zeros((pad, d_inner), jnp.float32)
            xc_scr[L:L_pad, :] = jnp.zeros((pad, d_inner), jnp.float32)
            b_scr[L:L_pad, :] = jnp.zeros((pad, d_state), jnp.float32)
            c_scr[L:L_pad, :] = jnp.zeros((pad, d_state), jnp.float32)

        a_mat = a_ref[...]                                       # (d_state, d_inner)
        d_vec = dskip_ref[...]                                   # (1, d_inner)

        # ---- chunked selective scan ------------------------------------------------
        # da_scr / dbh_scr rows are time-major: row = t_local * d_state + s.
        def chunk_body(c, h):
            start = pl.multiple_of(c * chunk, chunk)
            dt_c = dt_scr[pl.ds(start, chunk), :]                # (chunk, d_inner)
            x_c = xc_scr[pl.ds(start, chunk), :]
            b_c = b_scr[pl.ds(start, chunk), :]                  # (chunk, d_state)
            u_c = dt_c * x_c

            # chunk-batched discretization: dA = exp(dt*A_s), dBx = B_s*dt*x
            for s in range(d_state):
                da_scr[pl.ds(s, chunk, stride=d_state), :] = (
                    jnp.exp(dt_c * a_mat[s:s + 1, :]))
                dbh_scr[pl.ds(s, chunk, stride=d_state), :] = (
                    b_c[:, s:s + 1] * u_c)

            # sequential recurrence over the chunk; overwrite dbh_scr with h states
            def step(t, h):
                row = pl.multiple_of(t * d_state, d_state)
                h = da_scr[pl.ds(row, d_state), :] * h + dbh_scr[pl.ds(row, d_state), :]
                dbh_scr[pl.ds(row, d_state), :] = h
                return h

            h = lax.fori_loop(0, chunk, step, h)

            # chunk output: y_t = sum_s h_t[s] * C[t, s] + D * x_t
            def emit():
                c_c = c_scr[pl.ds(start, chunk), :]
                y = d_vec * x_c
                for s in range(d_state):
                    y = y + dbh_scr[pl.ds(s, chunk, stride=d_state), :] * c_c[:, s:s + 1]
                y_scr[pl.ds(start, chunk), :] = y

            if offset > 0:           # cross path: skip pure memory-prefix chunks
                pl.when(start + chunk > offset)(emit)
            else:
                emit()
            return h

        h0 = jnp.zeros((d_state, d_inner), jnp.float32)
        lax.fori_loop(0, n_chunks, chunk_body, h0)

        # ---- gate (last L_out rows only) + out_proj --------------------------------
        z = _mxdot(x_in[offset:offset + L_out, :], wz_ref[...])  # (L_out, d_inner)
        gated = y_scr[offset:offset + L_out, :] * _silu(z)
        o_ref[...] = _mxdot(gated, wout_ref[...]).astype(o_ref.dtype)

    return kernel, L_pad


def mamba_forward(x, p, l_out=None):
    """Fused Mamba block on (B, L, d_model); returns the last `l_out` timesteps."""
    B, L, D = x.shape
    d_conv, d_inner = p['conv_w'].shape
    d_state = p['A_t'].shape[0]
    dt_rank = p['dt_w'].shape[0]
    if l_out is None:
        l_out = L
    chunk = min(SCAN_CHUNK, ((L + 7) // 8) * 8)
    kernel, L_pad = _make_mamba_kernel(L, l_out, d_inner, d_state, d_conv,
                                       dt_rank, chunk)

    wx = p['in_proj_w'][:, :d_inner].astype(MXU_DTYPE)
    wz = p['in_proj_w'][:, d_inner:].astype(MXU_DTYPE)
    w_fused = jnp.concatenate([p['w_dt'], p['w_B'], p['w_C']], axis=1)
    w_out = p['out_proj_w'].astype(MXU_DTYPE)

    def full(arr):
        nd = arr.ndim
        return pl.BlockSpec(arr.shape, lambda b: (0,) * nd)

    seq_in = pl.BlockSpec((None, L, D), lambda b: (b, 0, 0))
    seq_out = pl.BlockSpec((None, l_out, D), lambda b: (b, 0, 0))

    return pl.pallas_call(
        kernel,
        grid=(B,),
        in_specs=[seq_in,
                  full(wx), full(wz),
                  full(p['conv_w']), full(p['conv_b']),
                  full(w_fused), full(p['dt_w']), full(p['dt_b']),
                  full(p['A_t']), full(p['D']), full(w_out)],
        out_specs=seq_out,
        out_shape=jax.ShapeDtypeStruct((B, l_out, D), x.dtype),
        scratch_shapes=[
            pltpu.VMEM((L + d_conv - 1, d_inner), jnp.float32),    # padded conv input
            pltpu.VMEM((L_pad, d_inner), jnp.float32),             # xc (post conv+SiLU)
            pltpu.VMEM((L_pad, d_inner), jnp.float32),             # dt
            pltpu.VMEM((L_pad, d_state), jnp.float32),             # B
            pltpu.VMEM((L_pad, d_state), jnp.float32),             # C
            pltpu.VMEM((L_pad, d_inner), jnp.float32),             # y (pre-gate)
            pltpu.VMEM((chunk * d_state, d_inner), jnp.float32),   # dA  (time-major)
            pltpu.VMEM((chunk * d_state, d_inner), jnp.float32),   # dB*x -> h states
        ],
        compiler_params=pltpu.CompilerParams(
            dimension_semantics=("parallel",)),
    )(x, wx, wz, p['conv_w'], p['conv_b'], w_fused, p['dt_w'], p['dt_b'],
      p['A_t'], p['D'], w_out)


# -------------------------- fused residual-add + LayerNorm --------------------------

def _add_ln_kernel(x_ref, r_ref, w_ref, b_ref, o_ref):
    y = x_ref[...].astype(jnp.float32) + r_ref[...].astype(jnp.float32)
    mu = jnp.mean(y, axis=-1, keepdims=True)
    var = jnp.mean(jnp.square(y - mu), axis=-1, keepdims=True)
    yn = (y - mu) * lax.rsqrt(var + LN_EPS)
    o_ref[...] = (yn * w_ref[...] + b_ref[...]).astype(o_ref.dtype)


def add_layernorm(x, res, w, b):
    """LayerNorm(res + x), row-tiled over (B*L) rows."""
    B, L, D = x.shape
    rows = B * L
    tm = min(ROW_TILE, rows)
    row_spec = pl.BlockSpec((tm, D), lambda i: (i, 0))
    vec_spec = pl.BlockSpec((1, D), lambda i: (0, 0))
    y = pl.pallas_call(
        _add_ln_kernel,
        grid=(pl.cdiv(rows, tm),),
        in_specs=[row_spec, row_spec, vec_spec, vec_spec],
        out_specs=row_spec,
        out_shape=jax.ShapeDtypeStruct((rows, D), x.dtype),
        compiler_params=pltpu.CompilerParams(dimension_semantics=("parallel",)),
    )(x.reshape(rows, D), res.reshape(rows, D), w.reshape(1, D), b.reshape(1, D))
    return y.reshape(B, L, D)


# ----------------------- fused FFN + residual-add + LayerNorm -----------------------

def _ffn_add_ln_kernel(x_ref, w1_ref, b1_ref, w2_ref, b2_ref, g_ref, be_ref, o_ref):
    x = x_ref[...].astype(jnp.float32)
    h = jnp.maximum(_mxdot(x, w1_ref[...]) + b1_ref[...], 0.0)      # ReLU
    y = x + _mxdot(h, w2_ref[...]) + b2_ref[...]                    # residual
    mu = jnp.mean(y, axis=-1, keepdims=True)
    var = jnp.mean(jnp.square(y - mu), axis=-1, keepdims=True)
    yn = (y - mu) * lax.rsqrt(var + LN_EPS)
    o_ref[...] = (yn * g_ref[...] + be_ref[...]).astype(o_ref.dtype)


def ffn_add_layernorm(x, w1, b1, w2, b2, g, be):
    B, L, D = x.shape
    d_ffn = w1.shape[1]
    rows = B * L
    tm = min(ROW_TILE, rows)
    row_spec = pl.BlockSpec((tm, D), lambda i: (i, 0))
    y = pl.pallas_call(
        _ffn_add_ln_kernel,
        grid=(pl.cdiv(rows, tm),),
        in_specs=[row_spec,
                  pl.BlockSpec((D, d_ffn), lambda i: (0, 0)),
                  pl.BlockSpec((1, d_ffn), lambda i: (0, 0)),
                  pl.BlockSpec((d_ffn, D), lambda i: (0, 0)),
                  pl.BlockSpec((1, D), lambda i: (0, 0)),
                  pl.BlockSpec((1, D), lambda i: (0, 0)),
                  pl.BlockSpec((1, D), lambda i: (0, 0))],
        out_specs=row_spec,
        out_shape=jax.ShapeDtypeStruct((rows, D), x.dtype),
        compiler_params=pltpu.CompilerParams(dimension_semantics=("parallel",)),
    )(x.reshape(rows, D), w1.astype(MXU_DTYPE), b1.reshape(1, d_ffn),
      w2.astype(MXU_DTYPE), b2.reshape(1, D), g.reshape(1, D), be.reshape(1, D))
    return y.reshape(B, L, D)


# --------------------------------- decoder layer -------------------------------------

def mamba_decoder_layer(tgt, memory, params):
    """MambaDecoderLayer.forward with normalize_before=False, dropout=0."""
    L_tgt = tgt.shape[1]

    # self mamba + residual + norm1 (post-norm)
    tgt2 = mamba_forward(tgt, params['self_mamba'])
    tgt = add_layernorm(tgt2, tgt, params['norm1_w'], params['norm1_b'])

    # cross mamba over concat([memory, tgt]); only the last L_tgt rows are produced
    cat = jnp.concatenate([memory, tgt], axis=1)
    tgt2 = mamba_forward(cat, params['cross_mamba'], l_out=L_tgt)
    tgt = add_layernorm(tgt2, tgt, params['norm2_w'], params['norm2_b'])

    # positionwise FFN + residual + norm3 (fused)
    tgt = ffn_add_layernorm(tgt, params['ffn_w1'], params['ffn_b1'],
                            params['ffn_w2'], params['ffn_b2'],
                            params['norm3_w'], params['norm3_b'])
    return tgt, None, None


# -------------------------------- deterministic params --------------------------------

def init_mamba_params(key, d_model, d_state=16, d_conv=4, expand=2):
    d_inner = expand * d_model
    dt_rank = math.ceil(d_model / 16)
    ks = jax.random.split(key, 9)

    def w(k, shape, scale):
        return jax.random.normal(k, shape, jnp.float32) * scale

    p = {
        'in_proj_w': w(ks[0], (d_model, 2 * d_inner), 1.0 / math.sqrt(d_model)),
        'conv_w':    w(ks[1], (d_conv, d_inner), 1.0 / math.sqrt(d_conv)),
        'conv_b':    w(ks[2], (1, d_inner), 0.02),
        'w_dt':      w(ks[3], (d_inner, dt_rank), 1.0 / math.sqrt(d_inner)),
        'w_B':       w(ks[4], (d_inner, d_state), 1.0 / math.sqrt(d_inner)),
        'w_C':       w(ks[5], (d_inner, d_state), 1.0 / math.sqrt(d_inner)),
        'dt_w':      w(ks[6], (dt_rank, d_inner), 1.0 / math.sqrt(max(dt_rank, 1))),
        'dt_b':      w(ks[7], (1, d_inner), 0.02),
        'out_proj_w': w(ks[8], (d_inner, d_model), 1.0 / math.sqrt(d_inner)),
    }
    # A = -exp(A_log), standard init A_log = log(arange(1, d_state+1)); stored transposed.
    A = -jnp.tile(jnp.arange(1, d_state + 1, dtype=jnp.float32)[None, :], (d_inner, 1))
    p['A_t'] = A.T                                   # (d_state, d_inner)
    p['D'] = jnp.ones((1, d_inner), jnp.float32)
    return p


def init_decoder_params(key, d_model, d_ffn):
    k_self, k_cross, k1, k2, k3, k4 = jax.random.split(key, 6)
    return {
        'self_mamba': init_mamba_params(k_self, d_model),
        'cross_mamba': init_mamba_params(k_cross, d_model),
        'ffn_w1': jax.random.normal(k1, (d_model, d_ffn), jnp.float32) / math.sqrt(d_model),
        'ffn_b1': jax.random.normal(k2, (d_ffn,), jnp.float32) * 0.02,
        'ffn_w2': jax.random.normal(k3, (d_ffn, d_model), jnp.float32) / math.sqrt(d_ffn),
        'ffn_b2': jax.random.normal(k4, (d_model,), jnp.float32) * 0.02,
        'norm1_w': jnp.ones((d_model,), jnp.float32),
        'norm1_b': jnp.zeros((d_model,), jnp.float32),
        'norm2_w': jnp.ones((d_model,), jnp.float32),
        'norm2_b': jnp.zeros((d_model,), jnp.float32),
        'norm3_w': jnp.ones((d_model,), jnp.float32),
        'norm3_b': jnp.zeros((d_model,), jnp.float32),
    }


# -------------------------------------- main --------------------------------------

if __name__ == "__main__":
    B, L_TGT, L_MEM, D_MODEL, D_FFN = 2, 8, 8, 32, 64

    key = jax.random.PRNGKey(0)
    k_tgt, k_mem, k_par = jax.random.split(key, 3)
    tgt = jax.random.normal(k_tgt, (B, L_TGT, D_MODEL), jnp.float32)
    memory = jax.random.normal(k_mem, (B, L_MEM, D_MODEL), jnp.float32)
    params = init_decoder_params(k_par, D_MODEL, D_FFN)

    @jax.jit
    def run(t, m):
        out, _, _ = mamba_decoder_layer(t, m, params)
        return out

    out = jax.block_until_ready(run(tgt, memory))
    assert out.shape == (B, L_TGT, D_MODEL)
    assert bool(jnp.all(jnp.isfinite(out)))
    print("KERNEL_OK")
</pallas_src>

<mosaic_0001>
module attributes {stable_mosaic.version = 11 : i64} {
  func.func @_add_ln_kernel(%arg0: i32, %arg1: memref<16x32xf32, #tpu.memory_space<vmem>>, %arg2: memref<16x32xf32, #tpu.memory_space<vmem>>, %arg3: memref<1x32xf32, #tpu.memory_space<vmem>>, %arg4: memref<1x32xf32, #tpu.memory_space<vmem>>, %arg5: memref<16x32xf32, #tpu.memory_space<vmem>>) attributes {dimension_semantics = [#tpu.dimension_semantics<parallel>], iteration_bounds = array<i64: 1>, scalar_prefetch = 0 : i64, scratch_operands = 0 : i64, tpu.core_type = #tpu.core_type<tc>, window_params = [{transform_indices = @transform_0, window_bounds = array<i64: 16, 32>}, {transform_indices = @transform_1, window_bounds = array<i64: 16, 32>}, {pipeline_mode = #tpu.pipeline_mode<synchronous>, transform_indices = @transform_2, window_bounds = array<i64: 1, 32>}, {pipeline_mode = #tpu.pipeline_mode<synchronous>, transform_indices = @transform_3, window_bounds = array<i64: 1, 32>}, {transform_indices = @transform_4, window_bounds = array<i64: 16, 32>}]} {
    %c0 = arith.constant 0 : index
    %c0_0 = arith.constant 0 : index
    %0 = vector.load %arg1[%c0, %c0_0] : memref<16x32xf32, #tpu.memory_space<vmem>>, vector<16x32xf32>
    %c0_1 = arith.constant 0 : index
    %c0_2 = arith.constant 0 : index
    %1 = vector.load %arg2[%c0_1, %c0_2] : memref<16x32xf32, #tpu.memory_space<vmem>>, vector<16x32xf32>
    %2 = arith.addf %0, %1 : vector<16x32xf32>
    %cst = arith.constant dense<0.000000e+00> : vector<16xf32>
    %3 = vector.multi_reduction <add>, %2, %cst [1] : vector<16x32xf32> to vector<16xf32>
    %4 = vector.shape_cast %3 : vector<16xf32> to vector<16x1xf32>
    %cst_3 = arith.constant 3.200000e+01 : f32
    %5 = vector.broadcast %cst_3 : f32 to vector<16x1xf32>
    %6 = arith.divf %4, %5 : vector<16x1xf32>
    %7 = vector.broadcast %6 : vector<16x1xf32> to vector<16x32xf32>
    %8 = arith.subf %2, %7 : vector<16x32xf32>
    %9 = arith.mulf %8, %8 : vector<16x32xf32>
    %cst_4 = arith.constant dense<0.000000e+00> : vector<16xf32>
    %10 = vector.multi_reduction <add>, %9, %cst_4 [1] : vector<16x32xf32> to vector<16xf32>
    %11 = vector.shape_cast %10 : vector<16xf32> to vector<16x1xf32>
    %cst_5 = arith.constant 3.200000e+01 : f32
    %12 = vector.broadcast %cst_5 : f32 to vector<16x1xf32>
    %13 = arith.divf %11, %12 : vector<16x1xf32>
    %14 = vector.broadcast %6 : vector<16x1xf32> to vector<16x32xf32>
    %15 = arith.subf %2, %14 : vector<16x32xf32>
    %cst_6 = arith.constant 9.99999997E-7 : f32
    %16 = vector.broadcast %cst_6 : f32 to vector<16x1xf32>
    %17 = arith.addf %13, %16 : vector<16x1xf32>
    %18 = math.rsqrt %17 : vector<16x1xf32>
    %19 = vector.broadcast %18 : vector<16x1xf32> to vector<16x32xf32>
    %20 = arith.mulf %15, %19 : vector<16x32xf32>
    %c0_7 = arith.constant 0 : index
    %c0_8 = arith.constant 0 : index
    %21 = vector.load %arg3[%c0_7, %c0_8] : memref<1x32xf32, #tpu.memory_space<vmem>>, vector<1x32xf32>
    %22 = vector.broadcast %21 : vector<1x32xf32> to vector<16x32xf32>
    %23 = arith.mulf %20, %22 : vector<16x32xf32>
    %c0_9 = arith.constant 0 : index
    %c0_10 = arith.constant 0 : index
    %24 = vector.load %arg4[%c0_9, %c0_10] : memref<1x32xf32, #tpu.memory_space<vmem>>, vector<1x32xf32>
    %25 = vector.broadcast %24 : vector<1x32xf32> to vector<16x32xf32>
    %26 = arith.addf %23, %25 : vector<16x32xf32>
    %c0_11 = arith.constant 0 : index
    %c0_12 = arith.constant 0 : index
    %27 = vector.load %arg5[%c0_11, %c0_12] : memref<16x32xf32, #tpu.memory_space<vmem>>, vector<16x32xf32>
    tpu.vector_store %arg5[%c0_11, %c0_12], %26 {strides = array<i32>} : memref<16x32xf32, #tpu.memory_space<vmem>>, vector<16x32xf32>,
    return
  }
  func.func @transform_0(%arg0: i32) -> (i32, i32) {
    %c0_i32 = arith.constant 0 : i32
    %c0_i32_0 = arith.constant 0 : i32
    return %arg0, %c0_i32 : i32, i32
  }
  func.func @transform_1(%arg0: i32) -> (i32, i32) {
    %c0_i32 = arith.constant 0 : i32
    %c0_i32_0 = arith.constant 0 : i32
    return %arg0, %c0_i32 : i32, i32
  }
  func.func @transform_2(%arg0: i32) -> (i32, i32) {
    %c0_i32 = arith.constant 0 : i32
    %c0_i32_0 = arith.constant 0 : i32
    %c0_i32_1 = arith.constant 0 : i32
    return %c0_i32, %c0_i32_0 : i32, i32
  }
  func.func @transform_3(%arg0: i32) -> (i32, i32) {
    %c0_i32 = arith.constant 0 : i32
    %c0_i32_0 = arith.constant 0 : i32
    %c0_i32_1 = arith.constant 0 : i32
    return %c0_i32, %c0_i32_0 : i32, i32
  }
  func.func @transform_4(%arg0: i32) -> (i32, i32) {
    %c0_i32 = arith.constant 0 : i32
    %c0_i32_0 = arith.constant 0 : i32
    return %arg0, %c0_i32 : i32, i32
  }
}

module attributes {stable_mosaic.version = 11 : i64} {
  func.func @kernel(%arg0: i32, %arg1: memref<1x8x32xf32, #tpu.memory_space<vmem>>, %arg2: memref<32x64xbf16, #tpu.memory_space<vmem>>, %arg3: memref<32x64xbf16, #tpu.memory_space<vmem>>, %arg4: memref<4x64xf32, #tpu.memory_space<vmem>>, %arg5: memref<1x64xf32, #tpu.memory_space<vmem>>, %arg6: memref<64x34xf32, #tpu.memory_space<vmem>>, %arg7: memref<2x64xf32, #tpu.memory_space<vmem>>, %arg8: memref<1x64xf32, #tpu.memory_space<vmem>>, %arg9: memref<16x64xf32, #tpu.memory_space<vmem>>, %arg10: memref<1x64xf32, #tpu.memory_space<vmem>>, %arg11: memref<64x32xbf16, #tpu.memory_space<vmem>>, %arg12: memref<1x8x32xf32, #tpu.memory_space<vmem>>, %arg13: memref<11x64xf32, #tpu.memory_space<vmem>>, %arg14: memref<8x64xf32, #tpu.memory_space<vmem>>, %arg15: memref<8x64xf32, #tpu.memory_space<vmem>>, %arg16: memref<8x16xf32, #tpu.memory_space<vmem>>, %arg17: memref<8x16xf32, #tpu.memory_space<vmem>>, %arg18: memref<8x64xf32, #tpu.memory_space<vmem>>, %arg19: memref<128x64xf32, #tpu.memory_space<vmem>>, %arg20: memref<128x64xf32, #tpu.memory_space<vmem>>) attributes {dimension_semantics = [#tpu.dimension_semantics<parallel>], iteration_bounds = array<i64: 2>, scalar_prefetch = 0 : i64, scratch_operands = 8 : i64, tpu.core_type = #tpu.core_type<tc>, window_params = [{transform_indices = @transform_0, window_bounds = array<i64: 1, 8, 32>}, {pipeline_mode = #tpu.pipeline_mode<synchronous>, transform_indices = @transform_1, window_bounds = array<i64: 32, 64>}, {pipeline_mode = #tpu.pipeline_mode<synchronous>, transform_indices = @transform_2, window_bounds = array<i64: 32, 64>}, {pipeline_mode = #tpu.pipeline_mode<synchronous>, transform_indices = @transform_3, window_bounds = array<i64: 4, 64>}, {pipeline_mode = #tpu.pipeline_mode<synchronous>, transform_indices = @transform_4, window_bounds = array<i64: 1, 64>}, {pipeline_mode = #tpu.pipeline_mode<synchronous>, transform_indices = @transform_5, window_bounds = array<i64: 64, 34>}, {pipeline_mode = #tpu.pipeline_mode<synchronous>, transform_indices = @transform_6, window_bounds = array<i64: 2, 64>}, {pipeline_mode = #tpu.pipeline_mode<synchronous>, transform_indices = @transform_7, window_bounds = array<i64: 1, 64>}, {pipeline_mode = #tpu.pipeline_mode<synchronous>, transform_indices = @transform_8, window_bounds = array<i64: 16, 64>}, {pipeline_mode = #tpu.pipeline_mode<synchronous>, transform_indices = @transform_9, window_bounds = array<i64: 1, 64>}, {pipeline_mode = #tpu.pipeline_mode<synchronous>, transform_indices = @transform_10, window_bounds = array<i64: 64, 32>}, {transform_indices = @transform_11, window_bounds = array<i64: 1, 8, 32>}]} {
    %c0 = arith.constant 0 : index
    %c0_0 = arith.constant 0 : index
    %c0_1 = arith.constant 0 : index
    %0 = vector.load %arg1[%c0, %c0_0, %c0_1] : memref<1x8x32xf32, #tpu.memory_space<vmem>>, vector<1x8x32xf32>
    %1 = vector.shape_cast %0 : vector<1x8x32xf32> to vector<8x32xf32>
    %c0_2 = arith.constant 0 : index
    %c0_3 = arith.constant 0 : index
    %2 = vector.load %arg2[%c0_2, %c0_3] : memref<32x64xbf16, #tpu.memory_space<vmem>>, vector<32x64xbf16>
    %3 = arith.truncf %1 : vector<8x32xf32> to vector<8x32xbf16>
    %cst = arith.constant dense<0.000000e+00> : vector<8x64xf32>
    %4 = tpu.matmul %3, %2, %cst {dimension_numbers = #tpu.dot_dimension_numbers<[1], [0], [0], [1], [0, 0, 1, 1], [], []>} : vector<8x32xbf16>, vector<32x64xbf16>, vector<8x64xf32> -> vector<8x64xf32>
    %cst_4 = arith.constant 0.000000e+00 : f32
    %5 = vector.broadcast %cst_4 : f32 to vector<3x64xf32>
    %c0_5 = arith.constant 0 : index
    %c0_6 = arith.constant 0 : index
    %6 = vector.load %arg13[%c0_5, %c0_6] : memref<11x64xf32, #tpu.memory_space<vmem>>, vector<3x64xf32>
    tpu.vector_store %arg13[%c0_5, %c0_6], %5 {strides = array<i32>} : memref<11x64xf32, #tpu.memory_space<vmem>>, vector<3x64xf32>,
    %c3 = arith.constant 3 : index
    %c0_7 = arith.constant 0 : index
    %7 = vector.load %arg13[%c3, %c0_7] : memref<11x64xf32, #tpu.memory_space<vmem>>, vector<8x64xf32>
    tpu.vector_store %arg13[%c3, %c0_7], %4 {strides = array<i32>} : memref<11x64xf32, #tpu.memory_space<vmem>>, vector<8x64xf32>,
    %c0_8 = arith.constant 0 : index
    %c0_9 = arith.constant 0 : index
    %8 = vector.load %arg4[%c0_8, %c0_9] : memref<4x64xf32, #tpu.memory_space<vmem>>, vector<4x64xf32>
    %cst_10 = arith.constant 0.000000e+00 : f32
    %9 = vector.broadcast %cst_10 : f32 to vector<8x64xf32>
    %c0_11 = arith.constant 0 : index
    %c0_12 = arith.constant 0 : index
    %10 = vector.load %arg13[%c0_11, %c0_12] : memref<11x64xf32, #tpu.memory_space<vmem>>, vector<8x64xf32>
    %11 = vector.extract_strided_slice %8 {offsets = [0, 0], sizes = [1, 64], strides = [1, 1]} : vector<4x64xf32> to vector<1x64xf32>
    %12 = vector.broadcast %11 : vector<1x64xf32> to vector<8x64xf32>
    %13 = arith.mulf %10, %12 : vector<8x64xf32>
    %14 = arith.addf %9, %13 : vector<8x64xf32>
    %c1 = arith.constant 1 : index
    %c0_13 = arith.constant 0 : index
    %15 = vector.load %arg13[%c1, %c0_13] : memref<11x64xf32, #tpu.memory_space<vmem>>, vector<8x64xf32>
    %16 = vector.extract_strided_slice %8 {offsets = [1, 0], sizes = [1, 64], strides = [1, 1]} : vector<4x64xf32> to vector<1x64xf32>
    %17 = vector.broadcast %16 : vector<1x64xf32> to vector<8x64xf32>
    %18 = arith.mulf %15, %17 : vector<8x64xf32>
    %19 = arith.addf %14, %18 : vector<8x64xf32>
    %c2 = arith.constant 2 : index
    %c0_14 = arith.constant 0 : index
    %20 = vector.load %arg13[%c2, %c0_14] : memref<11x64xf32, #tpu.memory_space<vmem>>, vector<8x64xf32>
    %21 = vector.extract_strided_slice %8 {offsets = [2, 0], sizes = [1, 64], strides = [1, 1]} : vector<4x64xf32> to vector<1x64xf32>
    %22 = vector.broadcast %21 : vector<1x64xf32> to vector<8x64xf32>
    %23 = arith.mulf %20, %22 : vector<8x64xf32>
    %24 = arith.addf %19, %23 : vector<8x64xf32>
    %c3_15 = arith.constant 3 : index
    %c0_16 = arith.constant 0 : index
    %25 = vector.load %arg13[%c3_15, %c0_16] : memref<11x64xf32, #tpu.memory_space<vmem>>, vector<8x64xf32>
    %26 = vector.extract_strided_slice %8 {offsets = [3, 0], sizes = [1, 64], strides = [1, 1]} : vector<4x64xf32> to vector<1x64xf32>
    %27 = vector.broadcast %26 : vector<1x64xf32> to vector<8x64xf32>
    %28 = arith.mulf %25, %27 : vector<8x64xf32>
    %29 = arith.addf %24, %28 : vector<8x64xf32>
    %c0_17 = arith.constant 0 : index
    %c0_18 = arith.constant 0 : index
    %30 = vector.load %arg5[%c0_17, %c0_18] : memref<1x64xf32, #tpu.memory_space<vmem>>, vector<1x64xf32>
    %31 = vector.broadcast %30 : vector<1x64xf32> to vector<8x64xf32>
    %32 = arith.addf %29, %31 : vector<8x64xf32>
    %33 = arith.negf %32 : vector<8x64xf32>
    %34 = math.exp %33 : vector<8x64xf32>
    %cst_19 = arith.constant 1.000000e+00 : f32
    %35 = vector.broadcast %cst_19 : f32 to vector<8x64xf32>
    %36 = arith.addf %35, %34 : vector<8x64xf32>
    %37 = arith.divf %35, %36 : vector<8x64xf32>
    %38 = arith.mulf %32, %37 : vector<8x64xf32>
    %c0_20 = arith.constant 0 : index
    %c0_21 = arith.constant 0 : index
    %39 = vector.load %arg14[%c0_20, %c0_21] : memref<8x64xf32, #tpu.memory_space<vmem>>, vector<8x64xf32>
    tpu.vector_store %arg14[%c0_20, %c0_21], %38 {strides = array<i32>} : memref<8x64xf32, #tpu.memory_space<vmem>>, vector<8x64xf32>,
    %c0_22 = arith.constant 0 : index
    %c0_23 = arith.constant 0 : index
    %40 = vector.load %arg6[%c0_22, %c0_23] : memref<64x34xf32, #tpu.memory_space<vmem>>, vector<64x34xf32>
    %cst_24 = arith.constant dense<0.000000e+00> : vector<8x34xf32>
    %41 = tpu.matmul %38, %40, %cst_24 {dimension_numbers = #tpu.dot_dimension_numbers<[1], [0], [0], [1], [0, 0, 1, 1], [], []>} : vector<8x64xf32>, vector<64x34xf32>, vector<8x34xf32> -> vector<8x34xf32>
    %42 = vector.extract_strided_slice %41 {offsets = [0, 0], sizes = [8, 2], strides = [1, 1]} : vector<8x34xf32> to vector<8x2xf32>
    %c0_25 = arith.constant 0 : index
    %c0_26 = arith.constant 0 : index
    %43 = vector.load %arg7[%c0_25, %c0_26] : memref<2x64xf32, #tpu.memory_space<vmem>>, vector<2x64xf32>
    %cst_27 = arith.constant dense<0.000000e+00> : vector<8x64xf32>
    %44 = tpu.matmul %42, %43, %cst_27 {dimension_numbers = #tpu.dot_dimension_numbers<[1], [0], [0], [1], [0, 0, 1, 1], [], []>} : vector<8x2xf32>, vector<2x64xf32>, vector<8x64xf32> -> vector<8x64xf32>
    %c0_28 = arith.constant 0 : index
    %c0_29 = arith.constant 0 : index
    %45 = vector.load %arg8[%c0_28, %c0_29] : memref<1x64xf32, #tpu.memory_space<vmem>>, vector<1x64xf32>
    %46 = vector.broadcast %45 : vector<1x64xf32> to vector<8x64xf32>
    %47 = arith.addf %44, %46 : vector<8x64xf32>
    %cst_30 = arith.constant 0.000000e+00 : f32
    %48 = vector.broadcast %cst_30 : f32 to vector<8x64xf32>
    %49 = arith.maximumf %47, %48 : vector<8x64xf32>
    %50 = math.absf %47 : vector<8x64xf32>
    %cst_31 = arith.constant 0.000000e+00 : f32
    %51 = vector.broadcast %cst_31 : f32 to vector<8x64xf32>
    %52 = arith.subf %51, %50 : vector<8x64xf32>
    %53 = math.exp %52 : vector<8x64xf32>
    %cst_32 = arith.constant 1.000000e+00 : f32
    %54 = vector.broadcast %cst_32 : f32 to vector<8x64xf32>
    %55 = arith.addf %54, %53 : vector<8x64xf32>
    %56 = math.log %55 : vector<8x64xf32>
    %57 = arith.addf %49, %56 : vector<8x64xf32>
    %c0_33 = arith.constant 0 : index
    %c0_34 = arith.constant 0 : index
    %58 = vector.load %arg15[%c0_33, %c0_34] : memref<8x64xf32, #tpu.memory_space<vmem>>, vector<8x64xf32>
    tpu.vector_store %arg15[%c0_33, %c0_34], %57 {strides = array<i32>} : memref<8x64xf32, #tpu.memory_space<vmem>>, vector<8x64xf32>,
    %59 = vector.extract_strided_slice %41 {offsets = [0, 2], sizes = [8, 16], strides = [1, 1]} : vector<8x34xf32> to vector<8x16xf32>
    %c0_35 = arith.constant 0 : index
    %c0_36 = arith.constant 0 : index
    %60 = vector.load %arg16[%c0_35, %c0_36] : memref<8x16xf32, #tpu.memory_space<vmem>>, vector<8x16xf32>
    tpu.vector_store %arg16[%c0_35, %c0_36], %59 {strides = array<i32>} : memref<8x16xf32, #tpu.memory_space<vmem>>, vector<8x16xf32>,
    %61 = vector.extract_strided_slice %41 {offsets = [0, 18], sizes = [8, 16], strides = [1, 1]} : vector<8x34xf32> to vector<8x16xf32>
    %c0_37 = arith.constant 0 : index
    %c0_38 = arith.constant 0 : index
    %62 = vector.load %arg17[%c0_37, %c0_38] : memref<8x16xf32, #tpu.memory_space<vmem>>, vector<8x16xf32>
    tpu.vector_store %arg17[%c0_37, %c0_38], %61 {strides = array<i32>} : memref<8x16xf32, #tpu.memory_space<vmem>>, vector<8x16xf32>,
    %c0_39 = arith.constant 0 : index
    %c0_40 = arith.constant 0 : index
    %63 = vector.load %arg9[%c0_39, %c0_40] : memref<16x64xf32, #tpu.memory_space<vmem>>, vector<16x64xf32>
    %c0_41 = arith.constant 0 : index
    %c0_42 = arith.constant 0 : index
    %64 = vector.load %arg10[%c0_41, %c0_42] : memref<1x64xf32, #tpu.memory_space<vmem>>, vector<1x64xf32>
    %cst_43 = arith.constant 0.000000e+00 : f32
    %65 = vector.broadcast %cst_43 : f32 to vector<16x64xf32>
    %c0_i32 = arith.constant 0 : i32
    %c8_i32 = arith.constant 8 : i32
    %66 = arith.muli %c0_i32, %c8_i32 : i32
    %67 = tpu.assume_multiple %66, 8 : i32
    %68 = arith.index_cast %67 : i32 to index
    %c0_44 = arith.constant 0 : index
    %69 = vector.load %arg15[%68, %c0_44] : memref<8x64xf32, #tpu.memory_space<vmem>>, vector<8x64xf32>
    %70 = arith.index_cast %67 : i32 to index
    %c0_45 = arith.constant 0 : index
    %71 = vector.load %arg14[%70, %c0_45] : memref<8x64xf32, #tpu.memory_space<vmem>>, vector<8x64xf32>
    %72 = arith.index_cast %67 : i32 to index
    %c0_46 = arith.constant 0 : index
    %73 = vector.load %arg16[%72, %c0_46] : memref<8x16xf32, #tpu.memory_space<vmem>>, vector<8x16xf32>
    %74 = arith.mulf %69, %71 : vector<8x64xf32>
    %75 = vector.extract_strided_slice %63 {offsets = [0, 0], sizes = [1, 64], strides = [1, 1]} : vector<16x64xf32> to vector<1x64xf32>
    %76 = vector.broadcast %75 : vector<1x64xf32> to vector<8x64xf32>
    %77 = arith.mulf %69, %76 : vector<8x64xf32>
    %78 = math.exp %77 : vector<8x64xf32>
    %c0_47 = arith.constant 0 : index
    %c0_48 = arith.constant 0 : index
    %79 = tpu.strided_load %arg19[%c0_47, %c0_48] {strides = array<i32: 16, 1>} : memref<128x64xf32, #tpu.memory_space<vmem>>, vector<8x64xf32>
    tpu.strided_store %arg19[%c0_47, %c0_48], %78 {strides = array<i32: 16, 1>} : memref<128x64xf32, #tpu.memory_space<vmem>>, vector<8x64xf32>
    %80 = vector.extract_strided_slice %73 {offsets = [0, 0], sizes = [8, 1], strides = [1, 1]} : vector<8x16xf32> to vector<8x1xf32>
    %81 = vector.broadcast %80 : vector<8x1xf32> to vector<8x64xf32>
    %82 = arith.mulf %81, %74 : vector<8x64xf32>
    %c0_49 = arith.constant 0 : index
    %c0_50 = arith.constant 0 : index
    %83 = tpu.strided_load %arg20[%c0_49, %c0_50] {strides = array<i32: 16, 1>} : memref<128x64xf32, #tpu.memory_space<vmem>>, vector<8x64xf32>
    tpu.strided_store %arg20[%c0_49, %c0_50], %82 {strides = array<i32: 16, 1>} : memref<128x64xf32, #tpu.memory_space<vmem>>, vector<8x64xf32>
    %84 = vector.extract_strided_slice %63 {offsets = [1, 0], sizes = [1, 64], strides = [1, 1]} : vector<16x64xf32> to vector<1x64xf32>
    %85 = vector.broadcast %84 : vector<1x64xf32> to vector<8x64xf32>
    %86 = arith.mulf %69, %85 : vector<8x64xf32>
    %87 = math.exp %86 : vector<8x64xf32>
    %c1_51 = arith.constant 1 : index
    %c0_52 = arith.constant 0 : index
    %88 = tpu.strided_load %arg19[%c1_51, %c0_52] {strides = array<i32: 16, 1>} : memref<128x64xf32, #tpu.memory_space<vmem>>, vector<8x64xf32>
    tpu.strided_store %arg19[%c1_51, %c0_52], %87 {strides = array<i32: 16, 1>} : memref<128x64xf32, #tpu.memory_space<vmem>>, vector<8x64xf32>
    %89 = vector.extract_strided_slice %73 {offsets = [0, 1], sizes = [8, 1], strides = [1, 1]} : vector<8x16xf32> to vector<8x1xf32>
    %90 = vector.broadcast %89 : vector<8x1xf32> to vector<8x64xf32>
    %91 = arith.mulf %90, %74 : vector<8x64xf32>
    %c1_53 = arith.constant 1 : index
    %c0_54 = arith.constant 0 : index
    %92 = tpu.strided_load %arg20[%c1_53, %c0_54] {strides = array<i32: 16, 1>} : memref<128x64xf32, #tpu.memory_space<vmem>>, vector<8x64xf32>
    tpu.strided_store %arg20[%c1_53, %c0_54], %91 {strides = array<i32: 16, 1>} : memref<128x64xf32, #tpu.memory_space<vmem>>, vector<8x64xf32>
    %93 = vector.extract_strided_slice %63 {offsets = [2, 0], sizes = [1, 64], strides = [1, 1]} : vector<16x64xf32> to vector<1x64xf32>
    %94 = vector.broadcast %93 : vector<1x64xf32> to vector<8x64xf32>
    %95 = arith.mulf %69, %94 : vector<8x64xf32>
    %96 = math.exp %95 : vector<8x64xf32>
    %c2_55 = arith.constant 2 : index
    %c0_56 = arith.constant 0 : index
    %97 = tpu.strided_load %arg19[%c2_55, %c0_56] {strides = array<i32: 16, 1>} : memref<128x64xf32, #tpu.memory_space<vmem>>, vector<8x64xf32>
    tpu.strided_store %arg19[%c2_55, %c0_56], %96 {strides = array<i32: 16, 1>} : memref<128x64xf32, #tpu.memory_space<vmem>>, vector<8x64xf32>
    %98 = vector.extract_strided_slice %73 {offsets = [0, 2], sizes = [8, 1], strides = [1, 1]} : vector<8x16xf32> to vector<8x1xf32>
    %99 = vector.broadcast %98 : vector<8x1xf32> to vector<8x64xf32>
    %100 = arith.mulf %99, %74 : vector<8x64xf32>
    %c2_57 = arith.constant 2 : index
    %c0_58 = arith.constant 0 : index
    %101 = tpu.strided_load %arg20[%c2_57, %c0_58] {strides = array<i32: 16, 1>} : memref<128x64xf32, #tpu.memory_space<vmem>>, vector<8x64xf32>
    tpu.strided_store %arg20[%c2_57, %c0_58], %100 {strides = array<i32: 16, 1>} : memref<128x64xf32, #tpu.memory_space<vmem>>, vector<8x64xf32>
    %102 = vector.extract_strided_slice %63 {offsets = [3, 0], sizes = [1, 64], strides = [1, 1]} : vector<16x64xf32> to vector<1x64xf32>
    %103 = vector.broadcast %102 : vector<1x64xf32> to vector<8x64xf32>
    %104 = arith.mulf %69, %103 : vector<8x64xf32>
    %105 = math.exp %104 : vector<8x64xf32>
    %c3_59 = arith.constant 3 : index
    %c0_60 = arith.constant 0 : index
    %106 = tpu.strided_load %arg19[%c3_59, %c0_60] {strides = array<i32: 16, 1>} : memref<128x64xf32, #tpu.memory_space<vmem>>, vector<8x64xf32>
    tpu.strided_store %arg19[%c3_59, %c0_60], %105 {strides = array<i32: 16, 1>} : memref<128x64xf32, #tpu.memory_space<vmem>>, vector<8x64xf32>
    %107 = vector.extract_strided_slice %73 {offsets = [0, 3], sizes = [8, 1], strides = [1, 1]} : vector<8x16xf32> to vector<8x1xf32>
    %108 = vector.broadcast %107 : vector<8x1xf32> to vector<8x64xf32>
    %109 = arith.mulf %108, %74 : vector<8x64xf32>
    %c3_61 = arith.constant 3 : index
    %c0_62 = arith.constant 0 : index
    %110 = tpu.strided_load %arg20[%c3_61, %c0_62] {strides = array<i32: 16, 1>} : memref<128x64xf32, #tpu.memory_space<vmem>>, vector<8x64xf32>
    tpu.strided_store %arg20[%c3_61, %c0_62], %109 {strides = array<i32: 16, 1>} : memref<128x64xf32, #tpu.memory_space<vmem>>, vector<8x64xf32>
    %111 = vector.extract_strided_slice %63 {offsets = [4, 0], sizes = [1, 64], strides = [1, 1]} : vector<16x64xf32> to vector<1x64xf32>
    %112 = vector.broadcast %111 : vector<1x64xf32> to vector<8x64xf32>
    %113 = arith.mulf %69, %112 : vector<8x64xf32>
    %114 = math.exp %113 : vector<8x64xf32>
    %c4 = arith.constant 4 : index
    %c0_63 = arith.constant 0 : index
    %115 = tpu.strided_load %arg19[%c4, %c0_63] {strides = array<i32: 16, 1>} : memref<128x64xf32, #tpu.memory_space<vmem>>, vector<8x64xf32>
    tpu.strided_store %arg19[%c4, %c0_63], %114 {strides = array<i32: 16, 1>} : memref<128x64xf32, #tpu.memory_space<vmem>>, vector<8x64xf32>
    %116 = vector.extract_strided_slice %73 {offsets = [0, 4], sizes = [8, 1], strides = [1, 1]} : vector<8x16xf32> to vector<8x1xf32>
    %117 = vector.broadcast %116 : vector<8x1xf32> to vector<8x64xf32>
    %118 = arith.mulf %117, %74 : vector<8x64xf32>
    %c4_64 = arith.constant 4 : index
    %c0_65 = arith.constant 0 : index
    %119 = tpu.strided_load %arg20[%c4_64, %c0_65] {strides = array<i32: 16, 1>} : memref<128x64xf32, #tpu.memory_space<vmem>>, vector<8x64xf32>
    tpu.strided_store %arg20[%c4_64, %c0_65], %118 {strides = array<i32: 16, 1>} : memref<128x64xf32, #tpu.memory_space<vmem>>, vector<8x64xf32>
    %120 = vector.extract_strided_slice %63 {offsets = [5, 0], sizes = [1, 64], strides = [1, 1]} : vector<16x64xf32> to vector<1x64xf32>
    %121 = vector.broadcast %120 : vector<1x64xf32> to vector<8x64xf32>
    %122 = arith.mulf %69, %121 : vector<8x64xf32>
    %123 = math.exp %122 : vector<8x64xf32>
    %c5 = arith.constant 5 : index
    %c0_66 = arith.constant 0 : index
    %124 = tpu.strided_load %arg19[%c5, %c0_66] {strides = array<i32: 16, 1>} : memref<128x64xf32, #tpu.memory_space<vmem>>, vector<8x64xf32>
    tpu.strided_store %arg19[%c5, %c0_66], %123 {strides = array<i32: 16, 1>} : memref<128x64xf32, #tpu.memory_space<vmem>>, vector<8x64xf32>
    %125 = vector.extract_strided_slice %73 {offsets = [0, 5], sizes = [8, 1], strides = [1, 1]} : vector<8x16xf32> to vector<8x1xf32>
    %126 = vector.broadcast %125 : vector<8x1xf32> to vector<8x64xf32>
    %127 = arith.mulf %126, %74 : vector<8x64xf32>
    %c5_67 = arith.constant 5 : index
    %c0_68 = arith.constant 0 : index
    %128 = tpu.strided_load %arg20[%c5_67, %c0_68] {strides = array<i32: 16, 1>} : memref<128x64xf32, #tpu.memory_space<vmem>>, vector<8x64xf32>
    tpu.strided_store %arg20[%c5_67, %c0_68], %127 {strides = array<i32: 16, 1>} : memref<128x64xf32, #tpu.memory_space<vmem>>, vector<8x64xf32>
    %129 = vector.extract_strided_slice %63 {offsets = [6, 0], sizes = [1, 64], strides = [1, 1]} : vector<16x64xf32> to vector<1x64xf32>
    %130 = vector.broadcast %129 : vector<1x64xf32> to vector<8x64xf32>
    %131 = arith.mulf %69, %130 : vector<8x64xf32>
    %132 = math.exp %131 : vector<8x64xf32>
    %c6 = arith.constant 6 : index
    %c0_69 = arith.constant 0 : index
    %133 = tpu.strided_load %arg19[%c6, %c0_69] {strides = array<i32: 16, 1>} : memref<128x64xf32, #tpu.memory_space<vmem>>, vector<8x64xf32>
    tpu.strided_store %arg19[%c6, %c0_69], %132 {strides = array<i32: 16, 1>} : memref<128x64xf32, #tpu.memory_space<vmem>>, vector<8x64xf32>
    %134 = vector.extract_strided_slice %73 {offsets = [0, 6], sizes = [8, 1], strides = [1, 1]} : vector<8x16xf32> to vector<8x1xf32>
    %135 = vector.broadcast %134 : vector<8x1xf32> to vector<8x64xf32>
    %136 = arith.mulf %135, %74 : vector<8x64xf32>
    %c6_70 = arith.constant 6 : index
    %c0_71 = arith.constant 0 : index
    %137 = tpu.strided_load %arg20[%c6_70, %c0_71] {strides = array<i32: 16, 1>} : memref<128x64xf32, #tpu.memory_space<vmem>>, vector<8x64xf32>
    tpu.strided_store %arg20[%c6_70, %c0_71], %136 {strides = array<i32: 16, 1>} : memref<128x64xf32, #tpu.memory_space<vmem>>, vector<8x64xf32>
    %138 = vector.extract_strided_slice %63 {offsets = [7, 0], sizes = [1, 64], strides = [1, 1]} : vector<16x64xf32> to vector<1x64xf32>
    %139 = vector.broadcast %138 : vector<1x64xf32> to vector<8x64xf32>
    %140 = arith.mulf %69, %139 : vector<8x64xf32>
    %141 = math.exp %140 : vector<8x64xf32>
    %c7 = arith.constant 7 : index
    %c0_72 = arith.constant 0 : index
    %142 = tpu.strided_load %arg19[%c7, %c0_72] {strides = array<i32: 16, 1>} : memref<128x64xf32, #tpu.memory_space<vmem>>, vector<8x64xf32>
    tpu.strided_store %arg19[%c7, %c0_72], %141 {strides = array<i32: 16, 1>} : memref<128x64xf32, #tpu.memory_space<vmem>>, vector<8x64xf32>
    %143 = vector.extract_strided_slice %73 {offsets = [0, 7], sizes = [8, 1], strides = [1, 1]} : vector<8x16xf32> to vector<8x1xf32>
    %144 = vector.broadcast %143 : vector<8x1xf32> to vector<8x64xf32>
    %145 = arith.mulf %144, %74 : vector<8x64xf32>
    %c7_73 = arith.constant 7 : index
    %c0_74 = arith.constant 0 : index
    %146 = tpu.strided_load %arg20[%c7_73, %c0_74] {strides = array<i32: 16, 1>} : memref<128x64xf32, #tpu.memory_space<vmem>>, vector<8x64xf32>
    tpu.strided_store %arg20[%c7_73, %c0_74], %145 {strides = array<i32: 16, 1>} : memref<128x64xf32, #tpu.memory_space<vmem>>, vector<8x64xf32>
    %147 = vector.extract_strided_slice %63 {offsets = [8, 0], sizes = [1, 64], strides = [1, 1]} : vector<16x64xf32> to vector<1x64xf32>
    %148 = vector.broadcast %147 : vector<1x64xf32> to vector<8x64xf32>
    %149 = arith.mulf %69, %148 : vector<8x64xf32>
    %150 = math.exp %149 : vector<8x64xf32>
    %c8 = arith.constant 8 : index
    %c0_75 = arith.constant 0 : index
    %151 = tpu.strided_load %arg19[%c8, %c0_75] {strides = array<i32: 16, 1>} : memref<128x64xf32, #tpu.memory_space<vmem>>, vector<8x64xf32>
    tpu.strided_store %arg19[%c8, %c0_75], %150 {strides = array<i32: 16, 1>} : memref<128x64xf32, #tpu.memory_space<vmem>>, vector<8x64xf32>
    %152 = vector.extract_strided_slice %73 {offsets = [0, 8], sizes = [8, 1], strides = [1, 1]} : vector<8x16xf32> to vector<8x1xf32>
    %153 = vector.broadcast %152 : vector<8x1xf32> to vector<8x64xf32>
    %154 = arith.mulf %153, %74 : vector<8x64xf32>
    %c8_76 = arith.constant 8 : index
    %c0_77 = arith.constant 0 : index
    %155 = tpu.strided_load %arg20[%c8_76, %c0_77] {strides = array<i32: 16, 1>} : memref<128x64xf32, #tpu.memory_space<vmem>>, vector<8x64xf32>
    tpu.strided_store %arg20[%c8_76, %c0_77], %154 {strides = array<i32: 16, 1>} : memref<128x64xf32, #tpu.memory_space<vmem>>, vector<8x64xf32>
    %156 = vector.extract_strided_slice %63 {offsets = [9, 0], sizes = [1, 64], strides = [1, 1]} : vector<16x64xf32> to vector<1x64xf32>
    %157 = vector.broadcast %156 : vector<1x64xf32> to vector<8x64xf32>
    %158 = arith.mulf %69, %157 : vector<8x64xf32>
    %159 = math.exp %158 : vector<8x64xf32>
    %c9 = arith.constant 9 : index
    %c0_78 = arith.constant 0 : index
    %160 = tpu.strided_load %arg19[%c9, %c0_78] {strides = array<i32: 16, 1>} : memref<128x64xf32, #tpu.memory_space<vmem>>, vector<8x64xf32>
    tpu.strided_store %arg19[%c9, %c0_78], %159 {strides = array<i32: 16, 1>} : memref<128x64xf32, #tpu.memory_space<vmem>>, vector<8x64xf32>
    %161 = vector.extract_strided_slice %73 {offsets = [0, 9], sizes = [8, 1], strides = [1, 1]} : vector<8x16xf32> to vector<8x1xf32>
    %162 = vector.broadcast %161 : vector<8x1xf32> to vector<8x64xf32>
    %163 = arith.mulf %162, %74 : vector<8x64xf32>
    %c9_79 = arith.constant 9 : index
    %c0_80 = arith.constant 0 : index
    %164 = tpu.strided_load %arg20[%c9_79, %c0_80] {strides = array<i32: 16, 1>} : memref<128x64xf32, #tpu.memory_space<vmem>>, vector<8x64xf32>
    tpu.strided_store %arg20[%c9_79, %c0_80], %163 {strides = array<i32: 16, 1>} : memref<128x64xf32, #tpu.memory_space<vmem>>, vector<8x64xf32>
    %165 = vector.extract_strided_slice %63 {offsets = [10, 0], sizes = [1, 64], strides = [1, 1]} : vector<16x64xf32> to vector<1x64xf32>
    %166 = vector.broadcast %165 : vector<1x64xf32> to vector<8x64xf32>
    %167 = arith.mulf %69, %166 : vector<8x64xf32>
    %168 = math.exp %167 : vector<8x64xf32>
    %c10 = arith.constant 10 : index
    %c0_81 = arith.constant 0 : index
    %169 = tpu.strided_load %arg19[%c10, %c0_81] {strides = array<i32: 16, 1>} : memref<128x64xf32, #tpu.memory_space<vmem>>, vector<8x64xf32>
    tpu.strided_store %arg19[%c10, %c0_81], %168 {strides = array<i32: 16, 1>} : memref<128x64xf32, #tpu.memory_space<vmem>>, vector<8x64xf32>
    %170 = vector.extract_strided_slice %73 {offsets = [0, 10], sizes = [8, 1], strides = [1, 1]} : vector<8x16xf32> to vector<8x1xf32>
    %171 = vector.broadcast %170 : vector<8x1xf32> to vector<8x64xf32>
    %172 = arith.mulf %171, %74 : vector<8x64xf32>
    %c10_82 = arith.constant 10 : index
    %c0_83 = arith.constant 0 : index
    %173 = tpu.strided_load %arg20[%c10_82, %c0_83] {strides = array<i32: 16, 1>} : memref<128x64xf32, #tpu.memory_space<vmem>>, vector<8x64xf32>
    tpu.strided_store %arg20[%c10_82, %c0_83], %172 {strides = array<i32: 16, 1>} : memref<128x64xf32, #tpu.memory_space<vmem>>, vector<8x64xf32>
    %174 = vector.extract_strided_slice %63 {offsets = [11, 0], sizes = [1, 64], strides = [1, 1]} : vector<16x64xf32> to vector<1x64xf32>
    %175 = vector.broadcast %174 : vector<1x64xf32> to vector<8x64xf32>
    %176 = arith.mulf %69, %175 : vector<8x64xf32>
    %177 = math.exp %176 : vector<8x64xf32>
    %c11 = arith.constant 11 : index
    %c0_84 = arith.constant 0 : index
    %178 = tpu.strided_load %arg19[%c11, %c0_84] {strides = array<i32: 16, 1>} : memref<128x64xf32, #tpu.memory_space<vmem>>, vector<8x64xf32>
    tpu.strided_store %arg19[%c11, %c0_84], %177 {strides = array<i32: 16, 1>} : memref<128x64xf32, #tpu.memory_space<vmem>>, vector<8x64xf32>
    %179 = vector.extract_strided_slice %73 {offsets = [0, 11], sizes = [8, 1], strides = [1, 1]} : vector<8x16xf32> to vector<8x1xf32>
    %180 = vector.broadcast %179 : vector<8x1xf32> to vector<8x64xf32>
    %181 = arith.mulf %180, %74 : vector<8x64xf32>
    %c11_85 = arith.constant 11 : index
    %c0_86 = arith.constant 0 : index
    %182 = tpu.strided_load %arg20[%c11_85, %c0_86] {strides = array<i32: 16, 1>} : memref<128x64xf32, #tpu.memory_space<vmem>>, vector<8x64xf32>
    tpu.strided_store %arg20[%c11_85, %c0_86], %181 {strides = array<i32: 16, 1>} : memref<128x64xf32, #tpu.memory_space<vmem>>, vector<8x64xf32>
    %183 = vector.extract_strided_slice %63 {offsets = [12, 0], sizes = [1, 64], strides = [1, 1]} : vector<16x64xf32> to vector<1x64xf32>
    %184 = vector.broadcast %183 : vector<1x64xf32> to vector<8x64xf32>
    %185 = arith.mulf %69, %184 : vector<8x64xf32>
    %186 = math.exp %185 : vector<8x64xf32>
    %c12 = arith.constant 12 : index
    %c0_87 = arith.constant 0 : index
    %187 = tpu.strided_load %arg19[%c12, %c0_87] {strides = array<i32: 16, 1>} : memref<128x64xf32, #tpu.memory_space<vmem>>, vector<8x64xf32>
    tpu.strided_store %arg19[%c12, %c0_87], %186 {strides = array<i32: 16, 1>} : memref<128x64xf32, #tpu.memory_space<vmem>>, vector<8x64xf32>
    %188 = vector.extract_strided_slice %73 {offsets = [0, 12], sizes = [8, 1], strides = [1, 1]} : vector<8x16xf32> to vector<8x1xf32>
    %189 = vector.broadcast %188 : vector<8x1xf32> to vector<8x64xf32>
    %190 = arith.mulf %189, %74 : vector<8x64xf32>
    %c12_88 = arith.constant 12 : index
    %c0_89 = arith.constant 0 : index
    %191 = tpu.strided_load %arg20[%c12_88, %c0_89] {strides = array<i32: 16, 1>} : memref<128x64xf32, #tpu.memory_space<vmem>>, vector<8x64xf32>
    tpu.strided_store %arg20[%c12_88, %c0_89], %190 {strides = array<i32: 16, 1>} : memref<128x64xf32, #tpu.memory_space<vmem>>, vector<8x64xf32>
    %192 = vector.extract_strided_slice %63 {offsets = [13, 0], sizes = [1, 64], strides = [1, 1]} : vector<16x64xf32> to vector<1x64xf32>
    %193 = vector.broadcast %192 : vector<1x64xf32> to vector<8x64xf32>
    %194 = arith.mulf %69, %193 : vector<8x64xf32>
    %195 = math.exp %194 : vector<8x64xf32>
    %c13 = arith.constant 13 : index
    %c0_90 = arith.constant 0 : index
    %196 = tpu.strided_load %arg19[%c13, %c0_90] {strides = array<i32: 16, 1>} : memref<128x64xf32, #tpu.memory_space<vmem>>, vector<8x64xf32>
    tpu.strided_store %arg19[%c13, %c0_90], %195 {strides = array<i32: 16, 1>} : memref<128x64xf32, #tpu.memory_space<vmem>>, vector<8x64xf32>
    %197 = vector.extract_strided_slice %73 {offsets = [0, 13], sizes = [8, 1], strides = [1, 1]} : vector<8x16xf32> to vector<8x1xf32>
    %198 = vector.broadcast %197 : vector<8x1xf32> to vector<8x64xf32>
    %199 = arith.mulf %198, %74 : vector<8x64xf32>
    %c13_91 = arith.constant 13 : index
    %c0_92 = arith.constant 0 : index
    %200 = tpu.strided_load %arg20[%c13_91, %c0_92] {strides = array<i32: 16, 1>} : memref<128x64xf32, #tpu.memory_space<vmem>>, vector<8x64xf32>
    tpu.strided_store %arg20[%c13_91, %c0_92], %199 {strides = array<i32: 16, 1>} : memref<128x64xf32, #tpu.memory_space<vmem>>, vector<8x64xf32>
    %201 = vector.extract_strided_slice %63 {offsets = [14, 0], sizes = [1, 64], strides = [1, 1]} : vector<16x64xf32> to vector<1x64xf32>
    %202 = vector.broadcast %201 : vector<1x64xf32> to vector<8x64xf32>
    %203 = arith.mulf %69, %202 : vector<8x64xf32>
    %204 = math.exp %203 : vector<8x64xf32>
    %c14 = arith.constant 14 : index
    %c0_93 = arith.constant 0 : index
    %205 = tpu.strided_load %arg19[%c14, %c0_93] {strides = array<i32: 16, 1>} : memref<128x64xf32, #tpu.memory_space<vmem>>, vector<8x64xf32>
    tpu.strided_store %arg19[%c14, %c0_93], %204 {strides = array<i32: 16, 1>} : memref<128x64xf32, #tpu.memory_space<vmem>>, vector<8x64xf32>
    %206 = vector.extract_strided_slice %73 {offsets = [0, 14], sizes = [8, 1], strides = [1, 1]} : vector<8x16xf32> to vector<8x1xf32>
    %207 = vector.broadcast %206 : vector<8x1xf32> to vector<8x64xf32>
    %208 = arith.mulf %207, %74 : vector<8x64xf32>
    %c14_94 = arith.constant 14 : index
    %c0_95 = arith.constant 0 : index
    %209 = tpu.strided_load %arg20[%c14_94, %c0_95] {strides = array<i32: 16, 1>} : memref<128x64xf32, #tpu.memory_space<vmem>>, vector<8x64xf32>
    tpu.strided_store %arg20[%c14_94, %c0_95], %208 {strides = array<i32: 16, 1>} : memref<128x64xf32, #tpu.memory_space<vmem>>, vector<8x64xf32>
    %210 = vector.extract_strided_slice %63 {offsets = [15, 0], sizes = [1, 64], strides = [1, 1]} : vector<16x64xf32> to vector<1x64xf32>
    %211 = vector.broadcast %210 : vector<1x64xf32> to vector<8x64xf32>
    %212 = arith.mulf %69, %211 : vector<8x64xf32>
    %213 = math.exp %212 : vector<8x64xf32>
    %c15 = arith.constant 15 : index
    %c0_96 = arith.constant 0 : index
    %214 = tpu.strided_load %arg19[%c15, %c0_96] {strides = array<i32: 16, 1>} : memref<128x64xf32, #tpu.memory_space<vmem>>, vector<8x64xf32>
    tpu.strided_store %arg19[%c15, %c0_96], %213 {strides = array<i32: 16, 1>} : memref<128x64xf32, #tpu.memory_space<vmem>>, vector<8x64xf32>
    %215 = vector.extract_strided_slice %73 {offsets = [0, 15], sizes = [8, 1], strides = [1, 1]} : vector<8x16xf32> to vector<8x1xf32>
    %216 = vector.broadcast %215 : vector<8x1xf32> to vector<8x64xf32>
    %217 = arith.mulf %216, %74 : vector<8x64xf32>
    %c15_97 = arith.constant 15 : index
    %c0_98 = arith.constant 0 : index
    %218 = tpu.strided_load %arg20[%c15_97, %c0_98] {strides = array<i32: 16, 1>} : memref<128x64xf32, #tpu.memory_space<vmem>>, vector<8x64xf32>
    tpu.strided_store %arg20[%c15_97, %c0_98], %217 {strides = array<i32: 16, 1>} : memref<128x64xf32, #tpu.memory_space<vmem>>, vector<8x64xf32>
    %c0_i32_99 = arith.constant 0 : i32
    %c8_i32_100 = arith.constant 8 : i32
    %219 = arith.addi %c0_i32_99, %c8_i32_100 : i32
    %c1_i32 = arith.constant 1 : i32
    %220 = scf.for %arg21 = %c0_i32_99 to %219 step %c1_i32 iter_args(%arg22 = %65) -> (vector<16x64xf32>)  : i32 {
      %c16_i32 = arith.constant 16 : i32
      %324 = arith.muli %arg21, %c16_i32 : i32
      %325 = tpu.assume_multiple %324, 16 : i32
      %326 = arith.index_cast %325 : i32 to index
      %c0_149 = arith.constant 0 : index
      %327 = vector.load %arg19[%326, %c0_149] : memref<128x64xf32, #tpu.memory_space<vmem>>, vector<16x64xf32>
      %328 = arith.mulf %327, %arg22 : vector<16x64xf32>
      %329 = arith.index_cast %325 : i32 to index
      %c0_150 = arith.constant 0 : index
      %330 = vector.load %arg20[%329, %c0_150] : memref<128x64xf32, #tpu.memory_space<vmem>>, vector<16x64xf32>
      %331 = arith.addf %328, %330 : vector<16x64xf32>
      %332 = arith.index_cast %325 : i32 to index
      %c0_151 = arith.constant 0 : index
      %333 = vector.load %arg20[%332, %c0_151] : memref<128x64xf32, #tpu.memory_space<vmem>>, vector<16x64xf32>
      tpu.vector_store %arg20[%332, %c0_151], %331 {strides = array<i32>} : memref<128x64xf32, #tpu.memory_space<vmem>>, vector<16x64xf32>,
      scf.yield %331 : vector<16x64xf32>
    }
    %c8_i32_101 = arith.constant 8 : i32
    %221 = arith.index_cast %67 : i32 to index
    %c0_102 = arith.constant 0 : index
    %222 = vector.load %arg17[%221, %c0_102] : memref<8x16xf32, #tpu.memory_space<vmem>>, vector<8x16xf32>
    %223 = vector.broadcast %64 : vector<1x64xf32> to vector<8x64xf32>
    %224 = arith.mulf %223, %71 : vector<8x64xf32>
    %c0_103 = arith.constant 0 : index
    %c0_104 = arith.constant 0 : index
    %225 = tpu.strided_load %arg20[%c0_103, %c0_104] {strides = array<i32: 16, 1>} : memref<128x64xf32, #tpu.memory_space<vmem>>, vector<8x64xf32>
    %226 = vector.extract_strided_slice %222 {offsets = [0, 0], sizes = [8, 1], strides = [1, 1]} : vector<8x16xf32> to vector<8x1xf32>
    %227 = vector.broadcast %226 : vector<8x1xf32> to vector<8x64xf32>
    %228 = arith.mulf %225, %227 : vector<8x64xf32>
    %229 = arith.addf %224, %228 : vector<8x64xf32>
    %c1_105 = arith.constant 1 : index
    %c0_106 = arith.constant 0 : index
    %230 = tpu.strided_load %arg20[%c1_105, %c0_106] {strides = array<i32: 16, 1>} : memref<128x64xf32, #tpu.memory_space<vmem>>, vector<8x64xf32>
    %231 = vector.extract_strided_slice %222 {offsets = [0, 1], sizes = [8, 1], strides = [1, 1]} : vector<8x16xf32> to vector<8x1xf32>
    %232 = vector.broadcast %231 : vector<8x1xf32> to vector<8x64xf32>
    %233 = arith.mulf %230, %232 : vector<8x64xf32>
    %234 = arith.addf %229, %233 : vector<8x64xf32>
    %c2_107 = arith.constant 2 : index
    %c0_108 = arith.constant 0 : index
    %235 = tpu.strided_load %arg20[%c2_107, %c0_108] {strides = array<i32: 16, 1>} : memref<128x64xf32, #tpu.memory_space<vmem>>, vector<8x64xf32>
    %236 = vector.extract_strided_slice %222 {offsets = [0, 2], sizes = [8, 1], strides = [1, 1]} : vector<8x16xf32> to vector<8x1xf32>
    %237 = vector.broadcast %236 : vector<8x1xf32> to vector<8x64xf32>
    %238 = arith.mulf %235, %237 : vector<8x64xf32>
    %239 = arith.addf %234, %238 : vector<8x64xf32>
    %c3_109 = arith.constant 3 : index
    %c0_110 = arith.constant 0 : index
    %240 = tpu.strided_load %arg20[%c3_109, %c0_110] {strides = array<i32: 16, 1>} : memref<128x64xf32, #tpu.memory_space<vmem>>, vector<8x64xf32>
    %241 = vector.extract_strided_slice %222 {offsets = [0, 3], sizes = [8, 1], strides = [1, 1]} : vector<8x16xf32> to vector<8x1xf32>
    %242 = vector.broadcast %241 : vector<8x1xf32> to vector<8x64xf32>
    %243 = arith.mulf %240, %242 : vector<8x64xf32>
    %244 = arith.addf %239, %243 : vector<8x64xf32>
    %c4_111 = arith.constant 4 : index
    %c0_112 = arith.constant 0 : index
    %245 = tpu.strided_load %arg20[%c4_111, %c0_112] {strides = array<i32: 16, 1>} : memref<128x64xf32, #tpu.memory_space<vmem>>, vector<8x64xf32>
    %246 = vector.extract_strided_slice %222 {offsets = [0, 4], sizes = [8, 1], strides = [1, 1]} : vector<8x16xf32> to vector<8x1xf32>
    %247 = vector.broadcast %246 : vector<8x1xf32> to vector<8x64xf32>
    %248 = arith.mulf %245, %247 : vector<8x64xf32>
    %249 = arith.addf %244, %248 : vector<8x64xf32>
    %c5_113 = arith.constant 5 : index
    %c0_114 = arith.constant 0 : index
    %250 = tpu.strided_load %arg20[%c5_113, %c0_114] {strides = array<i32: 16, 1>} : memref<128x64xf32, #tpu.memory_space<vmem>>, vector<8x64xf32>
    %251 = vector.extract_strided_slice %222 {offsets = [0, 5], sizes = [8, 1], strides = [1, 1]} : vector<8x16xf32> to vector<8x1xf32>
    %252 = vector.broadcast %251 : vector<8x1xf32> to vector<8x64xf32>
    %253 = arith.mulf %250, %252 : vector<8x64xf32>
    %254 = arith.addf %249, %253 : vector<8x64xf32>
    %c6_115 = arith.constant 6 : index
    %c0_116 = arith.constant 0 : index
    %255 = tpu.strided_load %arg20[%c6_115, %c0_116] {strides = array<i32: 16, 1>} : memref<128x64xf32, #tpu.memory_space<vmem>>, vector<8x64xf32>
    %256 = vector.extract_strided_slice %222 {offsets = [0, 6], sizes = [8, 1], strides = [1, 1]} : vector<8x16xf32> to vector<8x1xf32>
    %257 = vector.broadcast %256 : vector<8x1xf32> to vector<8x64xf32>
    %258 = arith.mulf %255, %257 : vector<8x64xf32>
    %259 = arith.addf %254, %258 : vector<8x64xf32>
    %c7_117 = arith.constant 7 : index
    %c0_118 = arith.constant 0 : index
    %260 = tpu.strided_load %arg20[%c7_117, %c0_118] {strides = array<i32: 16, 1>} : memref<128x64xf32, #tpu.memory_space<vmem>>, vector<8x64xf32>
    %261 = vector.extract_strided_slice %222 {offsets = [0, 7], sizes = [8, 1], strides = [1, 1]} : vector<8x16xf32> to vector<8x1xf32>
    %262 = vector.broadcast %261 : vector<8x1xf32> to vector<8x64xf32>
    %263 = arith.mulf %260, %262 : vector<8x64xf32>
    %264 = arith.addf %259, %263 : vector<8x64xf32>
    %c8_119 = arith.constant 8 : index
    %c0_120 = arith.constant 0 : index
    %265 = tpu.strided_load %arg20[%c8_119, %c0_120] {strides = array<i32: 16, 1>} : memref<128x64xf32, #tpu.memory_space<vmem>>, vector<8x64xf32>
    %266 = vector.extract_strided_slice %222 {offsets = [0, 8], sizes = [8, 1], strides = [1, 1]} : vector<8x16xf32> to vector<8x1xf32>
    %267 = vector.broadcast %266 : vector<8x1xf32> to vector<8x64xf32>
    %268 = arith.mulf %265, %267 : vector<8x64xf32>
    %269 = arith.addf %264, %268 : vector<8x64xf32>
    %c9_121 = arith.constant 9 : index
    %c0_122 = arith.constant 0 : index
    %270 = tpu.strided_load %arg20[%c9_121, %c0_122] {strides = array<i32: 16, 1>} : memref<128x64xf32, #tpu.memory_space<vmem>>, vector<8x64xf32>
    %271 = vector.extract_strided_slice %222 {offsets = [0, 9], sizes = [8, 1], strides = [1, 1]} : vector<8x16xf32> to vector<8x1xf32>
    %272 = vector.broadcast %271 : vector<8x1xf32> to vector<8x64xf32>
    %273 = arith.mulf %270, %272 : vector<8x64xf32>
    %274 = arith.addf %269, %273 : vector<8x64xf32>
    %c10_123 = arith.constant 10 : index
    %c0_124 = arith.constant 0 : index
    %275 = tpu.strided_load %arg20[%c10_123, %c0_124] {strides = array<i32: 16, 1>} : memref<128x64xf32, #tpu.memory_space<vmem>>, vector<8x64xf32>
    %276 = vector.extract_strided_slice %222 {offsets = [0, 10], sizes = [8, 1], strides = [1, 1]} : vector<8x16xf32> to vector<8x1xf32>
    %277 = vector.broadcast %276 : vector<8x1xf32> to vector<8x64xf32>
    %278 = arith.mulf %275, %277 : vector<8x64xf32>
    %279 = arith.addf %274, %278 : vector<8x64xf32>
    %c11_125 = arith.constant 11 : index
    %c0_126 = arith.constant 0 : index
    %280 = tpu.strided_load %arg20[%c11_125, %c0_126] {strides = array<i32: 16, 1>} : memref<128x64xf32, #tpu.memory_space<vmem>>, vector<8x64xf32>
    %281 = vector.extract_strided_slice %222 {offsets = [0, 11], sizes = [8, 1], strides = [1, 1]} : vector<8x16xf32> to vector<8x1xf32>
    %282 = vector.broadcast %281 : vector<8x1xf32> to vector<8x64xf32>
    %283 = arith.mulf %280, %282 : vector<8x64xf32>
    %284 = arith.addf %279, %283 : vector<8x64xf32>
    %c12_127 = arith.constant 12 : index
    %c0_128 = arith.constant 0 : index
    %285 = tpu.strided_load %arg20[%c12_127, %c0_128] {strides = array<i32: 16, 1>} : memref<128x64xf32, #tpu.memory_space<vmem>>, vector<8x64xf32>
    %286 = vector.extract_strided_slice %222 {offsets = [0, 12], sizes = [8, 1], strides = [1, 1]} : vector<8x16xf32> to vector<8x1xf32>
    %287 = vector.broadcast %286 : vector<8x1xf32> to vector<8x64xf32>
    %288 = arith.mulf %285, %287 : vector<8x64xf32>
    %289 = arith.addf %284, %288 : vector<8x64xf32>
    %c13_129 = arith.constant 13 : index
    %c0_130 = arith.constant 0 : index
    %290 = tpu.strided_load %arg20[%c13_129, %c0_130] {strides = array<i32: 16, 1>} : memref<128x64xf32, #tpu.memory_space<vmem>>, vector<8x64xf32>
    %291 = vector.extract_strided_slice %222 {offsets = [0, 13], sizes = [8, 1], strides = [1, 1]} : vector<8x16xf32> to vector<8x1xf32>
    %292 = vector.broadcast %291 : vector<8x1xf32> to vector<8x64xf32>
    %293 = arith.mulf %290, %292 : vector<8x64xf32>
    %294 = arith.addf %289, %293 : vector<8x64xf32>
    %c14_131 = arith.constant 14 : index
    %c0_132 = arith.constant 0 : index
    %295 = tpu.strided_load %arg20[%c14_131, %c0_132] {strides = array<i32: 16, 1>} : memref<128x64xf32, #tpu.memory_space<vmem>>, vector<8x64xf32>
    %296 = vector.extract_strided_slice %222 {offsets = [0, 14], sizes = [8, 1], strides = [1, 1]} : vector<8x16xf32> to vector<8x1xf32>
    %297 = vector.broadcast %296 : vector<8x1xf32> to vector<8x64xf32>
    %298 = arith.mulf %295, %297 : vector<8x64xf32>
    %299 = arith.addf %294, %298 : vector<8x64xf32>
    %c15_133 = arith.constant 15 : index
    %c0_134 = arith.constant 0 : index
    %300 = tpu.strided_load %arg20[%c15_133, %c0_134] {strides = array<i32: 16, 1>} : memref<128x64xf32, #tpu.memory_space<vmem>>, vector<8x64xf32>
    %301 = vector.extract_strided_slice %222 {offsets = [0, 15], sizes = [8, 1], strides = [1, 1]} : vector<8x16xf32> to vector<8x1xf32>
    %302 = vector.broadcast %301 : vector<8x1xf32> to vector<8x64xf32>
    %303 = arith.mulf %300, %302 : vector<8x64xf32>
    %304 = arith.addf %299, %303 : vector<8x64xf32>
    %305 = arith.index_cast %67 : i32 to index
    %c0_135 = arith.constant 0 : index
    %306 = vector.load %arg18[%305, %c0_135] : memref<8x64xf32, #tpu.memory_space<vmem>>, vector<8x64xf32>
    tpu.vector_store %arg18[%305, %c0_135], %304 {strides = array<i32>} : memref<8x64xf32, #tpu.memory_space<vmem>>, vector<8x64xf32>,
    %c1_i32_136 = arith.constant 1 : i32
    %c0_137 = arith.constant 0 : index
    %c0_138 = arith.constant 0 : index
    %307 = vector.load %arg3[%c0_137, %c0_138] : memref<32x64xbf16, #tpu.memory_space<vmem>>, vector<32x64xbf16>
    %308 = arith.truncf %1 : vector<8x32xf32> to vector<8x32xbf16>
    %cst_139 = arith.constant dense<0.000000e+00> : vector<8x64xf32>
    %309 = tpu.matmul %308, %307, %cst_139 {dimension_numbers = #tpu.dot_dimension_numbers<[1], [0], [0], [1], [0, 0, 1, 1], [], []>} : vector<8x32xbf16>, vector<32x64xbf16>, vector<8x64xf32> -> vector<8x64xf32>
    %c0_140 = arith.constant 0 : index
    %c0_141 = arith.constant 0 : index
    %310 = vector.load %arg18[%c0_140, %c0_141] : memref<8x64xf32, #tpu.memory_space<vmem>>, vector<8x64xf32>
    %311 = arith.negf %309 : vector<8x64xf32>
    %312 = math.exp %311 : vector<8x64xf32>
    %cst_142 = arith.constant 1.000000e+00 : f32
    %313 = vector.broadcast %cst_142 : f32 to vector<8x64xf32>
    %314 = arith.addf %313, %312 : vector<8x64xf32>
    %315 = arith.divf %313, %314 : vector<8x64xf32>
    %316 = arith.mulf %309, %315 : vector<8x64xf32>
    %317 = arith.mulf %310, %316 : vector<8x64xf32>
    %c0_143 = arith.constant 0 : index
    %c0_144 = arith.constant 0 : index
    %318 = vector.load %arg11[%c0_143, %c0_144] : memref<64x32xbf16, #tpu.memory_space<vmem>>, vector<64x32xbf16>
    %319 = arith.truncf %317 : vector<8x64xf32> to vector<8x64xbf16>
    %cst_145 = arith.constant dense<0.000000e+00> : vector<8x32xf32>
    %320 = tpu.matmul %319, %318, %cst_145 {dimension_numbers = #tpu.dot_dimension_numbers<[1], [0], [0], [1], [0, 0, 1, 1], [], []>} : vector<8x64xbf16>, vector<64x32xbf16>, vector<8x32xf32> -> vector<8x32xf32>
    %c0_146 = arith.constant 0 : index
    %c0_147 = arith.constant 0 : index
    %c0_148 = arith.constant 0 : index
    %321 = vector.load %arg12[%c0_146, %c0_147, %c0_148] : memref<1x8x32xf32, #tpu.memory_space<vmem>>, vector<1x8x32xf32>
    %322 = vector.shape_cast %321 : vector<1x8x32xf32> to vector<8x32xf32>
    %323 = vector.shape_cast %320 : vector<8x32xf32> to vector<1x8x32xf32>
    tpu.vector_store %arg12[%c0_146, %c0_147, %c0_148], %323 {strides = array<i32>} : memref<1x8x32xf32, #tpu.memory_space<vmem>>, vector<1x8x32xf32>,
    return
  }
  func.func @transform_0(%arg0: i32) -> (i32, i32, i32) {
    %c0_i32 = arith.constant 0 : i32
    %c0_i32_0 = arith.constant 0 : i32
    %c0_i32_1 = arith.constant 0 : i32
    return %arg0, %c0_i32, %c0_i32_0 : i32, i32, i32
  }
  func.func @transform_1(%arg0: i32) -> (i32, i32) {
    %c0_i32 = arith.constant 0 : i32
    %c0_i32_0 = arith.constant 0 : i32
    %c0_i32_1 = arith.constant 0 : i32
    return %c0_i32, %c0_i32_0 : i32, i32
  }
  func.func @transform_2(%arg0: i32) -> (i32, i32) {
    %c0_i32 = arith.constant 0 : i32
    %c0_i32_0 = arith.constant 0 : i32
    %c0_i32_1 = arith.constant 0 : i32
    return %c0_i32, %c0_i32_0 : i32, i32
  }
  func.func @transform_3(%arg0: i32) -> (i32, i32) {
    %c0_i32 = arith.constant 0 : i32
    %c0_i32_0 = arith.constant 0 : i32
    %c0_i32_1 = arith.constant 0 : i32
    return %c0_i32, %c0_i32_0 : i32, i32
  }
  func.func @transform_4(%arg0: i32) -> (i32, i32) {
    %c0_i32 = arith.constant 0 : i32
    %c0_i32_0 = arith.constant 0 : i32
    %c0_i32_1 = arith.constant 0 : i32
    return %c0_i32, %c0_i32_0 : i32, i32
  }
  func.func @transform_5(%arg0: i32) -> (i32, i32) {
    %c0_i32 = arith.constant 0 : i32
    %c0_i32_0 = arith.constant 0 : i32
    %c0_i32_1 = arith.constant 0 : i32
    return %c0_i32, %c0_i32_0 : i32, i32
  }
  func.func @transform_6(%arg0: i32) -> (i32, i32) {
    %c0_i32 = arith.constant 0 : i32
    %c0_i32_0 = arith.constant 0 : i32
    %c0_i32_1 = arith.constant 0 : i32
    return %c0_i32, %c0_i32_0 : i32, i32
  }
  func.func @transform_7(%arg0: i32) -> (i32, i32) {
    %c0_i32 = arith.constant 0 : i32
    %c0_i32_0 = arith.constant 0 : i32
    %c0_i32_1 = arith.constant 0 : i32
    return %c0_i32, %c0_i32_0 : i32, i32
  }
  func.func @transform_8(%arg0: i32) -> (i32, i32) {
    %c0_i32 = arith.constant 0 : i32
    %c0_i32_0 = arith.constant 0 : i32
    %c0_i32_1 = arith.constant 0 : i32
    return %c0_i32, %c0_i32_0 : i32, i32
  }
  func.func @transform_9(%arg0: i32) -> (i32, i32) {
    %c0_i32 = arith.constant 0 : i32
    %c0_i32_0 = arith.constant 0 : i32
    %c0_i32_1 = arith.constant 0 : i32
    return %c0_i32, %c0_i32_0 : i32, i32
  }
  func.func @transform_10(%arg0: i32) -> (i32, i32) {
    %c0_i32 = arith.constant 0 : i32
    %c0_i32_0 = arith.constant 0 : i32
    %c0_i32_1 = arith.constant 0 : i32
    return %c0_i32, %c0_i32_0 : i32, i32
  }
  func.func @transform_11(%arg0: i32) -> (i32, i32, i32) {
    %c0_i32 = arith.constant 0 : i32
    %c0_i32_0 = arith.constant 0 : i32
    %c0_i32_1 = arith.constant 0 : i32
    return %arg0, %c0_i32, %c0_i32_0 : i32, i32, i32
  }
}

module attributes {stable_mosaic.version = 11 : i64} {
  func.func @_ffn_add_ln_kernel(%arg0: i32, %arg1: memref<16x32xf32, #tpu.memory_space<vmem>>, %arg2: memref<32x64xbf16, #tpu.memory_space<vmem>>, %arg3: memref<1x64xf32, #tpu.memory_space<vmem>>, %arg4: memref<64x32xbf16, #tpu.memory_space<vmem>>, %arg5: memref<1x32xf32, #tpu.memory_space<vmem>>, %arg6: memref<1x32xf32, #tpu.memory_space<vmem>>, %arg7: memref<1x32xf32, #tpu.memory_space<vmem>>, %arg8: memref<16x32xf32, #tpu.memory_space<vmem>>) attributes {dimension_semantics = [#tpu.dimension_semantics<parallel>], iteration_bounds = array<i64: 1>, scalar_prefetch = 0 : i64, scratch_operands = 0 : i64, tpu.core_type = #tpu.core_type<tc>, window_params = [{transform_indices = @transform_0, window_bounds = array<i64: 16, 32>}, {pipeline_mode = #tpu.pipeline_mode<synchronous>, transform_indices = @transform_1, window_bounds = array<i64: 32, 64>}, {pipeline_mode = #tpu.pipeline_mode<synchronous>, transform_indices = @transform_2, window_bounds = array<i64: 1, 64>}, {pipeline_mode = #tpu.pipeline_mode<synchronous>, transform_indices = @transform_3, window_bounds = array<i64: 64, 32>}, {pipeline_mode = #tpu.pipeline_mode<synchronous>, transform_indices = @transform_4, window_bounds = array<i64: 1, 32>}, {pipeline_mode = #tpu.pipeline_mode<synchronous>, transform_indices = @transform_5, window_bounds = array<i64: 1, 32>}, {pipeline_mode = #tpu.pipeline_mode<synchronous>, transform_indices = @transform_6, window_bounds = array<i64: 1, 32>}, {transform_indices = @transform_7, window_bounds = array<i64: 16, 32>}]} {
    %c0 = arith.constant 0 : index
    %c0_0 = arith.constant 0 : index
    %0 = vector.load %arg1[%c0, %c0_0] : memref<16x32xf32, #tpu.memory_space<vmem>>, vector<16x32xf32>
    %c0_1 = arith.constant 0 : index
    %c0_2 = arith.constant 0 : index
    %1 = vector.load %arg2[%c0_1, %c0_2] : memref<32x64xbf16, #tpu.memory_space<vmem>>, vector<32x64xbf16>
    %2 = arith.truncf %0 : vector<16x32xf32> to vector<16x32xbf16>
    %cst = arith.constant dense<0.000000e+00> : vector<16x64xf32>
    %3 = tpu.matmul %2, %1, %cst {dimension_numbers = #tpu.dot_dimension_numbers<[1], [0], [0], [1], [0, 0, 1, 1], [], []>} : vector<16x32xbf16>, vector<32x64xbf16>, vector<16x64xf32> -> vector<16x64xf32>
    %c0_3 = arith.constant 0 : index
    %c0_4 = arith.constant 0 : index
    %4 = vector.load %arg3[%c0_3, %c0_4] : memref<1x64xf32, #tpu.memory_space<vmem>>, vector<1x64xf32>
    %5 = vector.broadcast %4 : vector<1x64xf32> to vector<16x64xf32>
    %6 = arith.addf %3, %5 : vector<16x64xf32>
    %cst_5 = arith.constant 0.000000e+00 : f32
    %7 = vector.broadcast %cst_5 : f32 to vector<16x64xf32>
    %8 = arith.maximumf %6, %7 : vector<16x64xf32>
    %c0_6 = arith.constant 0 : index
    %c0_7 = arith.constant 0 : index
    %9 = vector.load %arg4[%c0_6, %c0_7] : memref<64x32xbf16, #tpu.memory_space<vmem>>, vector<64x32xbf16>
    %10 = arith.truncf %8 : vector<16x64xf32> to vector<16x64xbf16>
    %cst_8 = arith.constant dense<0.000000e+00> : vector<16x32xf32>
    %11 = tpu.matmul %10, %9, %cst_8 {dimension_numbers = #tpu.dot_dimension_numbers<[1], [0], [0], [1], [0, 0, 1, 1], [], []>} : vector<16x64xbf16>, vector<64x32xbf16>, vector<16x32xf32> -> vector<16x32xf32>
    %12 = arith.addf %0, %11 : vector<16x32xf32>
    %c0_9 = arith.constant 0 : index
    %c0_10 = arith.constant 0 : index
    %13 = vector.load %arg5[%c0_9, %c0_10] : memref<1x32xf32, #tpu.memory_space<vmem>>, vector<1x32xf32>
    %14 = vector.broadcast %13 : vector<1x32xf32> to vector<16x32xf32>
    %15 = arith.addf %12, %14 : vector<16x32xf32>
    %cst_11 = arith.constant dense<0.000000e+00> : vector<16xf32>
    %16 = vector.multi_reduction <add>, %15, %cst_11 [1] : vector<16x32xf32> to vector<16xf32>
    %17 = vector.shape_cast %16 : vector<16xf32> to vector<16x1xf32>
    %cst_12 = arith.constant 3.200000e+01 : f32
    %18 = vector.broadcast %cst_12 : f32 to vector<16x1xf32>
    %19 = arith.divf %17, %18 : vector<16x1xf32>
    %20 = vector.broadcast %19 : vector<16x1xf32> to vector<16x32xf32>
    %21 = arith.subf %15, %20 : vector<16x32xf32>
    %22 = arith.mulf %21, %21 : vector<16x32xf32>
    %cst_13 = arith.constant dense<0.000000e+00> : vector<16xf32>
    %23 = vector.multi_reduction <add>, %22, %cst_13 [1] : vector<16x32xf32> to vector<16xf32>
    %24 = vector.shape_cast %23 : vector<16xf32> to vector<16x1xf32>
    %cst_14 = arith.constant 3.200000e+01 : f32
    %25 = vector.broadcast %cst_14 : f32 to vector<16x1xf32>
    %26 = arith.divf %24, %25 : vector<16x1xf32>
    %27 = vector.broadcast %19 : vector<16x1xf32> to vector<16x32xf32>
    %28 = arith.subf %15, %27 : vector<16x32xf32>
    %cst_15 = arith.constant 9.99999997E-7 : f32
    %29 = vector.broadcast %cst_15 : f32 to vector<16x1xf32>
    %30 = arith.addf %26, %29 : vector<16x1xf32>
    %31 = math.rsqrt %30 : vector<16x1xf32>
    %32 = vector.broadcast %31 : vector<16x1xf32> to vector<16x32xf32>
    %33 = arith.mulf %28, %32 : vector<16x32xf32>
    %c0_16 = arith.constant 0 : index
    %c0_17 = arith.constant 0 : index
    %34 = vector.load %arg6[%c0_16, %c0_17] : memref<1x32xf32, #tpu.memory_space<vmem>>, vector<1x32xf32>
    %35 = vector.broadcast %34 : vector<1x32xf32> to vector<16x32xf32>
    %36 = arith.mulf %33, %35 : vector<16x32xf32>
    %c0_18 = arith.constant 0 : index
    %c0_19 = arith.constant 0 : index
    %37 = vector.load %arg7[%c0_18, %c0_19] : memref<1x32xf32, #tpu.memory_space<vmem>>, vector<1x32xf32>
    %38 = vector.broadcast %37 : vector<1x32xf32> to vector<16x32xf32>
    %39 = arith.addf %36, %38 : vector<16x32xf32>
    %c0_20 = arith.constant 0 : index
    %c0_21 = arith.constant 0 : index
    %40 = vector.load %arg8[%c0_20, %c0_21] : memref<16x32xf32, #tpu.memory_space<vmem>>, vector<16x32xf32>
    tpu.vector_store %arg8[%c0_20, %c0_21], %39 {strides = array<i32>} : memref<16x32xf32, #tpu.memory_space<vmem>>, vector<16x32xf32>,
    return
  }
  func.func @transform_0(%arg0: i32) -> (i32, i32) {
    %c0_i32 = arith.constant 0 : i32
    %c0_i32_0 = arith.constant 0 : i32
    return %arg0, %c0_i32 : i32, i32
  }
  func.func @transform_1(%arg0: i32) -> (i32, i32) {
    %c0_i32 = arith.constant 0 : i32
    %c0_i32_0 = arith.constant 0 : i32
    %c0_i32_1 = arith.constant 0 : i32
    return %c0_i32, %c0_i32_0 : i32, i32
  }
  func.func @transform_2(%arg0: i32) -> (i32, i32) {
    %c0_i32 = arith.constant 0 : i32
    %c0_i32_0 = arith.constant 0 : i32
    %c0_i32_1 = arith.constant 0 : i32
    return %c0_i32, %c0_i32_0 : i32, i32
  }
  func.func @transform_3(%arg0: i32) -> (i32, i32) {
    %c0_i32 = arith.constant 0 : i32
    %c0_i32_0 = arith.constant 0 : i32
    %c0_i32_1 = arith.constant 0 : i32
    return %c0_i32, %c0_i32_0 : i32, i32
  }
  func.func @transform_4(%arg0: i32) -> (i32, i32) {
    %c0_i32 = arith.constant 0 : i32
    %c0_i32_0 = arith.constant 0 : i32
    %c0_i32_1 = arith.constant 0 : i32
    return %c0_i32, %c0_i32_0 : i32, i32
  }
  func.func @transform_5(%arg0: i32) -> (i32, i32) {
    %c0_i32 = arith.constant 0 : i32
    %c0_i32_0 = arith.constant 0 : i32
    %c0_i32_1 = arith.constant 0 : i32
    return %c0_i32, %c0_i32_0 : i32, i32
  }
  func.func @transform_6(%arg0: i32) -> (i32, i32) {
    %c0_i32 = arith.constant 0 : i32
    %c0_i32_0 = arith.constant 0 : i32
    %c0_i32_1 = arith.constant 0 : i32
    return %c0_i32, %c0_i32_0 : i32, i32
  }
  func.func @transform_7(%arg0: i32) -> (i32, i32) {
    %c0_i32 = arith.constant 0 : i32
    %c0_i32_0 = arith.constant 0 : i32
    return %arg0, %c0_i32 : i32, i32
  }
}

module attributes {stable_mosaic.version = 11 : i64} {
  func.func @kernel(%arg0: i32, %arg1: memref<1x16x32xf32, #tpu.memory_space<vmem>>, %arg2: memref<32x64xbf16, #tpu.memory_space<vmem>>, %arg3: memref<32x64xbf16, #tpu.memory_space<vmem>>, %arg4: memref<4x64xf32, #tpu.memory_space<vmem>>, %arg5: memref<1x64xf32, #tpu.memory_space<vmem>>, %arg6: memref<64x34xf32, #tpu.memory_space<vmem>>, %arg7: memref<2x64xf32, #tpu.memory_space<vmem>>, %arg8: memref<1x64xf32, #tpu.memory_space<vmem>>, %arg9: memref<16x64xf32, #tpu.memory_space<vmem>>, %arg10: memref<1x64xf32, #tpu.memory_space<vmem>>, %arg11: memref<64x32xbf16, #tpu.memory_space<vmem>>, %arg12: memref<1x8x32xf32, #tpu.memory_space<vmem>>, %arg13: memref<19x64xf32, #tpu.memory_space<vmem>>, %arg14: memref<16x64xf32, #tpu.memory_space<vmem>>, %arg15: memref<16x64xf32, #tpu.memory_space<vmem>>, %arg16: memref<16x16xf32, #tpu.memory_space<vmem>>, %arg17: memref<16x16xf32, #tpu.memory_space<vmem>>, %arg18: memref<16x64xf32, #tpu.memory_space<vmem>>, %arg19: memref<256x64xf32, #tpu.memory_space<vmem>>, %arg20: memref<256x64xf32, #tpu.memory_space<vmem>>) attributes {dimension_semantics = [#tpu.dimension_semantics<parallel>], iteration_bounds = array<i64: 2>, scalar_prefetch = 0 : i64, scratch_operands = 8 : i64, tpu.core_type = #tpu.core_type<tc>, window_params = [{transform_indices = @transform_0, window_bounds = array<i64: 1, 16, 32>}, {pipeline_mode = #tpu.pipeline_mode<synchronous>, transform_indices = @transform_1, window_bounds = array<i64: 32, 64>}, {pipeline_mode = #tpu.pipeline_mode<synchronous>, transform_indices = @transform_2, window_bounds = array<i64: 32, 64>}, {pipeline_mode = #tpu.pipeline_mode<synchronous>, transform_indices = @transform_3, window_bounds = array<i64: 4, 64>}, {pipeline_mode = #tpu.pipeline_mode<synchronous>, transform_indices = @transform_4, window_bounds = array<i64: 1, 64>}, {pipeline_mode = #tpu.pipeline_mode<synchronous>, transform_indices = @transform_5, window_bounds = array<i64: 64, 34>}, {pipeline_mode = #tpu.pipeline_mode<synchronous>, transform_indices = @transform_6, window_bounds = array<i64: 2, 64>}, {pipeline_mode = #tpu.pipeline_mode<synchronous>, transform_indices = @transform_7, window_bounds = array<i64: 1, 64>}, {pipeline_mode = #tpu.pipeline_mode<synchronous>, transform_indices = @transform_8, window_bounds = array<i64: 16, 64>}, {pipeline_mode = #tpu.pipeline_mode<synchronous>, transform_indices = @transform_9, window_bounds = array<i64: 1, 64>}, {pipeline_mode = #tpu.pipeline_mode<synchronous>, transform_indices = @transform_10, window_bounds = array<i64: 64, 32>}, {transform_indices = @transform_11, window_bounds = array<i64: 1, 8, 32>}]} {
    %c0 = arith.constant 0 : index
    %c0_0 = arith.constant 0 : index
    %c0_1 = arith.constant 0 : index
    %0 = vector.load %arg1[%c0, %c0_0, %c0_1] : memref<1x16x32xf32, #tpu.memory_space<vmem>>, vector<1x16x32xf32>
    %1 = vector.shape_cast %0 : vector<1x16x32xf32> to vector<16x32xf32>
    %c0_2 = arith.constant 0 : index
    %c0_3 = arith.constant 0 : index
    %2 = vector.load %arg2[%c0_2, %c0_3] : memref<32x64xbf16, #tpu.memory_space<vmem>>, vector<32x64xbf16>
    %3 = arith.truncf %1 : vector<16x32xf32> to vector<16x32xbf16>
    %cst = arith.constant dense<0.000000e+00> : vector<16x64xf32>
    %4 = tpu.matmul %3, %2, %cst {dimension_numbers = #tpu.dot_dimension_numbers<[1], [0], [0], [1], [0, 0, 1, 1], [], []>} : vector<16x32xbf16>, vector<32x64xbf16>, vector<16x64xf32> -> vector<16x64xf32>
    %cst_4 = arith.constant 0.000000e+00 : f32
    %5 = vector.broadcast %cst_4 : f32 to vector<3x64xf32>
    %c0_5 = arith.constant 0 : index
    %c0_6 = arith.constant 0 : index
    %6 = vector.load %arg13[%c0_5, %c0_6] : memref<19x64xf32, #tpu.memory_space<vmem>>, vector<3x64xf32>
    tpu.vector_store %arg13[%c0_5, %c0_6], %5 {strides = array<i32>} : memref<19x64xf32, #tpu.memory_space<vmem>>, vector<3x64xf32>,
    %c3 = arith.constant 3 : index
    %c0_7 = arith.constant 0 : index
    %7 = vector.load %arg13[%c3, %c0_7] : memref<19x64xf32, #tpu.memory_space<vmem>>, vector<16x64xf32>
    tpu.vector_store %arg13[%c3, %c0_7], %4 {strides = array<i32>} : memref<19x64xf32, #tpu.memory_space<vmem>>, vector<16x64xf32>,
    %c0_8 = arith.constant 0 : index
    %c0_9 = arith.constant 0 : index
    %8 = vector.load %arg4[%c0_8, %c0_9] : memref<4x64xf32, #tpu.memory_space<vmem>>, vector<4x64xf32>
    %cst_10 = arith.constant 0.000000e+00 : f32
    %9 = vector.broadcast %cst_10 : f32 to vector<16x64xf32>
    %c0_11 = arith.constant 0 : index
    %c0_12 = arith.constant 0 : index
    %10 = vector.load %arg13[%c0_11, %c0_12] : memref<19x64xf32, #tpu.memory_space<vmem>>, vector<16x64xf32>
    %11 = vector.extract_strided_slice %8 {offsets = [0, 0], sizes = [1, 64], strides = [1, 1]} : vector<4x64xf32> to vector<1x64xf32>
    %12 = vector.broadcast %11 : vector<1x64xf32> to vector<16x64xf32>
    %13 = arith.mulf %10, %12 : vector<16x64xf32>
    %14 = arith.addf %9, %13 : vector<16x64xf32>
    %c1 = arith.constant 1 : index
    %c0_13 = arith.constant 0 : index
    %15 = vector.load %arg13[%c1, %c0_13] : memref<19x64xf32, #tpu.memory_space<vmem>>, vector<16x64xf32>
    %16 = vector.extract_strided_slice %8 {offsets = [1, 0], sizes = [1, 64], strides = [1, 1]} : vector<4x64xf32> to vector<1x64xf32>
    %17 = vector.broadcast %16 : vector<1x64xf32> to vector<16x64xf32>
    %18 = arith.mulf %15, %17 : vector<16x64xf32>
    %19 = arith.addf %14, %18 : vector<16x64xf32>
    %c2 = arith.constant 2 : index
    %c0_14 = arith.constant 0 : index
    %20 = vector.load %arg13[%c2, %c0_14] : memref<19x64xf32, #tpu.memory_space<vmem>>, vector<16x64xf32>
    %21 = vector.extract_strided_slice %8 {offsets = [2, 0], sizes = [1, 64], strides = [1, 1]} : vector<4x64xf32> to vector<1x64xf32>
    %22 = vector.broadcast %21 : vector<1x64xf32> to vector<16x64xf32>
    %23 = arith.mulf %20, %22 : vector<16x64xf32>
    %24 = arith.addf %19, %23 : vector<16x64xf32>
    %c3_15 = arith.constant 3 : index
    %c0_16 = arith.constant 0 : index
    %25 = vector.load %arg13[%c3_15, %c0_16] : memref<19x64xf32, #tpu.memory_space<vmem>>, vector<16x64xf32>
    %26 = vector.extract_strided_slice %8 {offsets = [3, 0], sizes = [1, 64], strides = [1, 1]} : vector<4x64xf32> to vector<1x64xf32>
    %27 = vector.broadcast %26 : vector<1x64xf32> to vector<16x64xf32>
    %28 = arith.mulf %25, %27 : vector<16x64xf32>
    %29 = arith.addf %24, %28 : vector<16x64xf32>
    %c0_17 = arith.constant 0 : index
    %c0_18 = arith.constant 0 : index
    %30 = vector.load %arg5[%c0_17, %c0_18] : memref<1x64xf32, #tpu.memory_space<vmem>>, vector<1x64xf32>
    %31 = vector.broadcast %30 : vector<1x64xf32> to vector<16x64xf32>
    %32 = arith.addf %29, %31 : vector<16x64xf32>
    %33 = arith.negf %32 : vector<16x64xf32>
    %34 = math.exp %33 : vector<16x64xf32>
    %cst_19 = arith.constant 1.000000e+00 : f32
    %35 = vector.broadcast %cst_19 : f32 to vector<16x64xf32>
    %36 = arith.addf %35, %34 : vector<16x64xf32>
    %37 = arith.divf %35, %36 : vector<16x64xf32>
    %38 = arith.mulf %32, %37 : vector<16x64xf32>
    %c0_20 = arith.constant 0 : index
    %c0_21 = arith.constant 0 : index
    %39 = vector.load %arg14[%c0_20, %c0_21] : memref<16x64xf32, #tpu.memory_space<vmem>>, vector<16x64xf32>
    tpu.vector_store %arg14[%c0_20, %c0_21], %38 {strides = array<i32>} : memref<16x64xf32, #tpu.memory_space<vmem>>, vector<16x64xf32>,
    %c0_22 = arith.constant 0 : index
    %c0_23 = arith.constant 0 : index
    %40 = vector.load %arg6[%c0_22, %c0_23] : memref<64x34xf32, #tpu.memory_space<vmem>>, vector<64x34xf32>
    %cst_24 = arith.constant dense<0.000000e+00> : vector<16x34xf32>
    %41 = tpu.matmul %38, %40, %cst_24 {dimension_numbers = #tpu.dot_dimension_numbers<[1], [0], [0], [1], [0, 0, 1, 1], [], []>} : vector<16x64xf32>, vector<64x34xf32>, vector<16x34xf32> -> vector<16x34xf32>
    %42 = vector.extract_strided_slice %41 {offsets = [0, 0], sizes = [16, 2], strides = [1, 1]} : vector<16x34xf32> to vector<16x2xf32>
    %c0_25 = arith.constant 0 : index
    %c0_26 = arith.constant 0 : index
    %43 = vector.load %arg7[%c0_25, %c0_26] : memref<2x64xf32, #tpu.memory_space<vmem>>, vector<2x64xf32>
    %cst_27 = arith.constant dense<0.000000e+00> : vector<16x64xf32>
    %44 = tpu.matmul %42, %43, %cst_27 {dimension_numbers = #tpu.dot_dimension_numbers<[1], [0], [0], [1], [0, 0, 1, 1], [], []>} : vector<16x2xf32>, vector<2x64xf32>, vector<16x64xf32> -> vector<16x64xf32>
    %c0_28 = arith.constant 0 : index
    %c0_29 = arith.constant 0 : index
    %45 = vector.load %arg8[%c0_28, %c0_29] : memref<1x64xf32, #tpu.memory_space<vmem>>, vector<1x64xf32>
    %46 = vector.broadcast %45 : vector<1x64xf32> to vector<16x64xf32>
    %47 = arith.addf %44, %46 : vector<16x64xf32>
    %cst_30 = arith.constant 0.000000e+00 : f32
    %48 = vector.broadcast %cst_30 : f32 to vector<16x64xf32>
    %49 = arith.maximumf %47, %48 : vector<16x64xf32>
    %50 = math.absf %47 : vector<16x64xf32>
    %cst_31 = arith.constant 0.000000e+00 : f32
    %51 = vector.broadcast %cst_31 : f32 to vector<16x64xf32>
    %52 = arith.subf %51, %50 : vector<16x64xf32>
    %53 = math.exp %52 : vector<16x64xf32>
    %cst_32 = arith.constant 1.000000e+00 : f32
    %54 = vector.broadcast %cst_32 : f32 to vector<16x64xf32>
    %55 = arith.addf %54, %53 : vector<16x64xf32>
    %56 = math.log %55 : vector<16x64xf32>
    %57 = arith.addf %49, %56 : vector<16x64xf32>
    %c0_33 = arith.constant 0 : index
    %c0_34 = arith.constant 0 : index
    %58 = vector.load %arg15[%c0_33, %c0_34] : memref<16x64xf32, #tpu.memory_space<vmem>>, vector<16x64xf32>
    tpu.vector_store %arg15[%c0_33, %c0_34], %57 {strides = array<i32>} : memref<16x64xf32, #tpu.memory_space<vmem>>, vector<16x64xf32>,
    %59 = vector.extract_strided_slice %41 {offsets = [0, 2], sizes = [16, 16], strides = [1, 1]} : vector<16x34xf32> to vector<16x16xf32>
    %c0_35 = arith.constant 0 : index
    %c0_36 = arith.constant 0 : index
    %60 = vector.load %arg16[%c0_35, %c0_36] : memref<16x16xf32, #tpu.memory_space<vmem>>, vector<16x16xf32>
    tpu.vector_store %arg16[%c0_35, %c0_36], %59 {strides = array<i32>} : memref<16x16xf32, #tpu.memory_space<vmem>>, vector<16x16xf32>,
    %61 = vector.extract_strided_slice %41 {offsets = [0, 18], sizes = [16, 16], strides = [1, 1]} : vector<16x34xf32> to vector<16x16xf32>
    %c0_37 = arith.constant 0 : index
    %c0_38 = arith.constant 0 : index
    %62 = vector.load %arg17[%c0_37, %c0_38] : memref<16x16xf32, #tpu.memory_space<vmem>>, vector<16x16xf32>
    tpu.vector_store %arg17[%c0_37, %c0_38], %61 {strides = array<i32>} : memref<16x16xf32, #tpu.memory_space<vmem>>, vector<16x16xf32>,
    %c0_39 = arith.constant 0 : index
    %c0_40 = arith.constant 0 : index
    %63 = vector.load %arg9[%c0_39, %c0_40] : memref<16x64xf32, #tpu.memory_space<vmem>>, vector<16x64xf32>
    %c0_41 = arith.constant 0 : index
    %c0_42 = arith.constant 0 : index
    %64 = vector.load %arg10[%c0_41, %c0_42] : memref<1x64xf32, #tpu.memory_space<vmem>>, vector<1x64xf32>
    %cst_43 = arith.constant 0.000000e+00 : f32
    %65 = vector.broadcast %cst_43 : f32 to vector<16x64xf32>
    %c0_i32 = arith.constant 0 : i32
    %c16_i32 = arith.constant 16 : i32
    %66 = arith.muli %c0_i32, %c16_i32 : i32
    %67 = tpu.assume_multiple %66, 16 : i32
    %68 = arith.index_cast %67 : i32 to index
    %c0_44 = arith.constant 0 : index
    %69 = vector.load %arg15[%68, %c0_44] : memref<16x64xf32, #tpu.memory_space<vmem>>, vector<16x64xf32>
    %70 = arith.index_cast %67 : i32 to index
    %c0_45 = arith.constant 0 : index
    %71 = vector.load %arg14[%70, %c0_45] : memref<16x64xf32, #tpu.memory_space<vmem>>, vector<16x64xf32>
    %72 = arith.index_cast %67 : i32 to index
    %c0_46 = arith.constant 0 : index
    %73 = vector.load %arg16[%72, %c0_46] : memref<16x16xf32, #tpu.memory_space<vmem>>, vector<16x16xf32>
    %74 = arith.mulf %69, %71 : vector<16x64xf32>
    %75 = vector.extract_strided_slice %63 {offsets = [0, 0], sizes = [1, 64], strides = [1, 1]} : vector<16x64xf32> to vector<1x64xf32>
    %76 = vector.broadcast %75 : vector<1x64xf32> to vector<16x64xf32>
    %77 = arith.mulf %69, %76 : vector<16x64xf32>
    %78 = math.exp %77 : vector<16x64xf32>
    %c0_47 = arith.constant 0 : index
    %c0_48 = arith.constant 0 : index
    %79 = tpu.strided_load %arg19[%c0_47, %c0_48] {strides = array<i32: 16, 1>} : memref<256x64xf32, #tpu.memory_space<vmem>>, vector<16x64xf32>
    tpu.strided_store %arg19[%c0_47, %c0_48], %78 {strides = array<i32: 16, 1>} : memref<256x64xf32, #tpu.memory_space<vmem>>, vector<16x64xf32>
    %80 = vector.extract_strided_slice %73 {offsets = [0, 0], sizes = [16, 1], strides = [1, 1]} : vector<16x16xf32> to vector<16x1xf32>
    %81 = vector.broadcast %80 : vector<16x1xf32> to vector<16x64xf32>
    %82 = arith.mulf %81, %74 : vector<16x64xf32>
    %c0_49 = arith.constant 0 : index
    %c0_50 = arith.constant 0 : index
    %83 = tpu.strided_load %arg20[%c0_49, %c0_50] {strides = array<i32: 16, 1>} : memref<256x64xf32, #tpu.memory_space<vmem>>, vector<16x64xf32>
    tpu.strided_store %arg20[%c0_49, %c0_50], %82 {strides = array<i32: 16, 1>} : memref<256x64xf32, #tpu.memory_space<vmem>>, vector<16x64xf32>
    %84 = vector.extract_strided_slice %63 {offsets = [1, 0], sizes = [1, 64], strides = [1, 1]} : vector<16x64xf32> to vector<1x64xf32>
    %85 = vector.broadcast %84 : vector<1x64xf32> to vector<16x64xf32>
    %86 = arith.mulf %69, %85 : vector<16x64xf32>
    %87 = math.exp %86 : vector<16x64xf32>
    %c1_51 = arith.constant 1 : index
    %c0_52 = arith.constant 0 : index
    %88 = tpu.strided_load %arg19[%c1_51, %c0_52] {strides = array<i32: 16, 1>} : memref<256x64xf32, #tpu.memory_space<vmem>>, vector<16x64xf32>
    tpu.strided_store %arg19[%c1_51, %c0_52], %87 {strides = array<i32: 16, 1>} : memref<256x64xf32, #tpu.memory_space<vmem>>, vector<16x64xf32>
    %89 = vector.extract_strided_slice %73 {offsets = [0, 1], sizes = [16, 1], strides = [1, 1]} : vector<16x16xf32> to vector<16x1xf32>
    %90 = vector.broadcast %89 : vector<16x1xf32> to vector<16x64xf32>
    %91 = arith.mulf %90, %74 : vector<16x64xf32>
    %c1_53 = arith.constant 1 : index
    %c0_54 = arith.constant 0 : index
    %92 = tpu.strided_load %arg20[%c1_53, %c0_54] {strides = array<i32: 16, 1>} : memref<256x64xf32, #tpu.memory_space<vmem>>, vector<16x64xf32>
    tpu.strided_store %arg20[%c1_53, %c0_54], %91 {strides = array<i32: 16, 1>} : memref<256x64xf32, #tpu.memory_space<vmem>>, vector<16x64xf32>
    %93 = vector.extract_strided_slice %63 {offsets = [2, 0], sizes = [1, 64], strides = [1, 1]} : vector<16x64xf32> to vector<1x64xf32>
    %94 = vector.broadcast %93 : vector<1x64xf32> to vector<16x64xf32>
    %95 = arith.mulf %69, %94 : vector<16x64xf32>
    %96 = math.exp %95 : vector<16x64xf32>
    %c2_55 = arith.constant 2 : index
    %c0_56 = arith.constant 0 : index
    %97 = tpu.strided_load %arg19[%c2_55, %c0_56] {strides = array<i32: 16, 1>} : memref<256x64xf32, #tpu.memory_space<vmem>>, vector<16x64xf32>
    tpu.strided_store %arg19[%c2_55, %c0_56], %96 {strides = array<i32: 16, 1>} : memref<256x64xf32, #tpu.memory_space<vmem>>, vector<16x64xf32>
    %98 = vector.extract_strided_slice %73 {offsets = [0, 2], sizes = [16, 1], strides = [1, 1]} : vector<16x16xf32> to vector<16x1xf32>
    %99 = vector.broadcast %98 : vector<16x1xf32> to vector<16x64xf32>
    %100 = arith.mulf %99, %74 : vector<16x64xf32>
    %c2_57 = arith.constant 2 : index
    %c0_58 = arith.constant 0 : index
    %101 = tpu.strided_load %arg20[%c2_57, %c0_58] {strides = array<i32: 16, 1>} : memref<256x64xf32, #tpu.memory_space<vmem>>, vector<16x64xf32>
    tpu.strided_store %arg20[%c2_57, %c0_58], %100 {strides = array<i32: 16, 1>} : memref<256x64xf32, #tpu.memory_space<vmem>>, vector<16x64xf32>
    %102 = vector.extract_strided_slice %63 {offsets = [3, 0], sizes = [1, 64], strides = [1, 1]} : vector<16x64xf32> to vector<1x64xf32>
    %103 = vector.broadcast %102 : vector<1x64xf32> to vector<16x64xf32>
    %104 = arith.mulf %69, %103 : vector<16x64xf32>
    %105 = math.exp %104 : vector<16x64xf32>
    %c3_59 = arith.constant 3 : index
    %c0_60 = arith.constant 0 : index
    %106 = tpu.strided_load %arg19[%c3_59, %c0_60] {strides = array<i32: 16, 1>} : memref<256x64xf32, #tpu.memory_space<vmem>>, vector<16x64xf32>
    tpu.strided_store %arg19[%c3_59, %c0_60], %105 {strides = array<i32: 16, 1>} : memref<256x64xf32, #tpu.memory_space<vmem>>, vector<16x64xf32>
    %107 = vector.extract_strided_slice %73 {offsets = [0, 3], sizes = [16, 1], strides = [1, 1]} : vector<16x16xf32> to vector<16x1xf32>
    %108 = vector.broadcast %107 : vector<16x1xf32> to vector<16x64xf32>
    %109 = arith.mulf %108, %74 : vector<16x64xf32>
    %c3_61 = arith.constant 3 : index
    %c0_62 = arith.constant 0 : index
    %110 = tpu.strided_load %arg20[%c3_61, %c0_62] {strides = array<i32: 16, 1>} : memref<256x64xf32, #tpu.memory_space<vmem>>, vector<16x64xf32>
    tpu.strided_store %arg20[%c3_61, %c0_62], %109 {strides = array<i32: 16, 1>} : memref<256x64xf32, #tpu.memory_space<vmem>>, vector<16x64xf32>
    %111 = vector.extract_strided_slice %63 {offsets = [4, 0], sizes = [1, 64], strides = [1, 1]} : vector<16x64xf32> to vector<1x64xf32>
    %112 = vector.broadcast %111 : vector<1x64xf32> to vector<16x64xf32>
    %113 = arith.mulf %69, %112 : vector<16x64xf32>
    %114 = math.exp %113 : vector<16x64xf32>
    %c4 = arith.constant 4 : index
    %c0_63 = arith.constant 0 : index
    %115 = tpu.strided_load %arg19[%c4, %c0_63] {strides = array<i32: 16, 1>} : memref<256x64xf32, #tpu.memory_space<vmem>>, vector<16x64xf32>
    tpu.strided_store %arg19[%c4, %c0_63], %114 {strides = array<i32: 16, 1>} : memref<256x64xf32, #tpu.memory_space<vmem>>, vector<16x64xf32>
    %116 = vector.extract_strided_slice %73 {offsets = [0, 4], sizes = [16, 1], strides = [1, 1]} : vector<16x16xf32> to vector<16x1xf32>
    %117 = vector.broadcast %116 : vector<16x1xf32> to vector<16x64xf32>
    %118 = arith.mulf %117, %74 : vector<16x64xf32>
    %c4_64 = arith.constant 4 : index
    %c0_65 = arith.constant 0 : index
    %119 = tpu.strided_load %arg20[%c4_64, %c0_65] {strides = array<i32: 16, 1>} : memref<256x64xf32, #tpu.memory_space<vmem>>, vector<16x64xf32>
    tpu.strided_store %arg20[%c4_64, %c0_65], %118 {strides = array<i32: 16, 1>} : memref<256x64xf32, #tpu.memory_space<vmem>>, vector<16x64xf32>
    %120 = vector.extract_strided_slice %63 {offsets = [5, 0], sizes = [1, 64], strides = [1, 1]} : vector<16x64xf32> to vector<1x64xf32>
    %121 = vector.broadcast %120 : vector<1x64xf32> to vector<16x64xf32>
    %122 = arith.mulf %69, %121 : vector<16x64xf32>
    %123 = math.exp %122 : vector<16x64xf32>
    %c5 = arith.constant 5 : index
    %c0_66 = arith.constant 0 : index
    %124 = tpu.strided_load %arg19[%c5, %c0_66] {strides = array<i32: 16, 1>} : memref<256x64xf32, #tpu.memory_space<vmem>>, vector<16x64xf32>
    tpu.strided_store %arg19[%c5, %c0_66], %123 {strides = array<i32: 16, 1>} : memref<256x64xf32, #tpu.memory_space<vmem>>, vector<16x64xf32>
    %125 = vector.extract_strided_slice %73 {offsets = [0, 5], sizes = [16, 1], strides = [1, 1]} : vector<16x16xf32> to vector<16x1xf32>
    %126 = vector.broadcast %125 : vector<16x1xf32> to vector<16x64xf32>
    %127 = arith.mulf %126, %74 : vector<16x64xf32>
    %c5_67 = arith.constant 5 : index
    %c0_68 = arith.constant 0 : index
    %128 = tpu.strided_load %arg20[%c5_67, %c0_68] {strides = array<i32: 16, 1>} : memref<256x64xf32, #tpu.memory_space<vmem>>, vector<16x64xf32>
    tpu.strided_store %arg20[%c5_67, %c0_68], %127 {strides = array<i32: 16, 1>} : memref<256x64xf32, #tpu.memory_space<vmem>>, vector<16x64xf32>
    %129 = vector.extract_strided_slice %63 {offsets = [6, 0], sizes = [1, 64], strides = [1, 1]} : vector<16x64xf32> to vector<1x64xf32>
    %130 = vector.broadcast %129 : vector<1x64xf32> to vector<16x64xf32>
    %131 = arith.mulf %69, %130 : vector<16x64xf32>
    %132 = math.exp %131 : vector<16x64xf32>
    %c6 = arith.constant 6 : index
    %c0_69 = arith.constant 0 : index
    %133 = tpu.strided_load %arg19[%c6, %c0_69] {strides = array<i32: 16, 1>} : memref<256x64xf32, #tpu.memory_space<vmem>>, vector<16x64xf32>
    tpu.strided_store %arg19[%c6, %c0_69], %132 {strides = array<i32: 16, 1>} : memref<256x64xf32, #tpu.memory_space<vmem>>, vector<16x64xf32>
    %134 = vector.extract_strided_slice %73 {offsets = [0, 6], sizes = [16, 1], strides = [1, 1]} : vector<16x16xf32> to vector<16x1xf32>
    %135 = vector.broadcast %134 : vector<16x1xf32> to vector<16x64xf32>
    %136 = arith.mulf %135, %74 : vector<16x64xf32>
    %c6_70 = arith.constant 6 : index
    %c0_71 = arith.constant 0 : index
    %137 = tpu.strided_load %arg20[%c6_70, %c0_71] {strides = array<i32: 16, 1>} : memref<256x64xf32, #tpu.memory_space<vmem>>, vector<16x64xf32>
    tpu.strided_store %arg20[%c6_70, %c0_71], %136 {strides = array<i32: 16, 1>} : memref<256x64xf32, #tpu.memory_space<vmem>>, vector<16x64xf32>
    %138 = vector.extract_strided_slice %63 {offsets = [7, 0], sizes = [1, 64], strides = [1, 1]} : vector<16x64xf32> to vector<1x64xf32>
    %139 = vector.broadcast %138 : vector<1x64xf32> to vector<16x64xf32>
    %140 = arith.mulf %69, %139 : vector<16x64xf32>
    %141 = math.exp %140 : vector<16x64xf32>
    %c7 = arith.constant 7 : index
    %c0_72 = arith.constant 0 : index
    %142 = tpu.strided_load %arg19[%c7, %c0_72] {strides = array<i32: 16, 1>} : memref<256x64xf32, #tpu.memory_space<vmem>>, vector<16x64xf32>
    tpu.strided_store %arg19[%c7, %c0_72], %141 {strides = array<i32: 16, 1>} : memref<256x64xf32, #tpu.memory_space<vmem>>, vector<16x64xf32>
    %143 = vector.extract_strided_slice %73 {offsets = [0, 7], sizes = [16, 1], strides = [1, 1]} : vector<16x16xf32> to vector<16x1xf32>
    %144 = vector.broadcast %143 : vector<16x1xf32> to vector<16x64xf32>
    %145 = arith.mulf %144, %74 : vector<16x64xf32>
    %c7_73 = arith.constant 7 : index
    %c0_74 = arith.constant 0 : index
    %146 = tpu.strided_load %arg20[%c7_73, %c0_74] {strides = array<i32: 16, 1>} : memref<256x64xf32, #tpu.memory_space<vmem>>, vector<16x64xf32>
    tpu.strided_store %arg20[%c7_73, %c0_74], %145 {strides = array<i32: 16, 1>} : memref<256x64xf32, #tpu.memory_space<vmem>>, vector<16x64xf32>
    %147 = vector.extract_strided_slice %63 {offsets = [8, 0], sizes = [1, 64], strides = [1, 1]} : vector<16x64xf32> to vector<1x64xf32>
    %148 = vector.broadcast %147 : vector<1x64xf32> to vector<16x64xf32>
    %149 = arith.mulf %69, %148 : vector<16x64xf32>
    %150 = math.exp %149 : vector<16x64xf32>
    %c8 = arith.constant 8 : index
    %c0_75 = arith.constant 0 : index
    %151 = tpu.strided_load %arg19[%c8, %c0_75] {strides = array<i32: 16, 1>} : memref<256x64xf32, #tpu.memory_space<vmem>>, vector<16x64xf32>
    tpu.strided_store %arg19[%c8, %c0_75], %150 {strides = array<i32: 16, 1>} : memref<256x64xf32, #tpu.memory_space<vmem>>, vector<16x64xf32>
    %152 = vector.extract_strided_slice %73 {offsets = [0, 8], sizes = [16, 1], strides = [1, 1]} : vector<16x16xf32> to vector<16x1xf32>
    %153 = vector.broadcast %152 : vector<16x1xf32> to vector<16x64xf32>
    %154 = arith.mulf %153, %74 : vector<16x64xf32>
    %c8_76 = arith.constant 8 : index
    %c0_77 = arith.constant 0 : index
    %155 = tpu.strided_load %arg20[%c8_76, %c0_77] {strides = array<i32: 16, 1>} : memref<256x64xf32, #tpu.memory_space<vmem>>, vector<16x64xf32>
    tpu.strided_store %arg20[%c8_76, %c0_77], %154 {strides = array<i32: 16, 1>} : memref<256x64xf32, #tpu.memory_space<vmem>>, vector<16x64xf32>
    %156 = vector.extract_strided_slice %63 {offsets = [9, 0], sizes = [1, 64], strides = [1, 1]} : vector<16x64xf32> to vector<1x64xf32>
    %157 = vector.broadcast %156 : vector<1x64xf32> to vector<16x64xf32>
    %158 = arith.mulf %69, %157 : vector<16x64xf32>
    %159 = math.exp %158 : vector<16x64xf32>
    %c9 = arith.constant 9 : index
    %c0_78 = arith.constant 0 : index
    %160 = tpu.strided_load %arg19[%c9, %c0_78] {strides = array<i32: 16, 1>} : memref<256x64xf32, #tpu.memory_space<vmem>>, vector<16x64xf32>
    tpu.strided_store %arg19[%c9, %c0_78], %159 {strides = array<i32: 16, 1>} : memref<256x64xf32, #tpu.memory_space<vmem>>, vector<16x64xf32>
    %161 = vector.extract_strided_slice %73 {offsets = [0, 9], sizes = [16, 1], strides = [1, 1]} : vector<16x16xf32> to vector<16x1xf32>
    %162 = vector.broadcast %161 : vector<16x1xf32> to vector<16x64xf32>
    %163 = arith.mulf %162, %74 : vector<16x64xf32>
    %c9_79 = arith.constant 9 : index
    %c0_80 = arith.constant 0 : index
    %164 = tpu.strided_load %arg20[%c9_79, %c0_80] {strides = array<i32: 16, 1>} : memref<256x64xf32, #tpu.memory_space<vmem>>, vector<16x64xf32>
    tpu.strided_store %arg20[%c9_79, %c0_80], %163 {strides = array<i32: 16, 1>} : memref<256x64xf32, #tpu.memory_space<vmem>>, vector<16x64xf32>
    %165 = vector.extract_strided_slice %63 {offsets = [10, 0], sizes = [1, 64], strides = [1, 1]} : vector<16x64xf32> to vector<1x64xf32>
    %166 = vector.broadcast %165 : vector<1x64xf32> to vector<16x64xf32>
    %167 = arith.mulf %69, %166 : vector<16x64xf32>
    %168 = math.exp %167 : vector<16x64xf32>
    %c10 = arith.constant 10 : index
    %c0_81 = arith.constant 0 : index
    %169 = tpu.strided_load %arg19[%c10, %c0_81] {strides = array<i32: 16, 1>} : memref<256x64xf32, #tpu.memory_space<vmem>>, vector<16x64xf32>
    tpu.strided_store %arg19[%c10, %c0_81], %168 {strides = array<i32: 16, 1>} : memref<256x64xf32, #tpu.memory_space<vmem>>, vector<16x64xf32>
    %170 = vector.extract_strided_slice %73 {offsets = [0, 10], sizes = [16, 1], strides = [1, 1]} : vector<16x16xf32> to vector<16x1xf32>
    %171 = vector.broadcast %170 : vector<16x1xf32> to vector<16x64xf32>
    %172 = arith.mulf %171, %74 : vector<16x64xf32>
    %c10_82 = arith.constant 10 : index
    %c0_83 = arith.constant 0 : index
    %173 = tpu.strided_load %arg20[%c10_82, %c0_83] {strides = array<i32: 16, 1>} : memref<256x64xf32, #tpu.memory_space<vmem>>, vector<16x64xf32>
    tpu.strided_store %arg20[%c10_82, %c0_83], %172 {strides = array<i32: 16, 1>} : memref<256x64xf32, #tpu.memory_space<vmem>>, vector<16x64xf32>
    %174 = vector.extract_strided_slice %63 {offsets = [11, 0], sizes = [1, 64], strides = [1, 1]} : vector<16x64xf32> to vector<1x64xf32>
    %175 = vector.broadcast %174 : vector<1x64xf32> to vector<16x64xf32>
    %176 = arith.mulf %69, %175 : vector<16x64xf32>
    %177 = math.exp %176 : vector<16x64xf32>
    %c11 = arith.constant 11 : index
    %c0_84 = arith.constant 0 : index
    %178 = tpu.strided_load %arg19[%c11, %c0_84] {strides = array<i32: 16, 1>} : memref<256x64xf32, #tpu.memory_space<vmem>>, vector<16x64xf32>
    tpu.strided_store %arg19[%c11, %c0_84], %177 {strides = array<i32: 16, 1>} : memref<256x64xf32, #tpu.memory_space<vmem>>, vector<16x64xf32>
    %179 = vector.extract_strided_slice %73 {offsets = [0, 11], sizes = [16, 1], strides = [1, 1]} : vector<16x16xf32> to vector<16x1xf32>
    %180 = vector.broadcast %179 : vector<16x1xf32> to vector<16x64xf32>
    %181 = arith.mulf %180, %74 : vector<16x64xf32>
    %c11_85 = arith.constant 11 : index
    %c0_86 = arith.constant 0 : index
    %182 = tpu.strided_load %arg20[%c11_85, %c0_86] {strides = array<i32: 16, 1>} : memref<256x64xf32, #tpu.memory_space<vmem>>, vector<16x64xf32>
    tpu.strided_store %arg20[%c11_85, %c0_86], %181 {strides = array<i32: 16, 1>} : memref<256x64xf32, #tpu.memory_space<vmem>>, vector<16x64xf32>
    %183 = vector.extract_strided_slice %63 {offsets = [12, 0], sizes = [1, 64], strides = [1, 1]} : vector<16x64xf32> to vector<1x64xf32>
    %184 = vector.broadcast %183 : vector<1x64xf32> to vector<16x64xf32>
    %185 = arith.mulf %69, %184 : vector<16x64xf32>
    %186 = math.exp %185 : vector<16x64xf32>
    %c12 = arith.constant 12 : index
    %c0_87 = arith.constant 0 : index
    %187 = tpu.strided_load %arg19[%c12, %c0_87] {strides = array<i32: 16, 1>} : memref<256x64xf32, #tpu.memory_space<vmem>>, vector<16x64xf32>
    tpu.strided_store %arg19[%c12, %c0_87], %186 {strides = array<i32: 16, 1>} : memref<256x64xf32, #tpu.memory_space<vmem>>, vector<16x64xf32>
    %188 = vector.extract_strided_slice %73 {offsets = [0, 12], sizes = [16, 1], strides = [1, 1]} : vector<16x16xf32> to vector<16x1xf32>
    %189 = vector.broadcast %188 : vector<16x1xf32> to vector<16x64xf32>
    %190 = arith.mulf %189, %74 : vector<16x64xf32>
    %c12_88 = arith.constant 12 : index
    %c0_89 = arith.constant 0 : index
    %191 = tpu.strided_load %arg20[%c12_88, %c0_89] {strides = array<i32: 16, 1>} : memref<256x64xf32, #tpu.memory_space<vmem>>, vector<16x64xf32>
    tpu.strided_store %arg20[%c12_88, %c0_89], %190 {strides = array<i32: 16, 1>} : memref<256x64xf32, #tpu.memory_space<vmem>>, vector<16x64xf32>
    %192 = vector.extract_strided_slice %63 {offsets = [13, 0], sizes = [1, 64], strides = [1, 1]} : vector<16x64xf32> to vector<1x64xf32>
    %193 = vector.broadcast %192 : vector<1x64xf32> to vector<16x64xf32>
    %194 = arith.mulf %69, %193 : vector<16x64xf32>
    %195 = math.exp %194 : vector<16x64xf32>
    %c13 = arith.constant 13 : index
    %c0_90 = arith.constant 0 : index
    %196 = tpu.strided_load %arg19[%c13, %c0_90] {strides = array<i32: 16, 1>} : memref<256x64xf32, #tpu.memory_space<vmem>>, vector<16x64xf32>
    tpu.strided_store %arg19[%c13, %c0_90], %195 {strides = array<i32: 16, 1>} : memref<256x64xf32, #tpu.memory_space<vmem>>, vector<16x64xf32>
    %197 = vector.extract_strided_slice %73 {offsets = [0, 13], sizes = [16, 1], strides = [1, 1]} : vector<16x16xf32> to vector<16x1xf32>
    %198 = vector.broadcast %197 : vector<16x1xf32> to vector<16x64xf32>
    %199 = arith.mulf %198, %74 : vector<16x64xf32>
    %c13_91 = arith.constant 13 : index
    %c0_92 = arith.constant 0 : index
    %200 = tpu.strided_load %arg20[%c13_91, %c0_92] {strides = array<i32: 16, 1>} : memref<256x64xf32, #tpu.memory_space<vmem>>, vector<16x64xf32>
    tpu.strided_store %arg20[%c13_91, %c0_92], %199 {strides = array<i32: 16, 1>} : memref<256x64xf32, #tpu.memory_space<vmem>>, vector<16x64xf32>
    %201 = vector.extract_strided_slice %63 {offsets = [14, 0], sizes = [1, 64], strides = [1, 1]} : vector<16x64xf32> to vector<1x64xf32>
    %202 = vector.broadcast %201 : vector<1x64xf32> to vector<16x64xf32>
    %203 = arith.mulf %69, %202 : vector<16x64xf32>
    %204 = math.exp %203 : vector<16x64xf32>
    %c14 = arith.constant 14 : index
    %c0_93 = arith.constant 0 : index
    %205 = tpu.strided_load %arg19[%c14, %c0_93] {strides = array<i32: 16, 1>} : memref<256x64xf32, #tpu.memory_space<vmem>>, vector<16x64xf32>
    tpu.strided_store %arg19[%c14, %c0_93], %204 {strides = array<i32: 16, 1>} : memref<256x64xf32, #tpu.memory_space<vmem>>, vector<16x64xf32>
    %206 = vector.extract_strided_slice %73 {offsets = [0, 14], sizes = [16, 1], strides = [1, 1]} : vector<16x16xf32> to vector<16x1xf32>
    %207 = vector.broadcast %206 : vector<16x1xf32> to vector<16x64xf32>
    %208 = arith.mulf %207, %74 : vector<16x64xf32>
    %c14_94 = arith.constant 14 : index
    %c0_95 = arith.constant 0 : index
    %209 = tpu.strided_load %arg20[%c14_94, %c0_95] {strides = array<i32: 16, 1>} : memref<256x64xf32, #tpu.memory_space<vmem>>, vector<16x64xf32>
    tpu.strided_store %arg20[%c14_94, %c0_95], %208 {strides = array<i32: 16, 1>} : memref<256x64xf32, #tpu.memory_space<vmem>>, vector<16x64xf32>
    %210 = vector.extract_strided_slice %63 {offsets = [15, 0], sizes = [1, 64], strides = [1, 1]} : vector<16x64xf32> to vector<1x64xf32>
    %211 = vector.broadcast %210 : vector<1x64xf32> to vector<16x64xf32>
    %212 = arith.mulf %69, %211 : vector<16x64xf32>
    %213 = math.exp %212 : vector<16x64xf32>
    %c15 = arith.constant 15 : index
    %c0_96 = arith.constant 0 : index
    %214 = tpu.strided_load %arg19[%c15, %c0_96] {strides = array<i32: 16, 1>} : memref<256x64xf32, #tpu.memory_space<vmem>>, vector<16x64xf32>
    tpu.strided_store %arg19[%c15, %c0_96], %213 {strides = array<i32: 16, 1>} : memref<256x64xf32, #tpu.memory_space<vmem>>, vector<16x64xf32>
    %215 = vector.extract_strided_slice %73 {offsets = [0, 15], sizes = [16, 1], strides = [1, 1]} : vector<16x16xf32> to vector<16x1xf32>
    %216 = vector.broadcast %215 : vector<16x1xf32> to vector<16x64xf32>
    %217 = arith.mulf %216, %74 : vector<16x64xf32>
    %c15_97 = arith.constant 15 : index
    %c0_98 = arith.constant 0 : index
    %218 = tpu.strided_load %arg20[%c15_97, %c0_98] {strides = array<i32: 16, 1>} : memref<256x64xf32, #tpu.memory_space<vmem>>, vector<16x64xf32>
    tpu.strided_store %arg20[%c15_97, %c0_98], %217 {strides = array<i32: 16, 1>} : memref<256x64xf32, #tpu.memory_space<vmem>>, vector<16x64xf32>
    %c0_i32_99 = arith.constant 0 : i32
    %c16_i32_100 = arith.constant 16 : i32
    %219 = arith.addi %c0_i32_99, %c16_i32_100 : i32
    %c1_i32 = arith.constant 1 : i32
    %220 = scf.for %arg21 = %c0_i32_99 to %219 step %c1_i32 iter_args(%arg22 = %65) -> (vector<16x64xf32>)  : i32 {
      %c16_i32_117 = arith.constant 16 : i32
      %243 = arith.muli %arg21, %c16_i32_117 : i32
      %244 = tpu.assume_multiple %243, 16 : i32
      %245 = arith.index_cast %244 : i32 to index
      %c0_118 = arith.constant 0 : index
      %246 = vector.load %arg19[%245, %c0_118] : memref<256x64xf32, #tpu.memory_space<vmem>>, vector<16x64xf32>
      %247 = arith.mulf %246, %arg22 : vector<16x64xf32>
      %248 = arith.index_cast %244 : i32 to index
      %c0_119 = arith.constant 0 : index
      %249 = vector.load %arg20[%248, %c0_119] : memref<256x64xf32, #tpu.memory_space<vmem>>, vector<16x64xf32>
      %250 = arith.addf %247, %249 : vector<16x64xf32>
      %251 = arith.index_cast %244 : i32 to index
      %c0_120 = arith.constant 0 : index
      %252 = vector.load %arg20[%251, %c0_120] : memref<256x64xf32, #tpu.memory_space<vmem>>, vector<16x64xf32>
      tpu.vector_store %arg20[%251, %c0_120], %250 {strides = array<i32>} : memref<256x64xf32, #tpu.memory_space<vmem>>, vector<16x64xf32>,
      scf.yield %250 : vector<16x64xf32>
    }
    %c16_i32_101 = arith.constant 16 : i32
    %c16_i32_102 = arith.constant 16 : i32
    %221 = arith.addi %67, %c16_i32_102 : i32
    %c8_i32 = arith.constant 8 : i32
    %222 = arith.cmpi sgt, %221, %c8_i32 : i32
    %223 = arith.extui %222 : i1 to i32
    %c0_i32_103 = arith.constant 0 : i32
    %224 = arith.cmpi ne, %223, %c0_i32_103 : i32
    scf.if %224 {
      %243 = arith.index_cast %67 : i32 to index
      %c0_117 = arith.constant 0 : index
      %244 = vector.load %arg17[%243, %c0_117] : memref<16x16xf32, #tpu.memory_space<vmem>>, vector<16x16xf32>
      %245 = vector.broadcast %64 : vector<1x64xf32> to vector<16x64xf32>
      %246 = arith.mulf %245, %71 : vector<16x64xf32>
      %c0_118 = arith.constant 0 : index
      %c0_119 = arith.constant 0 : index
      %247 = tpu.strided_load %arg20[%c0_118, %c0_119] {strides = array<i32: 16, 1>} : memref<256x64xf32, #tpu.memory_space<vmem>>, vector<16x64xf32>
      %248 = vector.extract_strided_slice %244 {offsets = [0, 0], sizes = [16, 1], strides = [1, 1]} : vector<16x16xf32> to vector<16x1xf32>
      %249 = vector.broadcast %248 : vector<16x1xf32> to vector<16x64xf32>
      %250 = arith.mulf %247, %249 : vector<16x64xf32>
      %251 = arith.addf %246, %250 : vector<16x64xf32>
      %c1_120 = arith.constant 1 : index
      %c0_121 = arith.constant 0 : index
      %252 = tpu.strided_load %arg20[%c1_120, %c0_121] {strides = array<i32: 16, 1>} : memref<256x64xf32, #tpu.memory_space<vmem>>, vector<16x64xf32>
      %253 = vector.extract_strided_slice %244 {offsets = [0, 1], sizes = [16, 1], strides = [1, 1]} : vector<16x16xf32> to vector<16x1xf32>
      %254 = vector.broadcast %253 : vector<16x1xf32> to vector<16x64xf32>
      %255 = arith.mulf %252, %254 : vector<16x64xf32>
      %256 = arith.addf %251, %255 : vector<16x64xf32>
      %c2_122 = arith.constant 2 : index
      %c0_123 = arith.constant 0 : index
      %257 = tpu.strided_load %arg20[%c2_122, %c0_123] {strides = array<i32: 16, 1>} : memref<256x64xf32, #tpu.memory_space<vmem>>, vector<16x64xf32>
      %258 = vector.extract_strided_slice %244 {offsets = [0, 2], sizes = [16, 1], strides = [1, 1]} : vector<16x16xf32> to vector<16x1xf32>
      %259 = vector.broadcast %258 : vector<16x1xf32> to vector<16x64xf32>
      %260 = arith.mulf %257, %259 : vector<16x64xf32>
      %261 = arith.addf %256, %260 : vector<16x64xf32>
      %c3_124 = arith.constant 3 : index
      %c0_125 = arith.constant 0 : index
      %262 = tpu.strided_load %arg20[%c3_124, %c0_125] {strides = array<i32: 16, 1>} : memref<256x64xf32, #tpu.memory_space<vmem>>, vector<16x64xf32>
      %263 = vector.extract_strided_slice %244 {offsets = [0, 3], sizes = [16, 1], strides = [1, 1]} : vector<16x16xf32> to vector<16x1xf32>
      %264 = vector.broadcast %263 : vector<16x1xf32> to vector<16x64xf32>
      %265 = arith.mulf %262, %264 : vector<16x64xf32>
      %266 = arith.addf %261, %265 : vector<16x64xf32>
      %c4_126 = arith.constant 4 : index
      %c0_127 = arith.constant 0 : index
      %267 = tpu.strided_load %arg20[%c4_126, %c0_127] {strides = array<i32: 16, 1>} : memref<256x64xf32, #tpu.memory_space<vmem>>, vector<16x64xf32>
      %268 = vector.extract_strided_slice %244 {offsets = [0, 4], sizes = [16, 1], strides = [1, 1]} : vector<16x16xf32> to vector<16x1xf32>
      %269 = vector.broadcast %268 : vector<16x1xf32> to vector<16x64xf32>
      %270 = arith.mulf %267, %269 : vector<16x64xf32>
      %271 = arith.addf %266, %270 : vector<16x64xf32>
      %c5_128 = arith.constant 5 : index
      %c0_129 = arith.constant 0 : index
      %272 = tpu.strided_load %arg20[%c5_128, %c0_129] {strides = array<i32: 16, 1>} : memref<256x64xf32, #tpu.memory_space<vmem>>, vector<16x64xf32>
      %273 = vector.extract_strided_slice %244 {offsets = [0, 5], sizes = [16, 1], strides = [1, 1]} : vector<16x16xf32> to vector<16x1xf32>
      %274 = vector.broadcast %273 : vector<16x1xf32> to vector<16x64xf32>
      %275 = arith.mulf %272, %274 : vector<16x64xf32>
      %276 = arith.addf %271, %275 : vector<16x64xf32>
      %c6_130 = arith.constant 6 : index
      %c0_131 = arith.constant 0 : index
      %277 = tpu.strided_load %arg20[%c6_130, %c0_131] {strides = array<i32: 16, 1>} : memref<256x64xf32, #tpu.memory_space<vmem>>, vector<16x64xf32>
      %278 = vector.extract_strided_slice %244 {offsets = [0, 6], sizes = [16, 1], strides = [1, 1]} : vector<16x16xf32> to vector<16x1xf32>
      %279 = vector.broadcast %278 : vector<16x1xf32> to vector<16x64xf32>
      %280 = arith.mulf %277, %279 : vector<16x64xf32>
      %281 = arith.addf %276, %280 : vector<16x64xf32>
      %c7_132 = arith.constant 7 : index
      %c0_133 = arith.constant 0 : index
      %282 = tpu.strided_load %arg20[%c7_132, %c0_133] {strides = array<i32: 16, 1>} : memref<256x64xf32, #tpu.memory_space<vmem>>, vector<16x64xf32>
      %283 = vector.extract_strided_slice %244 {offsets = [0, 7], sizes = [16, 1], strides = [1, 1]} : vector<16x16xf32> to vector<16x1xf32>
      %284 = vector.broadcast %283 : vector<16x1xf32> to vector<16x64xf32>
      %285 = arith.mulf %282, %284 : vector<16x64xf32>
      %286 = arith.addf %281, %285 : vector<16x64xf32>
      %c8_134 = arith.constant 8 : index
      %c0_135 = arith.constant 0 : index
      %287 = tpu.strided_load %arg20[%c8_134, %c0_135] {strides = array<i32: 16, 1>} : memref<256x64xf32, #tpu.memory_space<vmem>>, vector<16x64xf32>
      %288 = vector.extract_strided_slice %244 {offsets = [0, 8], sizes = [16, 1], strides = [1, 1]} : vector<16x16xf32> to vector<16x1xf32>
      %289 = vector.broadcast %288 : vector<16x1xf32> to vector<16x64xf32>
      %290 = arith.mulf %287, %289 : vector<16x64xf32>
      %291 = arith.addf %286, %290 : vector<16x64xf32>
      %c9_136 = arith.constant 9 : index
      %c0_137 = arith.constant 0 : index
      %292 = tpu.strided_load %arg20[%c9_136, %c0_137] {strides = array<i32: 16, 1>} : memref<256x64xf32, #tpu.memory_space<vmem>>, vector<16x64xf32>
      %293 = vector.extract_strided_slice %244 {offsets = [0, 9], sizes = [16, 1], strides = [1, 1]} : vector<16x16xf32> to vector<16x1xf32>
      %294 = vector.broadcast %293 : vector<16x1xf32> to vector<16x64xf32>
      %295 = arith.mulf %292, %294 : vector<16x64xf32>
      %296 = arith.addf %291, %295 : vector<16x64xf32>
      %c10_138 = arith.constant 10 : index
      %c0_139 = arith.constant 0 : index
      %297 = tpu.strided_load %arg20[%c10_138, %c0_139] {strides = array<i32: 16, 1>} : memref<256x64xf32, #tpu.memory_space<vmem>>, vector<16x64xf32>
      %298 = vector.extract_strided_slice %244 {offsets = [0, 10], sizes = [16, 1], strides = [1, 1]} : vector<16x16xf32> to vector<16x1xf32>
      %299 = vector.broadcast %298 : vector<16x1xf32> to vector<16x64xf32>
      %300 = arith.mulf %297, %299 : vector<16x64xf32>
      %301 = arith.addf %296, %300 : vector<16x64xf32>
      %c11_140 = arith.constant 11 : index
      %c0_141 = arith.constant 0 : index
      %302 = tpu.strided_load %arg20[%c11_140, %c0_141] {strides = array<i32: 16, 1>} : memref<256x64xf32, #tpu.memory_space<vmem>>, vector<16x64xf32>
      %303 = vector.extract_strided_slice %244 {offsets = [0, 11], sizes = [16, 1], strides = [1, 1]} : vector<16x16xf32> to vector<16x1xf32>
      %304 = vector.broadcast %303 : vector<16x1xf32> to vector<16x64xf32>
      %305 = arith.mulf %302, %304 : vector<16x64xf32>
      %306 = arith.addf %301, %305 : vector<16x64xf32>
      %c12_142 = arith.constant 12 : index
      %c0_143 = arith.constant 0 : index
      %307 = tpu.strided_load %arg20[%c12_142, %c0_143] {strides = array<i32: 16, 1>} : memref<256x64xf32, #tpu.memory_space<vmem>>, vector<16x64xf32>
      %308 = vector.extract_strided_slice %244 {offsets = [0, 12], sizes = [16, 1], strides = [1, 1]} : vector<16x16xf32> to vector<16x1xf32>
      %309 = vector.broadcast %308 : vector<16x1xf32> to vector<16x64xf32>
      %310 = arith.mulf %307, %309 : vector<16x64xf32>
      %311 = arith.addf %306, %310 : vector<16x64xf32>
      %c13_144 = arith.constant 13 : index
      %c0_145 = arith.constant 0 : index
      %312 = tpu.strided_load %arg20[%c13_144, %c0_145] {strides = array<i32: 16, 1>} : memref<256x64xf32, #tpu.memory_space<vmem>>, vector<16x64xf32>
      %313 = vector.extract_strided_slice %244 {offsets = [0, 13], sizes = [16, 1], strides = [1, 1]} : vector<16x16xf32> to vector<16x1xf32>
      %314 = vector.broadcast %313 : vector<16x1xf32> to vector<16x64xf32>
      %315 = arith.mulf %312, %314 : vector<16x64xf32>
      %316 = arith.addf %311, %315 : vector<16x64xf32>
      %c14_146 = arith.constant 14 : index
      %c0_147 = arith.constant 0 : index
      %317 = tpu.strided_load %arg20[%c14_146, %c0_147] {strides = array<i32: 16, 1>} : memref<256x64xf32, #tpu.memory_space<vmem>>, vector<16x64xf32>
      %318 = vector.extract_strided_slice %244 {offsets = [0, 14], sizes = [16, 1], strides = [1, 1]} : vector<16x16xf32> to vector<16x1xf32>
      %319 = vector.broadcast %318 : vector<16x1xf32> to vector<16x64xf32>
      %320 = arith.mulf %317, %319 : vector<16x64xf32>
      %321 = arith.addf %316, %320 : vector<16x64xf32>
      %c15_148 = arith.constant 15 : index
      %c0_149 = arith.constant 0 : index
      %322 = tpu.strided_load %arg20[%c15_148, %c0_149] {strides = array<i32: 16, 1>} : memref<256x64xf32, #tpu.memory_space<vmem>>, vector<16x64xf32>
      %323 = vector.extract_strided_slice %244 {offsets = [0, 15], sizes = [16, 1], strides = [1, 1]} : vector<16x16xf32> to vector<16x1xf32>
      %324 = vector.broadcast %323 : vector<16x1xf32> to vector<16x64xf32>
      %325 = arith.mulf %322, %324 : vector<16x64xf32>
      %326 = arith.addf %321, %325 : vector<16x64xf32>
      %327 = arith.index_cast %67 : i32 to index
      %c0_150 = arith.constant 0 : index
      %328 = vector.load %arg18[%327, %c0_150] : memref<16x64xf32, #tpu.memory_space<vmem>>, vector<16x64xf32>
      tpu.vector_store %arg18[%327, %c0_150], %326 {strides = array<i32>} : memref<16x64xf32, #tpu.memory_space<vmem>>, vector<16x64xf32>,
    } else {
    }
    %c1_i32_104 = arith.constant 1 : i32
    %225 = vector.extract_strided_slice %1 {offsets = [8, 0], sizes = [8, 32], strides = [1, 1]} : vector<16x32xf32> to vector<8x32xf32>
    %c0_105 = arith.constant 0 : index
    %c0_106 = arith.constant 0 : index
    %226 = vector.load %arg3[%c0_105, %c0_106] : memref<32x64xbf16, #tpu.memory_space<vmem>>, vector<32x64xbf16>
    %227 = arith.truncf %225 : vector<8x32xf32> to vector<8x32xbf16>
    %cst_107 = arith.constant dense<0.000000e+00> : vector<8x64xf32>
    %228 = tpu.matmul %227, %226, %cst_107 {dimension_numbers = #tpu.dot_dimension_numbers<[1], [0], [0], [1], [0, 0, 1, 1], [], []>} : vector<8x32xbf16>, vector<32x64xbf16>, vector<8x64xf32> -> vector<8x64xf32>
    %c8_108 = arith.constant 8 : index
    %c0_109 = arith.constant 0 : index
    %229 = vector.load %arg18[%c8_108, %c0_109] : memref<16x64xf32, #tpu.memory_space<vmem>>, vector<8x64xf32>
    %230 = arith.negf %228 : vector<8x64xf32>
    %231 = math.exp %230 : vector<8x64xf32>
    %cst_110 = arith.constant 1.000000e+00 : f32
    %232 = vector.broadcast %cst_110 : f32 to vector<8x64xf32>
    %233 = arith.addf %232, %231 : vector<8x64xf32>
    %234 = arith.divf %232, %233 : vector<8x64xf32>
    %235 = arith.mulf %228, %234 : vector<8x64xf32>
    %236 = arith.mulf %229, %235 : vector<8x64xf32>
    %c0_111 = arith.constant 0 : index
    %c0_112 = arith.constant 0 : index
    %237 = vector.load %arg11[%c0_111, %c0_112] : memref<64x32xbf16, #tpu.memory_space<vmem>>, vector<64x32xbf16>
    %238 = arith.truncf %236 : vector<8x64xf32> to vector<8x64xbf16>
    %cst_113 = arith.constant dense<0.000000e+00> : vector<8x32xf32>
    %239 = tpu.matmul %238, %237, %cst_113 {dimension_numbers = #tpu.dot_dimension_numbers<[1], [0], [0], [1], [0, 0, 1, 1], [], []>} : vector<8x64xbf16>, vector<64x32xbf16>, vector<8x32xf32> -> vector<8x32xf32>
    %c0_114 = arith.constant 0 : index
    %c0_115 = arith.constant 0 : index
    %c0_116 = arith.constant 0 : index
    %240 = vector.load %arg12[%c0_114, %c0_115, %c0_116] : memref<1x8x32xf32, #tpu.memory_space<vmem>>, vector<1x8x32xf32>
    %241 = vector.shape_cast %240 : vector<1x8x32xf32> to vector<8x32xf32>
    %242 = vector.shape_cast %239 : vector<8x32xf32> to vector<1x8x32xf32>
    tpu.vector_store %arg12[%c0_114, %c0_115, %c0_116], %242 {strides = array<i32>} : memref<1x8x32xf32, #tpu.memory_space<vmem>>, vector<1x8x32xf32>,
    return
  }
  func.func @transform_0(%arg0: i32) -> (i32, i32, i32) {
    %c0_i32 = arith.constant 0 : i32
    %c0_i32_0 = arith.constant 0 : i32
    %c0_i32_1 = arith.constant 0 : i32
    return %arg0, %c0_i32, %c0_i32_0 : i32, i32, i32
  }
  func.func @transform_1(%arg0: i32) -> (i32, i32) {
    %c0_i32 = arith.constant 0 : i32
    %c0_i32_0 = arith.constant 0 : i32
    %c0_i32_1 = arith.constant 0 : i32
    return %c0_i32, %c0_i32_0 : i32, i32
  }
  func.func @transform_2(%arg0: i32) -> (i32, i32) {
    %c0_i32 = arith.constant 0 : i32
    %c0_i32_0 = arith.constant 0 : i32
    %c0_i32_1 = arith.constant 0 : i32
    return %c0_i32, %c0_i32_0 : i32, i32
  }
  func.func @transform_3(%arg0: i32) -> (i32, i32) {
    %c0_i32 = arith.constant 0 : i32
    %c0_i32_0 = arith.constant 0 : i32
    %c0_i32_1 = arith.constant 0 : i32
    return %c0_i32, %c0_i32_0 : i32, i32
  }
  func.func @transform_4(%arg0: i32) -> (i32, i32) {
    %c0_i32 = arith.constant 0 : i32
    %c0_i32_0 = arith.constant 0 : i32
    %c0_i32_1 = arith.constant 0 : i32
    return %c0_i32, %c0_i32_0 : i32, i32
  }
  func.func @transform_5(%arg0: i32) -> (i32, i32) {
    %c0_i32 = arith.constant 0 : i32
    %c0_i32_0 = arith.constant 0 : i32
    %c0_i32_1 = arith.constant 0 : i32
    return %c0_i32, %c0_i32_0 : i32, i32
  }
  func.func @transform_6(%arg0: i32) -> (i32, i32) {
    %c0_i32 = arith.constant 0 : i32
    %c0_i32_0 = arith.constant 0 : i32
    %c0_i32_1 = arith.constant 0 : i32
    return %c0_i32, %c0_i32_0 : i32, i32
  }
  func.func @transform_7(%arg0: i32) -> (i32, i32) {
    %c0_i32 = arith.constant 0 : i32
    %c0_i32_0 = arith.constant 0 : i32
    %c0_i32_1 = arith.constant 0 : i32
    return %c0_i32, %c0_i32_0 : i32, i32
  }
  func.func @transform_8(%arg0: i32) -> (i32, i32) {
    %c0_i32 = arith.constant 0 : i32
    %c0_i32_0 = arith.constant 0 : i32
    %c0_i32_1 = arith.constant 0 : i32
    return %c0_i32, %c0_i32_0 : i32, i32
  }
  func.func @transform_9(%arg0: i32) -> (i32, i32) {
    %c0_i32 = arith.constant 0 : i32
    %c0_i32_0 = arith.constant 0 : i32
    %c0_i32_1 = arith.constant 0 : i32
    return %c0_i32, %c0_i32_0 : i32, i32
  }
  func.func @transform_10(%arg0: i32) -> (i32, i32) {
    %c0_i32 = arith.constant 0 : i32
    %c0_i32_0 = arith.constant 0 : i32
    %c0_i32_1 = arith.constant 0 : i32
    return %c0_i32, %c0_i32_0 : i32, i32
  }
  func.func @transform_11(%arg0: i32) -> (i32, i32, i32) {
    %c0_i32 = arith.constant 0 : i32
    %c0_i32_0 = arith.constant 0 : i32
    %c0_i32_1 = arith.constant 0 : i32
    return %arg0, %c0_i32, %c0_i32_0 : i32, i32, i32
  }
}

</mosaic_0001>

<llo_original>
// kernel: run.6
$region0: #{run.6}
  #allocation0 [shape = 'u32[]', space=smem, size = 0x4, offset = 0x4, fixed_abs, tag = 'smem constant byte address 0x4 - core index']
  #allocation1 [shape = 'u32[144,128]{1,0:T(1,128)}', space=vmem, size = 0x12000, scoped, tag = 'internal scratch']
  %s0 = inlined_call_operand.vmem [shape: f32[16,32], index: 0, kind: input, shape index: {}]
  %s1 = inlined_call_operand.vmem [shape: f32[16,32], index: 1, kind: input, shape index: {}]
  %s2 = inlined_call_operand.vmem [shape: f32[1,32], index: 2, kind: input, shape index: {}]
  %s3 = inlined_call_operand.vmem [shape: f32[1,32], index: 3, kind: input, shape index: {}]
  %s4 = inlined_call_operand.vmem [shape: f32[16,32], index: 4, kind: output, shape index: {}]
  %s5 = sld [smem:[#allocation0]]
  $region26: #{run.6} parent=0
    _
  %s7 = ssub.s32 1, %s5
  %s8 = scalar_select 0, %s7, %s5
  // Predicated region
  $region2: #{run.6} parent=0 // pred_check
    _
  $region3: #{run.6} parent=0 // pred_check_branch
    %10 = sbr.rel (0) target = $region5
  $region4: #{run.6} parent=0 // pred_region
    _
  $region5: #{run.6} parent=0 // pred_fallthru
    _
  // Predicated region
  $region6: #{run.6} parent=0 // pred_check
    _
  $region7: #{run.6} parent=0 // pred_check_branch
    %12 = sbr.rel (0) target = $region9
  $region8: #{run.6} parent=0 // pred_region
    _
  $region9: #{run.6} parent=0 // pred_fallthru
    _
  // Predicated region
  $region10: #{run.6} parent=0 // pred_check
    _
  $region11: #{run.6} parent=0 // pred_check_branch
    %14 = sbr.rel (0) target = $region13
  $region12: #{run.6} parent=0 // pred_region
    _
  $region13: #{run.6} parent=0 // pred_fallthru
    _
  // Predicated region
  $region14: #{run.6} parent=0 // pred_check
    _
  $region15: #{run.6} parent=0 // pred_check_branch
    %16 = sbr.rel (0) target = $region17
  $region16: #{run.6} parent=0 // pred_region
    _
  $region17: #{run.6} parent=0 // pred_fallthru
    _
  %v17 = vld [vmem:[%s0] sm:$0xff]
  %v18 = vld [vmem:[%s0 + $0x8] sm:$0xff]
  %v19 = vld [vmem:[%s1] sm:$0xff]
  %v20 = vld [vmem:[%s1 + $0x8] sm:$0xff]
  %v21 = vadd.f32 %v17, %v19
  %v22 = vadd.f32 %v18, %v20
  %vm23 = vcmask 261120
  %v24 = vsel %vm23, %v21, 0.0
  %25 = vadd.xlane.f32.xlu0 %v24
  %v26 = vpop.xlane.xlu0 %25
  %v27 = vsel %vm23, %v22, 0.0
  %28 = vadd.xlane.f32.xlu0 %v27
  %v29 = vpop.xlane.xlu0 %28
  %v30 = vrcp.pop 32.0
  %v31 = vmul.f32 %v26, %v30
  %v32 = vmul.f32 %v29, %v30
  %v33 = vsub.f32 %v21, %v31
  %v34 = vsub.f32 %v22, %v32
  %v35 = vmul.f32 %v33, %v33
  %v36 = vmul.f32 %v34, %v34
  %v37 = vsel %vm23, %v35, 0.0
  %38 = vadd.xlane.f32.xlu0 %v37
  %v39 = vpop.xlane.xlu0 %38
  %v40 = vsel %vm23, %v36, 0.0
  %41 = vadd.xlane.f32.xlu0 %v40
  %v42 = vpop.xlane.xlu0 %41
  %v43 = vmul.f32 %v39, %v30
  %v44 = vmul.f32 %v42, %v30
  %v45 = vadd.f32 %v43, 1e-06
  %v46 = vadd.f32 %v44, 1e-06
  %v47 = vrsqrt.pop %v45
  %v48 = vrsqrt.pop %v46
  %v49 = vmul.f32 %v33, %v47
  %v50 = vmul.f32 %v34, %v48
  %v51 = vld [vmem:[%s2] sm:$0x1]
  %v53 = vlaneseq
  %v54 = vshrl.u32 %v53, 7
  %v55 = vsub.s32 0, %v54
  %v56 = vrot.slane %v51, %v55
  %v58 = vmul.f32 %v49, %v56
  %v59 = vmul.f32 %v50, %v56
  %v60 = vld [vmem:[%s3] sm:$0x1]
  %v62 = vlaneseq
  %v63 = vshrl.u32 %v62, 7
  %v64 = vsub.s32 0, %v63
  %v65 = vrot.slane %v60, %v64
  %v67 = vadd.f32 %v58, %v65
  %v68 = vadd.f32 %v59, %v65
  %69 = vst.msk [vmem:[%s4] sm:$0xff] %vm23, %v67
  %70 = vst.msk [vmem:[%s4 + $0x8] sm:$0xff] %vm23, %v68
  // Predicated region
  $region18: #{run.6} parent=0 // pred_check
    _
  $region19: #{run.6} parent=0 // pred_check_branch
    %72 = sbr.rel (0) target = $region21
  $region20: #{run.6} parent=0 // pred_region
    _
  $region21: #{run.6} parent=0 // pred_fallthru
    _
  // Predicated region
  $region22: #{run.6} parent=0 // pred_check
    _
  $region23: #{run.6} parent=0 // pred_check_branch
    %74 = sbr.rel (0) target = $region25
  $region24: #{run.6} parent=0 // pred_region
    _
  $region25: #{run.6} parent=0 // pred_fallthru
    _

// kernel: run.9
$region0: #{run.9}
  #allocation0 [shape = 'u32[]', space=smem, size = 0x4, offset = 0x4, fixed_abs, tag = 'smem constant byte address 0x4 - core index']
  #allocation1 [shape = 'u32[144,128]{1,0:T(1,128)}', space=vmem, size = 0x12000, scoped, tag = 'internal scratch']
  %s0 = inlined_call_operand.vmem [shape: f32[16,32], index: 0, kind: input, shape index: {}]
  %s1 = inlined_call_operand.vmem [shape: bf16[32,64], index: 1, kind: input, shape index: {}]
  %s2 = inlined_call_operand.vmem [shape: f32[1,64], index: 2, kind: input, shape index: {}]
  %s3 = inlined_call_operand.vmem [shape: bf16[64,32], index: 3, kind: input, shape index: {}]
  %s4 = inlined_call_operand.vmem [shape: f32[1,32], index: 4, kind: input, shape index: {}]
  %s5 = inlined_call_operand.vmem [shape: f32[1,32], index: 5, kind: input, shape index: {}]
  %s6 = inlined_call_operand.vmem [shape: f32[1,32], index: 6, kind: input, shape index: {}]
  %s7 = inlined_call_operand.hbm [shape: f32[16,32], index: 7, kind: output, shape index: {}]
  %s8 = sld [smem:[#allocation0]]
  $region38: #{run.9} parent=0
    _
  %s10 = ssub.s32 1, %s8
  %s11 = scalar_select 0, %s10, %s8
  $region1: #{run.9} parent=0
    #allocation2 [shape = 'u8[8192]{0}', space=vmem, size = 0x2000, scoped, tag = 'output window, operand 0, single buffered']
    #allocation3 [shape = 's32[1]{0}', space=sflag, size = 0x4, scoped, tag = 'scoped memory for run.9']
    %12 = vsyncpa [#allocation3], 0
    // Predicated region
    $region2: #{run.9} parent=1 // pred_check
      _
    $region3: #{run.9} parent=1 // pred_check_branch
      %14 = sbr.rel (0) target = $region5
    $region4: #{run.9} parent=1 // pred_region
      _
    $region5: #{run.9} parent=1 // pred_fallthru
      _
    // Predicated region
    $region6: #{run.9} parent=1 // pred_check
      _
    $region7: #{run.9} parent=1 // pred_check_branch
      %16 = sbr.rel (0) target = $region9
    $region8: #{run.9} parent=1 // pred_region
      _
    $region9: #{run.9} parent=1 // pred_fallthru
      _
    // Predicated region
    $region10: #{run.9} parent=1 // pred_check
      _
    $region11: #{run.9} parent=1 // pred_check_branch
      %18 = sbr.rel (0) target = $region13
    $region12: #{run.9} parent=1 // pred_region
      _
    $region13: #{run.9} parent=1 // pred_fallthru
      _
    // Predicated region
    $region14: #{run.9} parent=1 // pred_check
      _
    $region15: #{run.9} parent=1 // pred_check_branch
      %20 = sbr.rel (0) target = $region17
    $region16: #{run.9} parent=1 // pred_region
      _
    $region17: #{run.9} parent=1 // pred_fallthru
      _
    // Predicated region
    $region18: #{run.9} parent=1 // pred_check
      _
    $region19: #{run.9} parent=1 // pred_check_branch
      %22 = sbr.rel (0) target = $region21
    $region20: #{run.9} parent=1 // pred_region
      _
    $region21: #{run.9} parent=1 // pred_fallthru
      _
    // Predicated region
    $region22: #{run.9} parent=1 // pred_check
      _
    $region23: #{run.9} parent=1 // pred_check_branch
      %24 = sbr.rel (0) target = $region25
    $region24: #{run.9} parent=1 // pred_region
      _
    $region25: #{run.9} parent=1 // pred_fallthru
      _
    // Predicated region
    $region26: #{run.9} parent=1 // pred_check
      _
    $region27: #{run.9} parent=1 // pred_check_branch
      %26 = sbr.rel (0) target = $region29
    $region28: #{run.9} parent=1 // pred_region
      _
    $region29: #{run.9} parent=1 // pred_fallthru
      _
    %v28 = vld [vmem:[%s0] sm:$0xff]
    %v29 = vld [vmem:[%s0 + $0x8] sm:$0xff]
    %v30 = vld [vmem:[%s1] sm:$0xf]
    %v31 = vld [vmem:[%s1 + $0x4] sm:$0xf]
    %v32 = vld [vmem:[%s1 + $0x8] sm:$0xf]
    %v33 = vld [vmem:[%s1 + $0xc] sm:$0xf]
    %v34 = vpack.c.bf16 %v29, %v28
    %v35 = vld [vmem:[%s2] sm:$0x1]
    %v37 = vlaneseq
    %v38 = vshrl.u32 %v37, 7
    %v39 = vsub.s32 0, %v38
    %v40 = vrot.slane %v35, %v39
    %v46 = vunpack.c.l.b16 %v30
    %v47 = vunpack.c.l.b16 %v31
    %v48 = vunpack.c.l.b16 %v32
    %v49 = vunpack.c.l.b16 %v33
    %v50 = vpack.c.b16 %v47, %v46
    %v51 = vpack.c.b16 %v49, %v48
    %vm54 = vcmask 261120
    %v56 = vsel %vm54, %v34, 0
    %58 = vmatprep.subr.bf16.mxu0 0
    %59 = vmatpush1.bf16.msra.mxu0 %v50
    %60 = vmatprep.subr.bf16.mxu0 0
    %61 = vmatpush1.bf16.msra.mxu0 %v51
    %62 = vmatprep.subr.bf16.mxu0 0
    %63 = vmatpush1.bf16.msra.mxu0 0
    %64 = vmatprep.subr.bf16.mxu0 0
    %65 = vmatpush1.bf16.msra.mxu0 0
    %66 = vmatprep.subr.bf16.mxu0 0
    %67 = vmatpush1.bf16.msra.mxu0 0
    %68 = vmatprep.subr.bf16.mxu0 0
    %69 = vmatpush1.bf16.msra.mxu0 0
    %70 = vmatprep.subr.bf16.mxu0 0
    %71 = vmatpush1.bf16.msra.mxu0 0
    %72 = vmatprep.subr.bf16.mxu0 0
    %73 = vmatpush1.bf16.msra.mxu0 0
    %74 = vmatprep.subr.bf16.mxu0 0
    %75 = vmatpush1.bf16.msra.mxu0 0
    %76 = vmatprep.subr.bf16.mxu0 0
    %77 = vmatpush1.bf16.msra.mxu0 0
    %78 = vmatprep.subr.bf16.mxu0 0
    %79 = vmatpush1.bf16.msra.mxu0 0
    %80 = vmatprep.subr.bf16.mxu0 0
    %81 = vmatpush1.bf16.msra.mxu0 0
    %82 = vmatprep.subr.bf16.mxu0 0
    %83 = vmatpush1.bf16.msra.mxu0 0
    %84 = vmatprep.subr.bf16.mxu0 0
    %85 = vmatpush1.bf16.msra.mxu0 0
    %86 = vmatprep.subr.bf16.mxu0 0
    %87 = vmatpush1.bf16.msra.mxu0 0
    %88 = vmatprep.subr.bf16.mxu0 0
    %89 = vmatpush1.bf16.msra.mxu0 0
    %90 = vmatprep.mubr.bf16.mxu0 0
    %91 = vmatmul.mubr.bf16.gmra.mrb[0].mxu0 %v56
    %v92 = vpop.f32.mrb[0].mxu0
    %v93 = vadd.f32 %v40, %v92
    %v94 = vpop.f32.mrb[0].mxu0
    %v95 = vpop.f32.mrb[0].mxu0
    %v96 = vadd.f32 %v40, %v95
    %v97 = vpop.f32.mrb[0].mxu0
    %98 = vdwg.mxu0
    %v99 = vmax.f32 %v93, 0.0
    %v100 = vmax.f32 %v96, 0.0
    %v101 = vld [vmem:[%s3] sm:$0xf]
    %v102 = vld [vmem:[%s3 + $0x4] sm:$0xf]
    %v103 = vld [vmem:[%s3 + $0x8] sm:$0xf]
    %v104 = vld [vmem:[%s3 + $0xc] sm:$0xf]
    %v105 = vld [vmem:[%s3 + $0x10] sm:$0xf]
    %v106 = vld [vmem:[%s3 + $0x14] sm:$0xf]
    %v107 = vld [vmem:[%s3 + $0x18] sm:$0xf]
    %v108 = vld [vmem:[%s3 + $0x1c] sm:$0xf]
    %v109 = vpack.c.bf16 %v100, %v99
    %v118 = vunpack.c.l.b16 %v101
    %v119 = vunpack.c.l.b16 %v102
    %v120 = vunpack.c.l.b16 %v103
    %v121 = vunpack.c.l.b16 %v104
    %v122 = vunpack.c.l.b16 %v105
    %v123 = vunpack.c.l.b16 %v106
    %v124 = vunpack.c.l.b16 %v107
    %v125 = vunpack.c.l.b16 %v108
    %v126 = vpack.c.b16 %v119, %v118
    %v127 = vpack.c.b16 %v121, %v120
    %v128 = vpack.c.b16 %v123, %v122
    %v129 = vpack.c.b16 %v125, %v124
    %vm134 = vcmask 523264
    %v136 = vsel %vm134, %v109, 0
    %138 = vmatprep.subr.bf16.mxu0 0
    %139 = vmatpush1.bf16.msra.mxu0 %v126
    %140 = vmatprep.subr.bf16.mxu0 0
    %141 = vmatpush1.bf16.msra.mxu0 %v127
    %142 = vmatprep.subr.bf16.mxu0 0
    %143 = vmatpush1.bf16.msra.mxu0 %v128
    %144 = vmatprep.subr.bf16.mxu0 0
    %145 = vmatpush1.bf16.msra.mxu0 %v129
    %146 = vmatprep.subr.bf16.mxu0 0
    %147 = vmatpush1.bf16.msra.mxu0 0
    %148 = vmatprep.subr.bf16.mxu0 0
    %149 = vmatpush1.bf16.msra.mxu0 0
    %150 = vmatprep.subr.bf16.mxu0 0
    %151 = vmatpush1.bf16.msra.mxu0 0
    %152 = vmatprep.subr.bf16.mxu0 0
    %153 = vmatpush1.bf16.msra.mxu0 0
    %154 = vmatprep.subr.bf16.mxu0 0
    %155 = vmatpush1.bf16.msra.mxu0 0
    %156 = vmatprep.subr.bf16.mxu0 0
    %157 = vmatpush1.bf16.msra.mxu0 0
    %158 = vmatprep.subr.bf16.mxu0 0
    %159 = vmatpush1.bf16.msra.mxu0 0
    %160 = vmatprep.subr.bf16.mxu0 0
    %161 = vmatpush1.bf16.msra.mxu0 0
    %162 = vmatprep.subr.bf16.mxu0 0
    %163 = vmatpush1.bf16.msra.mxu0 0
    %164 = vmatprep.subr.bf16.mxu0 0
    %165 = vmatpush1.bf16.msra.mxu0 0
    %166 = vmatprep.subr.bf16.mxu0 0
    %167 = vmatpush1.bf16.msra.mxu0 0
    %168 = vmatprep.subr.bf16.mxu0 0
    %169 = vmatpush1.bf16.msra.mxu0 0
    %170 = vmatprep.mubr.bf16.mxu0 0
    %171 = vmatmul.mubr.bf16.gmra.mrb[0].mxu0 %v136
    %v172 = vpop.f32.mrb[0].mxu0
    %v173 = vadd.f32 0.0, %v172
    %v174 = vpop.f32.mrb[0].mxu0
    %v175 = vpop.f32.mrb[0].mxu0
    %v176 = vadd.f32 0.0, %v175
    %v177 = vpop.f32.mrb[0].mxu0
    %178 = vdwg.mxu0
    %v179 = vadd.f32 %v28, %v173
    %v180 = vadd.f32 %v29, %v176
    %v181 = vld [vmem:[%s4] sm:$0x1]
    %v183 = vlaneseq
    %v184 = vshrl.u32 %v183, 7
    %v185 = vsub.s32 0, %v184
    %v186 = vrot.slane %v181, %v185
    %v188 = vadd.f32 %v179, %v186
    %v189 = vadd.f32 %v180, %v186
    %v190 = vsel %vm54, %v188, 0.0
    %191 = vadd.xlane.f32.xlu0 %v190
    %v192 = vpop.xlane.xlu0 %191
    %v193 = vsel %vm54, %v189, 0.0
    %194 = vadd.xlane.f32.xlu0 %v193
    %v195 = vpop.xlane.xlu0 %194
    %v196 = vrcp.pop 32.0
    %v197 = vmul.f32 %v192, %v196
    %v198 = vmul.f32 %v195, %v196
    %v199 = vsub.f32 %v188, %v197
    %v200 = vsub.f32 %v189, %v198
    %v201 = vmul.f32 %v199, %v199
    %v202 = vmul.f32 %v200, %v200
    %v203 = vsel %vm54, %v201, 0.0
    %204 = vadd.xlane.f32.xlu0 %v203
    %v205 = vpop.xlane.xlu0 %204
    %v206 = vsel %vm54, %v202, 0.0
    %207 = vadd.xlane.f32.xlu0 %v206
    %v208 = vpop.xlane.xlu0 %207
    %v209 = vmul.f32 %v205, %v196
    %v210 = vmul.f32 %v208, %v196
    %v211 = vadd.f32 %v209, 1e-06
    %v212 = vadd.f32 %v210, 1e-06
    %v213 = vrsqrt.pop %v211
    %v214 = vrsqrt.pop %v212
    %v215 = vmul.f32 %v199, %v213
    %v216 = vmul.f32 %v200, %v214
    %v217 = vld [vmem:[%s5] sm:$0x1]
    %v219 = vlaneseq
    %v220 = vshrl.u32 %v219, 7
    %v221 = vsub.s32 0, %v220
    %v222 = vrot.slane %v217, %v221
    %v224 = vmul.f32 %v215, %v222
    %v225 = vmul.f32 %v216, %v222
    %v226 = vld [vmem:[%s6] sm:$0x1]
    %v228 = vlaneseq
    %v229 = vshrl.u32 %v228, 7
    %v230 = vsub.s32 0, %v229
    %v231 = vrot.slane %v226, %v230
    %v233 = vadd.f32 %v224, %v231
    %v234 = vadd.f32 %v225, %v231
    %235 = vst.msk [vmem:[#allocation2] sm:$0xff] %vm54, %v233
    %236 = vst.msk [vmem:[#allocation2 + $0x8] sm:$0xff] %vm54, %v234
    // Predicated region
    $region30: #{run.9} parent=1 // pred_check
      _
    $region31: #{run.9} parent=1 // pred_check_branch
      %238 = sbr.rel (0) target = $region33
    $region32: #{run.9} parent=1 // pred_region
      %s240 = ssub.s32 256, 256
      %241 = vsyncadd [#allocation3], %s240
      %s242 = sshll.u32 [#allocation2], 4
      %s243 = int_to_ptr.vmem [resolvable:$true] %s242
      %248 = dma.vmem_to_hbm [thread:$0]  %s243, 256, %s7, [#allocation3], 128, 128, 8
    $region33: #{run.9} parent=1 // pred_fallthru
      _
    // Predicated region
    $region34: #{run.9} parent=1 // pred_check
      _
    $region35: #{run.9} parent=1 // pred_check_branch
      %250 = sbr.rel (0) target = $region37
    $region36: #{run.9} parent=1 // pred_region
      %251 = dma.done [#allocation3], 256
    $region37: #{run.9} parent=1 // pred_fallthru
      _
    %252 = vsyncpa [#allocation3], 1

// kernel: run.5
$region0: #{run.5}
  #allocation0 [shape = 'u32[]', space=smem, size = 0x4, offset = 0x4, fixed_abs, tag = 'smem constant byte address 0x4 - core index']
  #allocation1 [shape = 'u32[144,128]{1,0:T(1,128)}', space=vmem, size = 0x12000, scoped, tag = 'internal scratch']
  #allocation2 [shape = 'f32[11,64]{1,0:T(8,128)}', space=vmem, size = 0x2000, scoped, tag = 'scratch operand']
  #allocation3 [shape = 'f32[8,64]{1,0:T(8,128)}', space=vmem, size = 0x1000, scoped, tag = 'scratch operand']
  #allocation4 [shape = 'f32[8,64]{1,0:T(8,128)}', space=vmem, size = 0x1000, scoped, tag = 'scratch operand']
  #allocation5 [shape = 'f32[8,16]{1,0:T(8,128)}', space=vmem, size = 0x1000, scoped, tag = 'scratch operand']
  #allocation6 [shape = 'f32[8,16]{1,0:T(8,128)}', space=vmem, size = 0x1000, scoped, tag = 'scratch operand']
  #allocation7 [shape = 'f32[8,64]{1,0:T(8,128)}', space=vmem, size = 0x1000, scoped, tag = 'scratch operand']
  #allocation8 [shape = 'f32[128,64]{1,0:T(8,128)}', space=vmem, size = 0x10000, scoped, tag = 'scratch operand']
  #allocation9 [shape = 'f32[128,64]{1,0:T(8,128)}', space=vmem, size = 0x10000, scoped, tag = 'scratch operand']
  %s0 = inlined_call_operand.vmem [shape: f32[2,8,32], index: 0, kind: input, shape index: {}]
  %s1 = inlined_call_operand.hbm [shape: bf16[32,64], index: 1, kind: input, shape index: {}]
  %s2 = inlined_call_operand.hbm [shape: bf16[32,64], index: 2, kind: input, shape index: {}]
  %s3 = inlined_call_operand.hbm [shape: f32[4,64], index: 3, kind: input, shape index: {}]
  %s4 = inlined_call_operand.hbm [shape: f32[1,64], index: 4, kind: input, shape index: {}]
  %s5 = inlined_call_operand.vmem [shape: f32[64,34], index: 5, kind: input, shape index: {}]
  %s6 = inlined_call_operand.hbm [shape: f32[2,64], index: 6, kind: input, shape index: {}]
  %s7 = inlined_call_operand.hbm [shape: f32[1,64], index: 7, kind: input, shape index: {}]
  %s8 = inlined_call_operand.vmem [shape: f32[16,64], index: 8, kind: input, shape index: {}]
  %s9 = inlined_call_operand.vmem [shape: f32[1,64], index: 9, kind: input, shape index: {}]
  %s10 = inlined_call_operand.vmem [shape: bf16[64,32], index: 10, kind: input, shape index: {}]
  %s11 = inlined_call_operand.vmem [shape: f32[2,8,32], index: 11, kind: output, shape index: {}]
  %s12 = sld [smem:[#allocation0]]
  $region108: #{run.5} parent=0
    _
  %s14 = ssub.s32 1, %s12
  %s15 = scalar_select 0, %s14, %s12
  $region1: #{run.5} parent=0
    #allocation10 [shape = 'u8[8192]{0}', space=vmem, size = 0x2000, scoped, tag = 'input window, operand 1, single buffered']
    #allocation11 [shape = 's32[2]{0}', space=sflag, size = 0x8, scoped, tag = 'scoped memory for run.5']
    #allocation12 [shape = 'u8[8192]{0}', space=vmem, size = 0x2000, scoped, tag = 'input window, operand 2, single buffered']
    #allocation13 [shape = 's32[1]{0}', space=sflag, size = 0x4, scoped, tag = 'scoped memory for run.5']
    #allocation14 [shape = 'u8[2048]{0}', space=vmem, size = 0x800, scoped, tag = 'input window, operand 3, single buffered']
    #allocation15 [shape = 'u8[512]{0}', space=vmem, size = 0x400, scoped, tag = 'input window, operand 4, single buffered']
    #allocation16 [shape = 's32[1]{0}', space=sflag, size = 0x4, scoped, tag = 'scoped memory for run.5']
    #allocation17 [shape = 'u8[1024]{0}', space=vmem, size = 0x400, scoped, tag = 'input window, operand 6, single buffered']
    #allocation18 [shape = 'u8[512]{0}', space=vmem, size = 0x400, scoped, tag = 'input window, operand 7, single buffered']
    #allocation19 [shape = 's32[1]{0}', space=sflag, size = 0x4, scoped, tag = 'scoped memory for run.5']
    %16 = vsyncpa [#allocation11], 0
    %17 = vsyncpa [#allocation13], 0
    %18 = vsyncpa [#allocation16], 0
    %19 = vsyncpa [#allocation19], 0
    loop: start=0, step=1, limit=4
    $region2: #{run.5} parent=1 // loop_pre_header
      _
    $region3: #{run.5} parent=1 // loop_header
      %s21 = sphi 0, %s25
      %p22 = scmp.ge.s32.totalorder %s21, 4
      %s31 = sphi 0, %s33
      %s34 = sphi 0, %s31
      %s35 = sphi 0, %s34
      %s51 = sphi 0, %s35
      %s55 = sphi 0, %s55
      %s57 = sphi 0, %s55
      %s58 = sphi 0, %s57
      %s72 = sphi 0, %s58
      %s76 = sphi 0, %s76
      %s78 = sphi 0, %s76
      %s79 = sphi 0, %s78
      %s93 = sphi 0, %s79
      %s97 = sphi 0, %s97
      %s99 = sphi 0, %s97
      %s100 = sphi 0, %s99
      %s114 = sphi 0, %s100
      %s118 = sphi 0, %s118
      %s120 = sphi 0, %s118
      %s121 = sphi 0, %s120
      %s135 = sphi 0, %s121
      %s139 = sphi 0, %s139
      %s141 = sphi 0, %s139
      %s142 = sphi 0, %s141
      %s156 = sphi 0, %s142
      %s160 = sphi 0, %s160
      %s162 = sphi 0, %s160
      %s163 = sphi 0, %s162
      %s177 = sphi 0, %s163
      %s181 = sphi 0, %s181
      %s183 = sphi 0, %s181
      %s184 = sphi 0, %s183
      %s198 = sphi 0, %s184
      %s202 = sphi 0, %s202
      %s204 = sphi 0, %s202
      %s205 = sphi 0, %s204
      %s219 = sphi 0, %s205
      %s223 = sphi 0, %s223
      %s225 = sphi 0, %s223
      %s226 = sphi 0, %s225
      %s240 = sphi 0, %s226
      %s244 = sphi 0, %s244
      %s246 = sphi 0, %s244
      %s247 = sphi 0, %s246
      %s261 = sphi 0, %s247
      %s267 = sphi 0, %s269
      %s270 = sphi 0, %s267
      %s271 = sphi 0, %s270
      %s287 = sphi 0, %s271
    $region4: #{run.5} parent=1 // loop_header_branch
      %24 = sbr.rel (%p22) target = $region8
    $region5: #{run.5} parent=1 // loop_body
      %s26 = ssub.s32 %s21, 1
      %s27 = ssub.s32 %s21, 2
      %s28 = sadd.s32 %s21, 1
      %s29 = ssub.s32 %s21, %s28
      %p30 = scmp.eq.s32.totalorder %s29, 0
      %s32 = sadd.s32 %s31, 1
      %s33 = scalar_select %p30, %s31, %s32
      %p36 = pneg %p30
      %p37 = scmp.eq.s32.totalorder %s21, 1
      %p38 = por %p36, %p37
      %p39 = scmp.ne.s32.totalorder %s31, %s34
      %p40 = scmp.eq.s32.totalorder %s21, 0
      %p41 = por %p39, %p40
      %p42 = scmp.ne.s32.totalorder %s31, %s34
      %p43 = scmp.eq.s32.totalorder %s26, 1
      %p44 = por %p42, %p43
      %p45 = scmp.ne.s32.totalorder %s34, %s35
      %p46 = scmp.eq.s32.totalorder %s26, 0
      %p47 = por %p45, %p46
      %p48 = scmp.ne.s32.totalorder %s34, %s35
      %p49 = scmp.eq.s32.totalorder %s27, 1
      %p50 = por %p48, %p49
      %p52 = scmp.ne.s32.totalorder %s35, %s51
      %p53 = scmp.eq.s32.totalorder %s27, 0
      %p54 = por %p52, %p53
      %s56 = sadd.s32 %s55, 1
      %p59 = scmp.eq.s32.totalorder %s21, 1
      %p60 = scmp.ne.s32.totalorder %s55, %s57
      %p61 = scmp.eq.s32.totalorder %s21, 0
      %p62 = por %p60, %p61
      %p63 = scmp.ne.s32.totalorder %s55, %s57
      %p64 = scmp.eq.s32.totalorder %s26, 1
      %p65 = por %p63, %p64
      %p66 = scmp.ne.s32.totalorder %s57, %s58
      %p67 = scmp.eq.s32.totalorder %s26, 0
      %p68 = por %p66, %p67
      %p69 = scmp.ne.s32.totalorder %s57, %s58
      %p70 = scmp.eq.s32.totalorder %s27, 1
      %p71 = por %p69, %p70
      %p73 = scmp.ne.s32.totalorder %s58, %s72
      %p74 = scmp.eq.s32.totalorder %s27, 0
      %p75 = por %p73, %p74
      %s77 = sadd.s32 %s76, 1
      %p80 = scmp.eq.s32.totalorder %s21, 1
      %p81 = scmp.ne.s32.totalorder %s76, %s78
      %p82 = scmp.eq.s32.totalorder %s21, 0
      %p83 = por %p81, %p82
      %p84 = scmp.ne.s32.totalorder %s76, %s78
      %p85 = scmp.eq.s32.totalorder %s26, 1
      %p86 = por %p84, %p85
      %p87 = scmp.ne.s32.totalorder %s78, %s79
      %p88 = scmp.eq.s32.totalorder %s26, 0
      %p89 = por %p87, %p88
      %p90 = scmp.ne.s32.totalorder %s78, %s79
      %p91 = scmp.eq.s32.totalorder %s27, 1
      %p92 = por %p90, %p91
      %p94 = scmp.ne.s32.totalorder %s79, %s93
      %p95 = scmp.eq.s32.totalorder %s27, 0
      %p96 = por %p94, %p95
      %s98 = sadd.s32 %s97, 1
      %p101 = scmp.eq.s32.totalorder %s21, 1
      %p102 = scmp.ne.s32.totalorder %s97, %s99
      %p103 = scmp.eq.s32.totalorder %s21, 0
      %p104 = por %p102, %p103
      %p105 = scmp.ne.s32.totalorder %s97, %s99
      %p106 = scmp.eq.s32.totalorder %s26, 1
      %p107 = por %p105, %p106
      %p108 = scmp.ne.s32.totalorder %s99, %s100
      %p109 = scmp.eq.s32.totalorder %s26, 0
      %p110 = por %p108, %p109
      %p111 = scmp.ne.s32.totalorder %s99, %s100
      %p112 = scmp.eq.s32.totalorder %s27, 1
      %p113 = por %p111, %p112
      %p115 = scmp.ne.s32.totalorder %s100, %s114
      %p116 = scmp.eq.s32.totalorder %s27, 0
      %p117 = por %p115, %p116
      %s119 = sadd.s32 %s118, 1
      %p122 = scmp.eq.s32.totalorder %s21, 1
      %p123 = scmp.ne.s32.totalorder %s118, %s120
      %p124 = scmp.eq.s32.totalorder %s21, 0
      %p125 = por %p123, %p124
      %p126 = scmp.ne.s32.totalorder %s118, %s120
      %p127 = scmp.eq.s32.totalorder %s26, 1
      %p128 = por %p126, %p127
      %p129 = scmp.ne.s32.totalorder %s120, %s121
      %p130 = scmp.eq.s32.totalorder %s26, 0
      %p131 = por %p129, %p130
      %p132 = scmp.ne.s32.totalorder %s120, %s121
      %p133 = scmp.eq.s32.totalorder %s27, 1
      %p134 = por %p132, %p133
      %p136 = scmp.ne.s32.totalorder %s121, %s135
      %p137 = scmp.eq.s32.totalorder %s27, 0
      %p138 = por %p136, %p137
      %s140 = sadd.s32 %s139, 1
      %p143 = scmp.eq.s32.totalorder %s21, 1
      %p144 = scmp.ne.s32.totalorder %s139, %s141
      %p145 = scmp.eq.s32.totalorder %s21, 0
      %p146 = por %p144, %p145
      %p147 = scmp.ne.s32.totalorder %s139, %s141
      %p148 = scmp.eq.s32.totalorder %s26, 1
      %p149 = por %p147, %p148
      %p150 = scmp.ne.s32.totalorder %s141, %s142
      %p151 = scmp.eq.s32.totalorder %s26, 0
      %p152 = por %p150, %p151
      %p153 = scmp.ne.s32.totalorder %s141, %s142
      %p154 = scmp.eq.s32.totalorder %s27, 1
      %p155 = por %p153, %p154
      %p157 = scmp.ne.s32.totalorder %s142, %s156
      %p158 = scmp.eq.s32.totalorder %s27, 0
      %p159 = por %p157, %p158
      %s161 = sadd.s32 %s160, 1
      %p164 = scmp.eq.s32.totalorder %s21, 1
      %p165 = scmp.ne.s32.totalorder %s160, %s162
      %p166 = scmp.eq.s32.totalorder %s21, 0
      %p167 = por %p165, %p166
      %p168 = scmp.ne.s32.totalorder %s160, %s162
      %p169 = scmp.eq.s32.totalorder %s26, 1
      %p170 = por %p168, %p169
      %p171 = scmp.ne.s32.totalorder %s162, %s163
      %p172 = scmp.eq.s32.totalorder %s26, 0
      %p173 = por %p171, %p172
      %p174 = scmp.ne.s32.totalorder %s162, %s163
      %p175 = scmp.eq.s32.totalorder %s27, 1
      %p176 = por %p174, %p175
      %p178 = scmp.ne.s32.totalorder %s163, %s177
      %p179 = scmp.eq.s32.totalorder %s27, 0
      %p180 = por %p178, %p179
      %s182 = sadd.s32 %s181, 1
      %p185 = scmp.eq.s32.totalorder %s21, 1
      %p186 = scmp.ne.s32.totalorder %s181, %s183
      %p187 = scmp.eq.s32.totalorder %s21, 0
      %p188 = por %p186, %p187
      %p189 = scmp.ne.s32.totalorder %s181, %s183
      %p190 = scmp.eq.s32.totalorder %s26, 1
      %p191 = por %p189, %p190
      %p192 = scmp.ne.s32.totalorder %s183, %s184
      %p193 = scmp.eq.s32.totalorder %s26, 0
      %p194 = por %p192, %p193
      %p195 = scmp.ne.s32.totalorder %s183, %s184
      %p196 = scmp.eq.s32.totalorder %s27, 1
      %p197 = por %p195, %p196
      %p199 = scmp.ne.s32.totalorder %s184, %s198
      %p200 = scmp.eq.s32.totalorder %s27, 0
      %p201 = por %p199, %p200
      %s203 = sadd.s32 %s202, 1
      %p206 = scmp.eq.s32.totalorder %s21, 1
      %p207 = scmp.ne.s32.totalorder %s202, %s204
      %p208 = scmp.eq.s32.totalorder %s21, 0
      %p209 = por %p207, %p208
      %p210 = scmp.ne.s32.totalorder %s202, %s204
      %p211 = scmp.eq.s32.totalorder %s26, 1
      %p212 = por %p210, %p211
      %p213 = scmp.ne.s32.totalorder %s204, %s205
      %p214 = scmp.eq.s32.totalorder %s26, 0
      %p215 = por %p213, %p214
      %p216 = scmp.ne.s32.totalorder %s204, %s205
      %p217 = scmp.eq.s32.totalorder %s27, 1
      %p218 = por %p216, %p217
      %p220 = scmp.ne.s32.totalorder %s205, %s219
      %p221 = scmp.eq.s32.totalorder %s27, 0
      %p222 = por %p220, %p221
      %s224 = sadd.s32 %s223, 1
      %p227 = scmp.eq.s32.totalorder %s21, 1
      %p228 = scmp.ne.s32.totalorder %s223, %s225
      %p229 = scmp.eq.s32.totalorder %s21, 0
      %p230 = por %p228, %p229
      %p231 = scmp.ne.s32.totalorder %s223, %s225
      %p232 = scmp.eq.s32.totalorder %s26, 1
      %p233 = por %p231, %p232
      %p234 = scmp.ne.s32.totalorder %s225, %s226
      %p235 = scmp.eq.s32.totalorder %s26, 0
      %p236 = por %p234, %p235
      %p237 = scmp.ne.s32.totalorder %s225, %s226
      %p238 = scmp.eq.s32.totalorder %s27, 1
      %p239 = por %p237, %p238
      %p241 = scmp.ne.s32.totalorder %s226, %s240
      %p242 = scmp.eq.s32.totalorder %s27, 0
      %p243 = por %p241, %p242
      %s245 = sadd.s32 %s244, 1
      %p248 = scmp.eq.s32.totalorder %s21, 1
      %p249 = scmp.ne.s32.totalorder %s244, %s246
      %p250 = scmp.eq.s32.totalorder %s21, 0
      %p251 = por %p249, %p250
      %p252 = scmp.ne.s32.totalorder %s244, %s246
      %p253 = scmp.eq.s32.totalorder %s26, 1
      %p254 = por %p252, %p253
      %p255 = scmp.ne.s32.totalorder %s246, %s247
      %p256 = scmp.eq.s32.totalorder %s26, 0
      %p257 = por %p255, %p256
      %p258 = scmp.ne.s32.totalorder %s246, %s247
      %p259 = scmp.eq.s32.totalorder %s27, 1
      %p260 = por %p258, %p259
      %p262 = scmp.ne.s32.totalorder %s247, %s261
      %p263 = scmp.eq.s32.totalorder %s27, 0
      %p264 = por %p262, %p263
      %s265 = ssub.s32 %s21, %s28
      %p266 = scmp.eq.s32.totalorder %s265, 0
      %s268 = sadd.s32 %s267, 1
      %s269 = scalar_select %p266, %s267, %s268
      %p272 = pneg %p266
      %p273 = scmp.eq.s32.totalorder %s21, 1
      %p274 = por %p272, %p273
      %p275 = scmp.ne.s32.totalorder %s267, %s270
      %p276 = scmp.eq.s32.totalorder %s21, 0
      %p277 = por %p275, %p276
      %p278 = scmp.ne.s32.totalorder %s267, %s270
      %p279 = scmp.eq.s32.totalorder %s26, 1
      %p280 = por %p278, %p279
      %p281 = scmp.ne.s32.totalorder %s270, %s271
      %p282 = scmp.eq.s32.totalorder %s26, 0
      %p283 = por %p281, %p282
      %p284 = scmp.ne.s32.totalorder %s270, %s271
      %p285 = scmp.eq.s32.totalorder %s27, 1
      %p286 = por %p284, %p285
      %p288 = scmp.ne.s32.totalorder %s271, %s287
      %p289 = scmp.eq.s32.totalorder %s27, 0
      %p290 = por %p288, %p289
      %p291 = scmp.le.s32.totalorder 1, %s21
      %p292 = scmp.lt.s32.totalorder %s21, 3
      %p293 = pnand %p291, %p292
      %p294 = pneg %p293
      // Predicated region
      $region9: #{run.5} parent=5 // pred_check
        _
      $region10: #{run.5} parent=5 // pred_check_branch
        %296 = sbr.rel (%p293) target = $region12
      $region11: #{run.5} parent=5 // pred_region
        %s297 = ssub.s32 %s21, 1
        // Predicated region
        $region13: #{run.5} parent=11 // pred_check
          %p298 = pneg %p68
        $region14: #{run.5} parent=11 // pred_check_branch
          %300 = sbr.rel (%p298) target = $region16
        $region15: #{run.5} parent=11 // pred_region
          %s302 = ssub.s32 256, 256
          %303 = vsyncadd [#allocation11], %s302
          %s304 = sshll.u32 [#allocation10], 4
          %s305 = int_to_ptr.vmem [resolvable:$true] %s304
          %310 = dma.hbm_to_vmem [thread:$0]  %s1, 256, %s305, [#allocation11], 64, 64, 4
        $region16: #{run.5} parent=11 // pred_fallthru
          _
        // Predicated region
        $region17: #{run.5} parent=11 // pred_check
          %p311 = pneg %p89
        $region18: #{run.5} parent=11 // pred_check_branch
          %313 = sbr.rel (%p311) target = $region20
        $region19: #{run.5} parent=11 // pred_region
          %s315 = ssub.s32 256, 256
          %316 = vsyncadd [#allocation13], %s315
          %s317 = sshll.u32 [#allocation12], 4
          %s318 = int_to_ptr.vmem [resolvable:$true] %s317
          %323 = dma.hbm_to_vmem [thread:$0]  %s2, 256, %s318, [#allocation13], 64, 64, 4
        $region20: #{run.5} parent=11 // pred_fallthru
          _
        // Predicated region
        $region21: #{run.5} parent=11 // pred_check
          %p324 = pneg %p110
        $region22: #{run.5} parent=11 // pred_check_branch
          %326 = sbr.rel (%p324) target = $region24
        $region23: #{run.5} parent=11 // pred_region
          %s328 = ssub.s32 64, 64
          %329 = vsyncadd [#allocation13], %s328
          %s331 = sshll.u32 [#allocation14], 4
          %s332 = int_to_ptr.vmem [resolvable:$true] %s331
          %334 = dma.hbm_to_vmem [thread:$0]  %s3, 64, %s332, [#allocation13]
        $region24: #{run.5} parent=11 // pred_fallthru
          _
        // Predicated region
        $region25: #{run.5} parent=11 // pred_check
          %p335 = pneg %p131
        $region26: #{run.5} parent=11 // pred_check_branch
          %337 = sbr.rel (%p335) target = $region28
        $region27: #{run.5} parent=11 // pred_region
          %s339 = ssub.s32 16, 16
          %340 = vsyncadd [#allocation16], %s339
          %s342 = sshll.u32 [#allocation15], 4
          %s343 = int_to_ptr.vmem [resolvable:$true] %s342
          %345 = dma.hbm_to_vmem [thread:$0]  %s4, 16, %s343, [#allocation16]
        $region28: #{run.5} parent=11 // pred_fallthru
          _
        // Predicated region
        $region29: #{run.5} parent=11 // pred_check
          %p346 = pneg %p152
        $region30: #{run.5} parent=11 // pred_check_branch
          %348 = sbr.rel (%p346) target = $region32
        $region31: #{run.5} parent=11 // pred_region
          _
        $region32: #{run.5} parent=11 // pred_fallthru
          _
        // Predicated region
        $region33: #{run.5} parent=11 // pred_check
          %p349 = pneg %p173
        $region34: #{run.5} parent=11 // pred_check_branch
          %351 = sbr.rel (%p349) target = $region36
        $region35: #{run.5} parent=11 // pred_region
          %s353 = ssub.s32 32, 32
          %354 = vsyncadd [#allocation16], %s353
          %s356 = sshll.u32 [#allocation17], 4
          %s357 = int_to_ptr.vmem [resolvable:$true] %s356
          %359 = dma.hbm_to_vmem [thread:$0]  %s6, 32, %s357, [#allocation16]
        $region36: #{run.5} parent=11 // pred_fallthru
          _
        // Predicated region
        $region37: #{run.5} parent=11 // pred_check
          %p360 = pneg %p194
        $region38: #{run.5} parent=11 // pred_check_branch
          %362 = sbr.rel (%p360) target = $region40
        $region39: #{run.5} parent=11 // pred_region
          %s364 = ssub.s32 16, 16
          %365 = vsyncadd [#allocation19], %s364
          %s367 = sshll.u32 [#allocation18], 4
          %s368 = int_to_ptr.vmem [resolvable:$true] %s367
          %370 = dma.hbm_to_vmem [thread:$0]  %s7, 16, %s368, [#allocation19]
        $region40: #{run.5} parent=11 // pred_fallthru
          _
        // Predicated region
        $region41: #{run.5} parent=11 // pred_check
          %p371 = pneg %p215
        $region42: #{run.5} parent=11 // pred_check_branch
          %373 = sbr.rel (%p371) target = $region44
        $region43: #{run.5} parent=11 // pred_region
          _
        $region44: #{run.5} parent=11 // pred_fallthru
          _
        // Predicated region
        $region45: #{run.5} parent=11 // pred_check
          %p374 = pneg %p236
        $region46: #{run.5} parent=11 // pred_check_branch
          %376 = sbr.rel (%p374) target = $region48
        $region47: #{run.5} parent=11 // pred_region
          _
        $region48: #{run.5} parent=11 // pred_fallthru
          _
        // Predicated region
        $region49: #{run.5} parent=11 // pred_check
          %p377 = pneg %p257
        $region50: #{run.5} parent=11 // pred_check_branch
          %379 = sbr.rel (%p377) target = $region52
        $region51: #{run.5} parent=11 // pred_region
          _
        $region52: #{run.5} parent=11 // pred_fallthru
          _
      $region12: #{run.5} parent=5 // pred_fallthru
        _
      %p380 = scmp.lt.s32.totalorder %s21, 2
      // Predicated region
      $region53: #{run.5} parent=5 // pred_check
        %p381 = pneg %p380
      $region54: #{run.5} parent=5 // pred_check_branch
        %383 = sbr.rel (%p381) target = $region56
      $region55: #{run.5} parent=5 // pred_region
        // Predicated region
        $region57: #{run.5} parent=55 // pred_check
          %p384 = pneg %p41
        $region58: #{run.5} parent=55 // pred_check_branch
          %386 = sbr.rel (%p384) target = $region60
        $region59: #{run.5} parent=55 // pred_region
          %p387 = scmp.lt.s32.totalorder %s21, 1
          %s388 = scalar_select %p387, %s21, 1
          %s389 = smul.addr %s388, 8
          %s390 = scalar_lea.vmem %s0, %s389
        $region60: #{run.5} parent=55 // pred_fallthru
          _
      $region56: #{run.5} parent=5 // pred_fallthru
        _
      %p391 = scmp.le.s32.totalorder 1, %s21
      %p392 = scmp.lt.s32.totalorder %s21, 3
      %p393 = pnand %p391, %p392
      %p394 = pneg %p393
      // Predicated region
      $region61: #{run.5} parent=5 // pred_check
        _
      $region62: #{run.5} parent=5 // pred_check_branch
        %396 = sbr.rel (%p393) target = $region64
      $region63: #{run.5} parent=5 // pred_region
        %s397 = ssub.s32 %s21, 1
        // Predicated region
        $region65: #{run.5} parent=63 // pred_check
          %p398 = pneg %p68
        $region66: #{run.5} parent=63 // pred_check_branch
          %400 = sbr.rel (%p398) target = $region68
        $region67: #{run.5} parent=63 // pred_region
          %401 = dma.done [#allocation11], 256
        $region68: #{run.5} parent=63 // pred_fallthru
          _
        // Predicated region
        $region69: #{run.5} parent=63 // pred_check
          %p402 = pneg %p89
        $region70: #{run.5} parent=63 // pred_check_branch
          %404 = sbr.rel (%p402) target = $region72
        $region71: #{run.5} parent=63 // pred_region
          %405 = dma.done [#allocation13], 256
        $region72: #{run.5} parent=63 // pred_fallthru
          _
        // Predicated region
        $region73: #{run.5} parent=63 // pred_check
          %p406 = pneg %p110
        $region74: #{run.5} parent=63 // pred_check_branch
          %408 = sbr.rel (%p406) target = $region76
        $region75: #{run.5} parent=63 // pred_region
          %409 = dma.done [#allocation13], 64
        $region76: #{run.5} parent=63 // pred_fallthru
          _
        // Predicated region
        $region77: #{run.5} parent=63 // pred_check
          %p410 = pneg %p131
        $region78: #{run.5} parent=63 // pred_check_branch
          %412 = sbr.rel (%p410) target = $region80
        $region79: #{run.5} parent=63 // pred_region
          %413 = dma.done [#allocation16], 16
        $region80: #{run.5} parent=63 // pred_fallthru
          _
        // Predicated region
        $region81: #{run.5} parent=63 // pred_check
          %p414 = pneg %p173
        $region82: #{run.5} parent=63 // pred_check_branch
          %416 = sbr.rel (%p414) target = $region84
        $region83: #{run.5} parent=63 // pred_region
          %417 = dma.done [#allocation16], 32
        $region84: #{run.5} parent=63 // pred_fallthru
          _
        // Predicated region
        $region85: #{run.5} parent=63 // pred_check
          %p418 = pneg %p194
        $region86: #{run.5} parent=63 // pred_check_branch
          %420 = sbr.rel (%p418) target = $region88
        $region87: #{run.5} parent=63 // pred_region
          %421 = dma.done [#allocation19], 16
        $region88: #{run.5} parent=63 // pred_fallthru
          _
        %p422 = scmp.lt.s32.totalorder %s26, 1
        %s423 = scalar_select %p422, %s26, 1
        %s424 = smul.addr %s423, 8
        %s425 = scalar_lea.vmem %s0, %s424
        %p426 = pneg %p47
        %p427 = pneg %p44
        %p428 = pneg %p68
        %p429 = pneg %p65
        %p430 = pneg %p89
        %p431 = pneg %p86
        %p432 = pneg %p110
        %p433 = pneg %p107
        %p434 = pneg %p131
        %p435 = pneg %p128
        %p436 = pneg %p152
        %p437 = pneg %p149
        %p438 = pneg %p173
        %p439 = pneg %p170
        %p440 = pneg %p194
        %p441 = pneg %p191
        %p442 = pneg %p215
        %p443 = pneg %p212
        %p444 = pneg %p236
        %p445 = pneg %p233
        %p446 = pneg %p257
        %p447 = pneg %p254
        %p448 = pneg %p283
        %p449 = pneg %p280
        %p450 = scmp.lt.s32.totalorder %s26, 1
        %s451 = scalar_select %p450, %s26, 1
        %s452 = smul.addr %s451, 8
        %s453 = scalar_lea.vmem %s11, %s452
        %p454 = scmp.lt.s32.totalorder %s26, 1
        %s455 = scalar_select %p454, %s26, 1
        %s456 = smul.addr %s455, 8
        %s457 = scalar_lea.vmem %s0, %s456
        %p458 = scmp.lt.s32.totalorder %s26, 1
        %s459 = scalar_select %p458, %s26, 1
        %s460 = smul.addr %s459, 8
        %s461 = scalar_lea.vmem %s11, %s460
        %v463 = vld [vmem:[%s457] sm:$0xff]
        %v464 = vld [vmem:[#allocation10] sm:$0xf]
        %v465 = vld [vmem:[#allocation10 + $0x4] sm:$0xf]
        %v466 = vld [vmem:[#allocation10 + $0x8] sm:$0xf]
        %v467 = vld [vmem:[#allocation10 + $0xc] sm:$0xf]
        %v468 = vpack.c.bf16 %v463, %v463
        %v473 = vunpack.c.l.b16 %v464
        %v474 = vunpack.c.l.b16 %v465
        %v475 = vunpack.c.l.b16 %v466
        %v476 = vunpack.c.l.b16 %v467
        %v477 = vpack.c.b16 %v474, %v473
        %v478 = vpack.c.b16 %v476, %v475
        %vm481 = vcmask 261120
        %v483 = vsel %vm481, %v468, 0
        %485 = vmatprep.subr.bf16.mxu0 0
        %486 = vmatpush1.bf16.msra.mxu0 %v477
        %487 = vmatprep.subr.bf16.mxu0 0
        %488 = vmatpush1.bf16.msra.mxu0 %v478
        %489 = vmatprep.subr.bf16.mxu0 0
        %490 = vmatpush1.bf16.msra.mxu0 0
        %491 = vmatprep.subr.bf16.mxu0 0
        %492 = vmatpush1.bf16.msra.mxu0 0
        %493 = vmatprep.subr.bf16.mxu0 0
        %494 = vmatpush1.bf16.msra.mxu0 0
        %495 = vmatprep.subr.bf16.mxu0 0
        %496 = vmatpush1.bf16.msra.mxu0 0
        %497 = vmatprep.subr.bf16.mxu0 0
        %498 = vmatpush1.bf16.msra.mxu0 0
        %499 = vmatprep.subr.bf16.mxu0 0
        %500 = vmatpush1.bf16.msra.mxu0 0
        %501 = vmatprep.subr.bf16.mxu0 0
        %502 = vmatpush1.bf16.msra.mxu0 0
        %503 = vmatprep.subr.bf16.mxu0 0
        %504 = vmatpush1.bf16.msra.mxu0 0
        %505 = vmatprep.subr.bf16.mxu0 0
        %506 = vmatpush1.bf16.msra.mxu0 0
        %507 = vmatprep.subr.bf16.mxu0 0
        %508 = vmatpush1.bf16.msra.mxu0 0
        %509 = vmatprep.subr.bf16.mxu0 0
        %510 = vmatpush1.bf16.msra.mxu0 0
        %511 = vmatprep.subr.bf16.mxu0 0
        %512 = vmatpush1.bf16.msra.mxu0 0
        %513 = vmatprep.subr.bf16.mxu0 0
        %514 = vmatpush1.bf16.msra.mxu0 0
        %515 = vmatprep.subr.bf16.mxu0 0
        %516 = vmatpush1.bf16.msra.mxu0 0
        %517 = vmatprep.mubr.bf16.mxu0 0
        %518 = vmatmul.mubr.bf16.gmra.mrb[0].mxu0 %v483
        %v519 = vpop.f32.mrb[0].mxu0
        %v520 = vadd.f32 0.0, %v519
        %v521 = vpop.f32.mrb[0].mxu0
        %v522 = vpop.f32.mrb[0].mxu0
        %v523 = vpop.f32.mrb[0].mxu0
        %524 = vdwg.mxu0
        %vm525 = vcmask 518144
        %526 = vst.msk [vmem:[#allocation2] sm:$0x7] %vm525, 0.0
        %vm527 = vcmask 523264
        %528 = vst.msk [vmem:[#allocation2 + $0x3] sm:$0xff] %vm527, %v520
        %v529 = vld [vmem:[#allocation14] sm:$0xf]
        %v530 = vld [vmem:[#allocation2] sm:$0xff]
        %v531 = vlaneseq
        %v532 = vshrl.u32 %v531, 7
        %v533 = vsub.s32 0, %v532
        %v534 = vrot.slane %v529, %v533
        %v535 = vmul.f32 %v530, %v534
        %v536 = vadd.f32 %v535, 0.0
        %v537 = vld [vmem:[#allocation2 + $0x1] sm:$0xff]
        %v538 = vlaneseq
        %v539 = vshrl.u32 %v538, 7
        %v540 = vsub.s32 1, %v539
        %v541 = vrot.slane %v529, %v540
        %v542 = vmul.f32 %v537, %v541
        %v543 = vadd.f32 %v536, %v542
        %v544 = vld [vmem:[#allocation2 + $0x2] sm:$0xff]
        %v545 = vlaneseq
        %v546 = vshrl.u32 %v545, 7
        %v547 = vsub.s32 2, %v546
        %v548 = vrot.slane %v529, %v547
        %v549 = vmul.f32 %v544, %v548
        %v550 = vadd.f32 %v543, %v549
        %v551 = vld [vmem:[#allocation2 + $0x3] sm:$0xff]
        %v552 = vlaneseq
        %v553 = vshrl.u32 %v552, 7
        %v554 = vsub.s32 3, %v553
        %v555 = vrot.slane %v529, %v554
        %v556 = vmul.f32 %v551, %v555
        %v557 = vadd.f32 %v550, %v556
        %v558 = vld [vmem:[#allocation15] sm:$0x1]
        %v560 = vlaneseq
        %v561 = vshrl.u32 %v560, 7
        %v562 = vsub.s32 0, %v561
        %v563 = vrot.slane %v558, %v562
        %v565 = vadd.f32 %v557, %v563
        %v566 = vxor.u32 %v565, 2147483648
        %v567 = vmul.f32 %v566, 1.442695
        %v568 = vpow.pop %v567
        %v569 = vadd.f32 %v568, 1.0
        %v570 = vrcp.pop %v569
        %v571 = vmul.f32 1.0, %v570
        %v572 = vmul.f32 %v565, %v571
        %573 = vst.msk [vmem:[#allocation3] sm:$0xff] %vm527, %v572
        %v574 = vld [vmem:[%s5] sm:$0xff]
        %v575 = vld [vmem:[%s5 + $0x8] sm:$0xff]
        %v576 = vld [vmem:[%s5 + $0x10] sm:$0xff]
        %v577 = vld [vmem:[%s5 + $0x18] sm:$0xff]
        %v578 = vld [vmem:[%s5 + $0x20] sm:$0xff]
        %v579 = vld [vmem:[%s5 + $0x28] sm:$0xff]
        %v580 = vld [vmem:[%s5 + $0x30] sm:$0xff]
        %v581 = vld [vmem:[%s5 + $0x38] sm:$0xff]
        %v583 = vsel %vm527, %v572, 0
        %585 = vmatprep.subr.mxu0 0.0
        %586 = vmatpush1.msra.mxu0 %v574
        %587 = vmatprep.subr.mxu0 0.0
        %588 = vmatpush1.msra.mxu0 %v575
        %589 = vmatprep.subr.mxu0 0.0
        %590 = vmatpush1.msra.mxu0 %v576
        %591 = vmatprep.subr.mxu0 0.0
        %592 = vmatpush1.msra.mxu0 %v577
        %593 = vmatprep.subr.mxu0 0.0
        %594 = vmatpush1.msra.mxu0 %v578
        %595 = vmatprep.subr.mxu0 0.0
        %596 = vmatpush1.msra.mxu0 %v579
        %597 = vmatprep.subr.mxu0 0.0
        %598 = vmatpush1.msra.mxu0 %v580
        %599 = vmatprep.subr.mxu0 0.0
        %600 = vmatpush1.msra.mxu0 %v581
        %601 = vmatprep.subr.mxu0 0.0
        %602 = vmatpush1.msra.mxu0 0.0
        %603 = vmatprep.subr.mxu0 0.0
        %604 = vmatpush1.msra.mxu0 0.0
        %605 = vmatprep.subr.mxu0 0.0
        %606 = vmatpush1.msra.mxu0 0.0
        %607 = vmatprep.subr.mxu0 0.0
        %608 = vmatpush1.msra.mxu0 0.0
        %609 = vmatprep.subr.mxu0 0.0
        %610 = vmatpush1.msra.mxu0 0.0
        %611 = vmatprep.subr.mxu0 0.0
        %612 = vmatpush1.msra.mxu0 0.0
        %613 = vmatprep.subr.mxu0 0.0
        %614 = vmatpush1.msra.mxu0 0.0
        %615 = vmatprep.subr.mxu0 0.0
        %616 = vmatpush1.msra.mxu0 0.0
        %617 = vmatprep.subr.mxu0 0.0
        %618 = vmatpush1.msra.mxu0 0.0
        %619 = vmatprep.subr.mxu0 0.0
        %620 = vmatpush1.msra.mxu0 0.0
        %621 = vmatprep.subr.mxu0 0.0
        %622 = vmatpush1.msra.mxu0 0.0
        %623 = vmatprep.subr.mxu0 0.0
        %624 = vmatpush1.msra.mxu0 0.0
        %625 = vmatprep.subr.mxu0 0.0
        %626 = vmatpush1.msra.mxu0 0.0
        %627 = vmatprep.subr.mxu0 0.0
        %628 = vmatpush1.msra.mxu0 0.0
        %629 = vmatprep.subr.mxu0 0.0
        %630 = vmatpush1.msra.mxu0 0.0
        %631 = vmatprep.subr.mxu0 0.0
        %632 = vmatpush1.msra.mxu0 0.0
        %633 = vmatprep.subr.mxu0 0.0
        %634 = vmatpush1.msra.mxu0 0.0
        %635 = vmatprep.subr.mxu0 0.0
        %636 = vmatpush1.msra.mxu0 0.0
        %637 = vmatprep.subr.mxu0 0.0
        %638 = vmatpush1.msra.mxu0 0.0
        %639 = vmatprep.subr.mxu0 0.0
        %640 = vmatpush1.msra.mxu0 0.0
        %641 = vmatprep.subr.mxu0 0.0
        %642 = vmatpush1.msra.mxu0 0.0
        %643 = vmatprep.subr.mxu0 0.0
        %644 = vmatpush1.msra.mxu0 0.0
        %645 = vmatprep.subr.mxu0 0.0
        %646 = vmatpush1.msra.mxu0 0.0
        %647 = vmatprep.subr.mxu0 0.0
        %648 = vmatpush1.msra.mxu0 0.0
        %649 = vmatprep.mubr.f32.mxu0 0.0
        %650 = vmatmul.mubr.f32.gmra.mrb[0].mxu0 %v583
        %v651 = vpop.f32.mrb[0].mxu0
        %v652 = vadd.f32 0.0, %v651
        %v653 = vpop.f32.mrb[0].mxu0
        %654 = vdwg.mxu0
        %v655 = vld [vmem:[#allocation17] sm:$0x3]
        %v656 = vld [vmem:[#allocation18] sm:$0x1]
        %v658 = vlaneseq
        %v659 = vshrl.u32 %v658, 7
        %v660 = vsub.s32 0, %v659
        %v661 = vrot.slane %v656, %v660
        %vm663 = vcmask 15360
        %v665 = vsel %vm663, %v652, 0
        %vm667 = vcmask 1041408
        %v669 = vsel %vm667, %v655, 0
        %671 = vmatprep.subr.mxu0 0.0
        %672 = vmatpush1.msra.mxu0 %v669
        %673 = vmatprep.subr.mxu0 0.0
        %674 = vmatpush1.msra.mxu0 0.0
        %675 = vmatprep.subr.mxu0 0.0
        %676 = vmatpush1.msra.mxu0 0.0
        %677 = vmatprep.subr.mxu0 0.0
        %678 = vmatpush1.msra.mxu0 0.0
        %679 = vmatprep.subr.mxu0 0.0
        %680 = vmatpush1.msra.mxu0 0.0
        %681 = vmatprep.subr.mxu0 0.0
        %682 = vmatpush1.msra.mxu0 0.0
        %683 = vmatprep.subr.mxu0 0.0
        %684 = vmatpush1.msra.mxu0 0.0
        %685 = vmatprep.subr.mxu0 0.0
        %686 = vmatpush1.msra.mxu0 0.0
        %687 = vmatprep.subr.mxu0 0.0
        %688 = vmatpush1.msra.mxu0 0.0
        %689 = vmatprep.subr.mxu0 0.0
        %690 = vmatpush1.msra.mxu0 0.0
        %691 = vmatprep.subr.mxu0 0.0
        %692 = vmatpush1.msra.mxu0 0.0
        %693 = vmatprep.subr.mxu0 0.0
        %694 = vmatpush1.msra.mxu0 0.0
        %695 = vmatprep.subr.mxu0 0.0
        %696 = vmatpush1.msra.mxu0 0.0
        %697 = vmatprep.subr.mxu0 0.0
        %698 = vmatpush1.msra.mxu0 0.0
        %699 = vmatprep.subr.mxu0 0.0
        %700 = vmatpush1.msra.mxu0 0.0
        %701 = vmatprep.subr.mxu0 0.0
        %702 = vmatpush1.msra.mxu0 0.0
        %703 = vmatprep.subr.mxu0 0.0
        %704 = vmatpush1.msra.mxu0 0.0
        %705 = vmatprep.subr.mxu0 0.0
        %706 = vmatpush1.msra.mxu0 0.0
        %707 = vmatprep.subr.mxu0 0.0
        %708 = vmatpush1.msra.mxu0 0.0
        %709 = vmatprep.subr.mxu0 0.0
        %710 = vmatpush1.msra.mxu0 0.0
        %711 = vmatprep.subr.mxu0 0.0
        %712 = vmatpush1.msra.mxu0 0.0
        %713 = vmatprep.subr.mxu0 0.0
        %714 = vmatpush1.msra.mxu0 0.0
        %715 = vmatprep.subr.mxu0 0.0
        %716 = vmatpush1.msra.mxu0 0.0
        %717 = vmatprep.subr.mxu0 0.0
        %718 = vmatpush1.msra.mxu0 0.0
        %719 = vmatprep.subr.mxu0 0.0
        %720 = vmatpush1.msra.mxu0 0.0
        %721 = vmatprep.subr.mxu0 0.0
        %722 = vmatpush1.msra.mxu0 0.0
        %723 = vmatprep.subr.mxu0 0.0
        %724 = vmatpush1.msra.mxu0 0.0
        %725 = vmatprep.subr.mxu0 0.0
        %726 = vmatpush1.msra.mxu0 0.0
        %727 = vmatprep.subr.mxu0 0.0
        %728 = vmatpush1.msra.mxu0 0.0
        %729 = vmatprep.subr.mxu0 0.0
        %730 = vmatpush1.msra.mxu0 0.0
        %731 = vmatprep.subr.mxu0 0.0
        %732 = vmatpush1.msra.mxu0 0.0
        %733 = vmatprep.subr.mxu0 0.0
        %734 = vmatpush1.msra.mxu0 0.0
        %735 = vmatprep.mubr.f32.mxu0 0.0
        %736 = vmatmul.mubr.f32.gmra.mrb[0].mxu0 %v665
        %v737 = vpop.f32.mrb[0].mxu0
        %v738 = vadd.f32 %v661, %v737
        %v739 = vpop.f32.mrb[0].mxu0
        %740 = vdwg.mxu0
        %v741 = vmax.f32 %v738, 0.0
        %v742 = vand.u32 2147483647, %v738
        %v743 = vsub.f32 0.0, %v742
        %v744 = vmul.f32 %v743, 1.442695
        %v745 = vpow.pop %v744
        %v746 = vadd.f32 %v745, 1.0
        %v747 = vlog2.pop %v746
        %v748 = vmul.f32 %v747, 0.6931472
        %v749 = vadd.f32 %v741, %v748
        %750 = vst.msk [vmem:[#allocation4] sm:$0xff] %vm527, %v749
        %751 = vrot.lane.b32.xlu0 %v652, 126
        %v752 = vpop.permute.xlu0 %751
        %vm754 = vcmask 130048
        %755 = vst.msk [vmem:[#allocation5] sm:$0xff] %vm754, %v752
        %756 = vrot.lane.b32.xlu0 %v652, 110
        %v757 = vpop.permute.xlu0 %756
        %759 = vst.msk [vmem:[#allocation6] sm:$0xff] %vm754, %v757
        %v760 = vld [vmem:[%s8] sm:$0xff]
        %v761 = vld [vmem:[%s8 + $0x8] sm:$0xff]
        %v762 = vld [vmem:[%s9] sm:$0x1]
        %v763 = vld [vmem:[#allocation4] sm:$0xff]
        %v764 = vld [vmem:[#allocation3] sm:$0xff]
        %v765 = vld [vmem:[#allocation5] sm:$0xff]
        %v766 = vmul.f32 %v763, %v764
        %v767 = vlaneseq
        %v768 = vshrl.u32 %v767, 7
        %v769 = vsub.s32 0, %v768
        %v770 = vrot.slane %v760, %v769
        %v771 = vmul.f32 %v763, %v770
        %v772 = vmul.f32 %v771, 1.442695
        %v773 = vpow.pop %v772
        %774 = vst [vmem:[#allocation8] ss:$16 sm:$0x3] %v773
        %775 = vst [vmem:[#allocation8] ss:$16 sm:$0xc] %v773
        %776 = vst [vmem:[#allocation8] ss:$16 sm:$0x30] %v773
        %777 = vst [vmem:[#allocation8] ss:$16 sm:$0xc0] %v773
        %779 = vset.pattern.permute.xlu0 0
        %780 = vperm.xlu0 %779, %v765
        %v781 = vpop.permute.xlu0 %780
        %v783 = vmul.f32 %v781, %v766
        %784 = vst [vmem:[#allocation9] ss:$16 sm:$0x3] %v783
        %785 = vst [vmem:[#allocation9] ss:$16 sm:$0xc] %v783
        %786 = vst [vmem:[#allocation9] ss:$16 sm:$0x30] %v783
        %787 = vst [vmem:[#allocation9] ss:$16 sm:$0xc0] %v783
        %v788 = vlaneseq
        %v789 = vshrl.u32 %v788, 7
        %v790 = vsub.s32 1, %v789
        %v791 = vrot.slane %v760, %v790
        %v792 = vmul.f32 %v763, %v791
        %v793 = vmul.f32 %v792, 1.442695
        %v794 = vpow.pop %v793
        %s795 = scalar_lea.vmem [#allocation8], 1
        %796 = vst [vmem:[%s795] ss:$16 sm:$0x3] %v794
        %797 = vst [vmem:[%s795] ss:$16 sm:$0xc] %v794
        %798 = vst [vmem:[%s795] ss:$16 sm:$0x30] %v794
        %799 = vst [vmem:[%s795] ss:$16 sm:$0xc0] %v794
        %800 = vset.pattern.permute.xlu0 1
        %801 = vperm.xlu0 %800, %v765
        %v802 = vpop.permute.xlu0 %801
        %v804 = vmul.f32 %v802, %v766
        %s805 = scalar_lea.vmem [#allocation9], 1
        %806 = vst [vmem:[%s805] ss:$16 sm:$0x3] %v804
        %807 = vst [vmem:[%s805] ss:$16 sm:$0xc] %v804
        %808 = vst [vmem:[%s805] ss:$16 sm:$0x30] %v804
        %809 = vst [vmem:[%s805] ss:$16 sm:$0xc0] %v804
        %v810 = vlaneseq
        %v811 = vshrl.u32 %v810, 7
        %v812 = vsub.s32 2, %v811
        %v813 = vrot.slane %v760, %v812
        %v814 = vmul.f32 %v763, %v813
        %v815 = vmul.f32 %v814, 1.442695
        %v816 = vpow.pop %v815
        %s817 = scalar_lea.vmem [#allocation8], 2
        %818 = vst [vmem:[%s817] ss:$16 sm:$0x3] %v816
        %819 = vst [vmem:[%s817] ss:$16 sm:$0xc] %v816
        %820 = vst [vmem:[%s817] ss:$16 sm:$0x30] %v816
        %821 = vst [vmem:[%s817] ss:$16 sm:$0xc0] %v816
        %822 = vset.pattern.permute.xlu0 2
        %823 = vperm.xlu0 %822, %v765
        %v824 = vpop.permute.xlu0 %823
        %v826 = vmul.f32 %v824, %v766
        %s827 = scalar_lea.vmem [#allocation9], 2
        %828 = vst [vmem:[%s827] ss:$16 sm:$0x3] %v826
        %829 = vst [vmem:[%s827] ss:$16 sm:$0xc] %v826
        %830 = vst [vmem:[%s827] ss:$16 sm:$0x30] %v826
        %831 = vst [vmem:[%s827] ss:$16 sm:$0xc0] %v826
        %v832 = vlaneseq
        %v833 = vshrl.u32 %v832, 7
        %v834 = vsub.s32 3, %v833
        %v835 = vrot.slane %v760, %v834
        %v836 = vmul.f32 %v763, %v835
        %v837 = vmul.f32 %v836, 1.442695
        %v838 = vpow.pop %v837
        %s839 = scalar_lea.vmem [#allocation8], 3
        %840 = vst [vmem:[%s839] ss:$16 sm:$0x3] %v838
        %841 = vst [vmem:[%s839] ss:$16 sm:$0xc] %v838
        %842 = vst [vmem:[%s839] ss:$16 sm:$0x30] %v838
        %843 = vst [vmem:[%s839] ss:$16 sm:$0xc0] %v838
        %844 = vset.pattern.permute.xlu0 3
        %845 = vperm.xlu0 %844, %v765
        %v846 = vpop.permute.xlu0 %845
        %v848 = vmul.f32 %v846, %v766
        %s849 = scalar_lea.vmem [#allocation9], 3
        %850 = vst [vmem:[%s849] ss:$16 sm:$0x3] %v848
        %851 = vst [vmem:[%s849] ss:$16 sm:$0xc] %v848
        %852 = vst [vmem:[%s849] ss:$16 sm:$0x30] %v848
        %853 = vst [vmem:[%s849] ss:$16 sm:$0xc0] %v848
        %v854 = vlaneseq
        %v855 = vshrl.u32 %v854, 7
        %v856 = vsub.s32 4, %v855
        %v857 = vrot.slane %v760, %v856
        %v858 = vmul.f32 %v763, %v857
        %v859 = vmul.f32 %v858, 1.442695
        %v860 = vpow.pop %v859
        %s861 = scalar_lea.vmem [#allocation8], 4
        %862 = vst [vmem:[%s861] ss:$16 sm:$0x3] %v860
        %863 = vst [vmem:[%s861] ss:$16 sm:$0xc] %v860
        %864 = vst [vmem:[%s861] ss:$16 sm:$0x30] %v860
        %865 = vst [vmem:[%s861] ss:$16 sm:$0xc0] %v860
        %866 = vset.pattern.permute.xlu0 4
        %867 = vperm.xlu0 %866, %v765
        %v868 = vpop.permute.xlu0 %867
        %v870 = vmul.f32 %v868, %v766
        %s871 = scalar_lea.vmem [#allocation9], 4
        %872 = vst [vmem:[%s871] ss:$16 sm:$0x3] %v870
        %873 = vst [vmem:[%s871] ss:$16 sm:$0xc] %v870
        %874 = vst [vmem:[%s871] ss:$16 sm:$0x30] %v870
        %875 = vst [vmem:[%s871] ss:$16 sm:$0xc0] %v870
        %v876 = vlaneseq
        %v877 = vshrl.u32 %v876, 7
        %v878 = vsub.s32 5, %v877
        %v879 = vrot.slane %v760, %v878
        %v880 = vmul.f32 %v763, %v879
        %v881 = vmul.f32 %v880, 1.442695
        %v882 = vpow.pop %v881
        %s883 = scalar_lea.vmem [#allocation8], 5
        %884 = vst [vmem:[%s883] ss:$16 sm:$0x3] %v882
        %885 = vst [vmem:[%s883] ss:$16 sm:$0xc] %v882
        %886 = vst [vmem:[%s883] ss:$16 sm:$0x30] %v882
        %887 = vst [vmem:[%s883] ss:$16 sm:$0xc0] %v882
        %888 = vset.pattern.permute.xlu0 5
        %889 = vperm.xlu0 %888, %v765
        %v890 = vpop.permute.xlu0 %889
        %v892 = vmul.f32 %v890, %v766
        %s893 = scalar_lea.vmem [#allocation9], 5
        %894 = vst [vmem:[%s893] ss:$16 sm:$0x3] %v892
        %895 = vst [vmem:[%s893] ss:$16 sm:$0xc] %v892
        %896 = vst [vmem:[%s893] ss:$16 sm:$0x30] %v892
        %897 = vst [vmem:[%s893] ss:$16 sm:$0xc0] %v892
        %v898 = vlaneseq
        %v899 = vshrl.u32 %v898, 7
        %v900 = vsub.s32 6, %v899
        %v901 = vrot.slane %v760, %v900
        %v902 = vmul.f32 %v763, %v901
        %v903 = vmul.f32 %v902, 1.442695
        %v904 = vpow.pop %v903
        %s905 = scalar_lea.vmem [#allocation8], 6
        %906 = vst [vmem:[%s905] ss:$16 sm:$0x3] %v904
        %907 = vst [vmem:[%s905] ss:$16 sm:$0xc] %v904
        %908 = vst [vmem:[%s905] ss:$16 sm:$0x30] %v904
        %909 = vst [vmem:[%s905] ss:$16 sm:$0xc0] %v904
        %910 = vset.pattern.permute.xlu0 6
        %911 = vperm.xlu0 %910, %v765
        %v912 = vpop.permute.xlu0 %911
        %v914 = vmul.f32 %v912, %v766
        %s915 = scalar_lea.vmem [#allocation9], 6
        %916 = vst [vmem:[%s915] ss:$16 sm:$0x3] %v914
        %917 = vst [vmem:[%s915] ss:$16 sm:$0xc] %v914
        %918 = vst [vmem:[%s915] ss:$16 sm:$0x30] %v914
        %919 = vst [vmem:[%s915] ss:$16 sm:$0xc0] %v914
        %v920 = vlaneseq
        %v921 = vshrl.u32 %v920, 7
        %v922 = vsub.s32 7, %v921
        %v923 = vrot.slane %v760, %v922
        %v924 = vmul.f32 %v763, %v923
        %v925 = vmul.f32 %v924, 1.442695
        %v926 = vpow.pop %v925
        %s927 = scalar_lea.vmem [#allocation8], 7
        %928 = vst [vmem:[%s927] ss:$16 sm:$0x3] %v926
        %929 = vst [vmem:[%s927] ss:$16 sm:$0xc] %v926
        %930 = vst [vmem:[%s927] ss:$16 sm:$0x30] %v926
        %931 = vst [vmem:[%s927] ss:$16 sm:$0xc0] %v926
        %932 = vset.pattern.permute.xlu0 7
        %933 = vperm.xlu0 %932, %v765
        %v934 = vpop.permute.xlu0 %933
        %v936 = vmul.f32 %v934, %v766
        %s937 = scalar_lea.vmem [#allocation9], 7
        %938 = vst [vmem:[%s937] ss:$16 sm:$0x3] %v936
        %939 = vst [vmem:[%s937] ss:$16 sm:$0xc] %v936
        %940 = vst [vmem:[%s937] ss:$16 sm:$0x30] %v936
        %941 = vst [vmem:[%s937] ss:$16 sm:$0xc0] %v936
        %v942 = vlaneseq
        %v943 = vshrl.u32 %v942, 7
        %v944 = vsub.s32 0, %v943
        %v945 = vrot.slane %v761, %v944
        %v946 = vmul.f32 %v763, %v945
        %v947 = vmul.f32 %v946, 1.442695
        %v948 = vpow.pop %v947
        %s949 = scalar_lea.vmem [#allocation8], 8
        %950 = vst [vmem:[%s949] ss:$16 sm:$0x3] %v948
        %951 = vst [vmem:[%s949] ss:$16 sm:$0xc] %v948
        %952 = vst [vmem:[%s949] ss:$16 sm:$0x30] %v948
        %953 = vst [vmem:[%s949] ss:$16 sm:$0xc0] %v948
        %954 = vset.pattern.permute.xlu0 8
        %955 = vperm.xlu0 %954, %v765
        %v956 = vpop.permute.xlu0 %955
        %v958 = vmul.f32 %v956, %v766
        %s959 = scalar_lea.vmem [#allocation9], 8
        %960 = vst [vmem:[%s959] ss:$16 sm:$0x3] %v958
        %961 = vst [vmem:[%s959] ss:$16 sm:$0xc] %v958
        %962 = vst [vmem:[%s959] ss:$16 sm:$0x30] %v958
        %963 = vst [vmem:[%s959] ss:$16 sm:$0xc0] %v958
        %v964 = vlaneseq
        %v965 = vshrl.u32 %v964, 7
        %v966 = vsub.s32 1, %v965
        %v967 = vrot.slane %v761, %v966
        %v968 = vmul.f32 %v763, %v967
        %v969 = vmul.f32 %v968, 1.442695
        %v970 = vpow.pop %v969
        %s971 = scalar_lea.vmem [#allocation8], 9
        %972 = vst [vmem:[%s971] ss:$16 sm:$0x3] %v970
        %973 = vst [vmem:[%s971] ss:$16 sm:$0xc] %v970
        %974 = vst [vmem:[%s971] ss:$16 sm:$0x30] %v970
        %975 = vst [vmem:[%s971] ss:$16 sm:$0xc0] %v970
        %976 = vset.pattern.permute.xlu0 9
        %977 = vperm.xlu0 %976, %v765
        %v978 = vpop.permute.xlu0 %977
        %v980 = vmul.f32 %v978, %v766
        %s981 = scalar_lea.vmem [#allocation9], 9
        %982 = vst [vmem:[%s981] ss:$16 sm:$0x3] %v980
        %983 = vst [vmem:[%s981] ss:$16 sm:$0xc] %v980
        %984 = vst [vmem:[%s981] ss:$16 sm:$0x30] %v980
        %985 = vst [vmem:[%s981] ss:$16 sm:$0xc0] %v980
        %v986 = vlaneseq
        %v987 = vshrl.u32 %v986, 7
        %v988 = vsub.s32 2, %v987
        %v989 = vrot.slane %v761, %v988
        %v990 = vmul.f32 %v763, %v989
        %v991 = vmul.f32 %v990, 1.442695
        %v992 = vpow.pop %v991
        %s993 = scalar_lea.vmem [#allocation8], 10
        %994 = vst [vmem:[%s993] ss:$16 sm:$0x3] %v992
        %995 = vst [vmem:[%s993] ss:$16 sm:$0xc] %v992
        %996 = vst [vmem:[%s993] ss:$16 sm:$0x30] %v992
        %997 = vst [vmem:[%s993] ss:$16 sm:$0xc0] %v992
        %998 = vset.pattern.permute.xlu0 10
        %999 = vperm.xlu0 %998, %v765
        %v1000 = vpop.permute.xlu0 %999
        %v1002 = vmul.f32 %v1000, %v766
        %s1003 = scalar_lea.vmem [#allocation9], 10
        %1004 = vst [vmem:[%s1003] ss:$16 sm:$0x3] %v1002
        %1005 = vst [vmem:[%s1003] ss:$16 sm:$0xc] %v1002
        %1006 = vst [vmem:[%s1003] ss:$16 sm:$0x30] %v1002
        %1007 = vst [vmem:[%s1003] ss:$16 sm:$0xc0] %v1002
        %v1008 = vlaneseq
        %v1009 = vshrl.u32 %v1008, 7
        %v1010 = vsub.s32 3, %v1009
        %v1011 = vrot.slane %v761, %v1010
        %v1012 = vmul.f32 %v763, %v1011
        %v1013 = vmul.f32 %v1012, 1.442695
        %v1014 = vpow.pop %v1013
        %s1015 = scalar_lea.vmem [#allocation8], 11
        %1016 = vst [vmem:[%s1015] ss:$16 sm:$0x3] %v1014
        %1017 = vst [vmem:[%s1015] ss:$16 sm:$0xc] %v1014
        %1018 = vst [vmem:[%s1015] ss:$16 sm:$0x30] %v1014
        %1019 = vst [vmem:[%s1015] ss:$16 sm:$0xc0] %v1014
        %1020 = vset.pattern.permute.xlu0 11
        %1021 = vperm.xlu0 %1020, %v765
        %v1022 = vpop.permute.xlu0 %1021
        %v1024 = vmul.f32 %v1022, %v766
        %s1025 = scalar_lea.vmem [#allocation9], 11
        %1026 = vst [vmem:[%s1025] ss:$16 sm:$0x3] %v1024
        %1027 = vst [vmem:[%s1025] ss:$16 sm:$0xc] %v1024
        %1028 = vst [vmem:[%s1025] ss:$16 sm:$0x30] %v1024
        %1029 = vst [vmem:[%s1025] ss:$16 sm:$0xc0] %v1024
        %v1030 = vlaneseq
        %v1031 = vshrl.u32 %v1030, 7
        %v1032 = vsub.s32 4, %v1031
        %v1033 = vrot.slane %v761, %v1032
        %v1034 = vmul.f32 %v763, %v1033
        %v1035 = vmul.f32 %v1034, 1.442695
        %v1036 = vpow.pop %v1035
        %s1037 = scalar_lea.vmem [#allocation8], 12
        %1038 = vst [vmem:[%s1037] ss:$16 sm:$0x3] %v1036
        %1039 = vst [vmem:[%s1037] ss:$16 sm:$0xc] %v1036
        %1040 = vst [vmem:[%s1037] ss:$16 sm:$0x30] %v1036
        %1041 = vst [vmem:[%s1037] ss:$16 sm:$0xc0] %v1036
        %1042 = vset.pattern.permute.xlu0 12
        %1043 = vperm.xlu0 %1042, %v765
        %v1044 = vpop.permute.xlu0 %1043
        %v1046 = vmul.f32 %v1044, %v766
        %s1047 = scalar_lea.vmem [#allocation9], 12
        %1048 = vst [vmem:[%s1047] ss:$16 sm:$0x3] %v1046
        %1049 = vst [vmem:[%s1047] ss:$16 sm:$0xc] %v1046
        %1050 = vst [vmem:[%s1047] ss:$16 sm:$0x30] %v1046
        %1051 = vst [vmem:[%s1047] ss:$16 sm:$0xc0] %v1046
        %v1052 = vlaneseq
        %v1053 = vshrl.u32 %v1052, 7
        %v1054 = vsub.s32 5, %v1053
        %v1055 = vrot.slane %v761, %v1054
        %v1056 = vmul.f32 %v763, %v1055
        %v1057 = vmul.f32 %v1056, 1.442695
        %v1058 = vpow.pop %v1057
        %s1059 = scalar_lea.vmem [#allocation8], 13
        %1060 = vst [vmem:[%s1059] ss:$16 sm:$0x3] %v1058
        %1061 = vst [vmem:[%s1059] ss:$16 sm:$0xc] %v1058
        %1062 = vst [vmem:[%s1059] ss:$16 sm:$0x30] %v1058
        %1063 = vst [vmem:[%s1059] ss:$16 sm:$0xc0] %v1058
        %1064 = vset.pattern.permute.xlu0 13
        %1065 = vperm.xlu0 %1064, %v765
        %v1066 = vpop.permute.xlu0 %1065
        %v1068 = vmul.f32 %v1066, %v766
        %s1069 = scalar_lea.vmem [#allocation9], 13
        %1070 = vst [vmem:[%s1069] ss:$16 sm:$0x3] %v1068
        %1071 = vst [vmem:[%s1069] ss:$16 sm:$0xc] %v1068
        %1072 = vst [vmem:[%s1069] ss:$16 sm:$0x30] %v1068
        %1073 = vst [vmem:[%s1069] ss:$16 sm:$0xc0] %v1068
        %v1074 = vlaneseq
        %v1075 = vshrl.u32 %v1074, 7
        %v1076 = vsub.s32 6, %v1075
        %v1077 = vrot.slane %v761, %v1076
        %v1078 = vmul.f32 %v763, %v1077
        %v1079 = vmul.f32 %v1078, 1.442695
        %v1080 = vpow.pop %v1079
        %s1081 = scalar_lea.vmem [#allocation8], 14
        %1082 = vst [vmem:[%s1081] ss:$16 sm:$0x3] %v1080
        %1083 = vst [vmem:[%s1081] ss:$16 sm:$0xc] %v1080
        %1084 = vst [vmem:[%s1081] ss:$16 sm:$0x30] %v1080
        %1085 = vst [vmem:[%s1081] ss:$16 sm:$0xc0] %v1080
        %1086 = vset.pattern.permute.xlu0 14
        %1087 = vperm.xlu0 %1086, %v765
        %v1088 = vpop.permute.xlu0 %1087
        %v1090 = vmul.f32 %v1088, %v766
        %s1091 = scalar_lea.vmem [#allocation9], 14
        %1092 = vst [vmem:[%s1091] ss:$16 sm:$0x3] %v1090
        %1093 = vst [vmem:[%s1091] ss:$16 sm:$0xc] %v1090
        %1094 = vst [vmem:[%s1091] ss:$16 sm:$0x30] %v1090
        %1095 = vst [vmem:[%s1091] ss:$16 sm:$0xc0] %v1090
        %v1096 = vlaneseq
        %v1097 = vshrl.u32 %v1096, 7
        %v1098 = vsub.s32 7, %v1097
        %v1099 = vrot.slane %v761, %v1098
        %v1100 = vmul.f32 %v763, %v1099
        %v1101 = vmul.f32 %v1100, 1.442695
        %v1102 = vpow.pop %v1101
        %s1103 = scalar_lea.vmem [#allocation8], 15
        %1104 = vst [vmem:[%s1103] ss:$16 sm:$0x3] %v1102
        %1105 = vst [vmem:[%s1103] ss:$16 sm:$0xc] %v1102
        %1106 = vst [vmem:[%s1103] ss:$16 sm:$0x30] %v1102
        %1107 = vst [vmem:[%s1103] ss:$16 sm:$0xc0] %v1102
        %1108 = vset.pattern.permute.xlu0 15
        %1109 = vperm.xlu0 %1108, %v765
        %v1110 = vpop.permute.xlu0 %1109
        %v1112 = vmul.f32 %v1110, %v766
        %s1113 = scalar_lea.vmem [#allocation9], 15
        %1114 = vst [vmem:[%s1113] ss:$16 sm:$0x3] %v1112
        %1115 = vst [vmem:[%s1113] ss:$16 sm:$0xc] %v1112
        %1116 = vst [vmem:[%s1113] ss:$16 sm:$0x30] %v1112
        %1117 = vst [vmem:[%s1113] ss:$16 sm:$0xc0] %v1112
        loop: start=0, step=1, limit=8
        $region89: #{run.5} parent=63 // loop_pre_header
          _
        $region90: #{run.5} parent=63 // loop_header
          %s1119 = sphi 0, %s1123
          %p1120 = scmp.ge.s32.totalorder %s1119, 8
          %v1124 = vphi 0.0, %v1135
          %v1125 = vphi 0.0, %v1136
        $region91: #{run.5} parent=63 // loop_header_branch
          %1122 = sbr.rel (%p1120) target = $region95
        $region92: #{run.5} parent=63 // loop_body
          %s1126 = smul.u32 %s1119, 16
          %s1127 = scalar_lea.vmem [#allocation8], %s1126
          %v1128 = vld [vmem:[%s1127] sm:$0xff]
          %v1129 = vld [vmem:[%s1127 + $0x8] sm:$0xff]
          %v1130 = vmul.f32 %v1128, %v1124
          %v1131 = vmul.f32 %v1129, %v1125
          %s1132 = scalar_lea.vmem [#allocation9], %s1126
          %v1133 = vld [vmem:[%s1132] sm:$0xff]
          %v1134 = vld [vmem:[%s1132 + $0x8] sm:$0xff]
          %v1135 = vadd.f32 %v1130, %v1133
          %v1136 = vadd.f32 %v1131, %v1134
          %1137 = vst.msk [vmem:[%s1132] sm:$0xff] %vm527, %v1135
          %1138 = vst.msk [vmem:[%s1132 + $0x8] sm:$0xff] %vm527, %v1136
        $region93: #{run.5} parent=63 // loop_footer
          %s1123 = sadd.s32 1, %s1119
        $region94: #{run.5} parent=63 // loop_footer_branch
          %1118 = sbr.rel target = $region90
        $region95: #{run.5} parent=63 // loop_exit
          _
        %v1139 = vld [vmem:[#allocation6] sm:$0xff]
        %v1141 = vlaneseq
        %v1142 = vshrl.u32 %v1141, 7
        %v1143 = vsub.s32 0, %v1142
        %v1144 = vrot.slane %v762, %v1143
        %v1146 = vmul.f32 %v1144, %v764
        %v1147 = vld [vmem:[#allocation9] ss:$16 sm:$0x3]
        %v1148 = vld [vmem:[#allocation9] ss:$16 sm:$0xc]
        %v1149 = vor.u32 %v1147, %v1148
        %v1150 = vld [vmem:[#allocation9] ss:$16 sm:$0x30]
        %v1151 = vor.u32 %v1149, %v1150
        %v1152 = vld [vmem:[#allocation9] ss:$16 sm:$0xc0]
        %v1153 = vor.u32 %v1151, %v1152
        %1155 = vset.pattern.permute.xlu0 0
        %1156 = vperm.xlu0 %1155, %v1139
        %v1157 = vpop.permute.xlu0 %1156
        %v1159 = vmul.f32 %v1153, %v1157
        %v1160 = vadd.f32 %v1146, %v1159
        %v1161 = vld [vmem:[%s805] ss:$16 sm:$0x3]
        %v1162 = vld [vmem:[%s805] ss:$16 sm:$0xc]
        %v1163 = vor.u32 %v1161, %v1162
        %v1164 = vld [vmem:[%s805] ss:$16 sm:$0x30]
        %v1165 = vor.u32 %v1163, %v1164
        %v1166 = vld [vmem:[%s805] ss:$16 sm:$0xc0]
        %v1167 = vor.u32 %v1165, %v1166
        %1168 = vset.pattern.permute.xlu0 1
        %1169 = vperm.xlu0 %1168, %v1139
        %v1170 = vpop.permute.xlu0 %1169
        %v1172 = vmul.f32 %v1167, %v1170
        %v1173 = vadd.f32 %v1160, %v1172
        %v1174 = vld [vmem:[%s827] ss:$16 sm:$0x3]
        %v1175 = vld [vmem:[%s827] ss:$16 sm:$0xc]
        %v1176 = vor.u32 %v1174, %v1175
        %v1177 = vld [vmem:[%s827] ss:$16 sm:$0x30]
        %v1178 = vor.u32 %v1176, %v1177
        %v1179 = vld [vmem:[%s827] ss:$16 sm:$0xc0]
        %v1180 = vor.u32 %v1178, %v1179
        %1181 = vset.pattern.permute.xlu0 2
        %1182 = vperm.xlu0 %1181, %v1139
        %v1183 = vpop.permute.xlu0 %1182
        %v1185 = vmul.f32 %v1180, %v1183
        %v1186 = vadd.f32 %v1173, %v1185
        %v1187 = vld [vmem:[%s849] ss:$16 sm:$0x3]
        %v1188 = vld [vmem:[%s849] ss:$16 sm:$0xc]
        %v1189 = vor.u32 %v1187, %v1188
        %v1190 = vld [vmem:[%s849] ss:$16 sm:$0x30]
        %v1191 = vor.u32 %v1189, %v1190
        %v1192 = vld [vmem:[%s849] ss:$16 sm:$0xc0]
        %v1193 = vor.u32 %v1191, %v1192
        %1194 = vset.pattern.permute.xlu0 3
        %1195 = vperm.xlu0 %1194, %v1139
        %v1196 = vpop.permute.xlu0 %1195
        %v1198 = vmul.f32 %v1193, %v1196
        %v1199 = vadd.f32 %v1186, %v1198
        %v1200 = vld [vmem:[%s871] ss:$16 sm:$0x3]
        %v1201 = vld [vmem:[%s871] ss:$16 sm:$0xc]
        %v1202 = vor.u32 %v1200, %v1201
        %v1203 = vld [vmem:[%s871] ss:$16 sm:$0x30]
        %v1204 = vor.u32 %v1202, %v1203
        %v1205 = vld [vmem:[%s871] ss:$16 sm:$0xc0]
        %v1206 = vor.u32 %v1204, %v1205
        %1207 = vset.pattern.permute.xlu0 4
        %1208 = vperm.xlu0 %1207, %v1139
        %v1209 = vpop.permute.xlu0 %1208
        %v1211 = vmul.f32 %v1206, %v1209
        %v1212 = vadd.f32 %v1199, %v1211
        %v1213 = vld [vmem:[%s893] ss:$16 sm:$0x3]
        %v1214 = vld [vmem:[%s893] ss:$16 sm:$0xc]
        %v1215 = vor.u32 %v1213, %v1214
        %v1216 = vld [vmem:[%s893] ss:$16 sm:$0x30]
        %v1217 = vor.u32 %v1215, %v1216
        %v1218 = vld [vmem:[%s893] ss:$16 sm:$0xc0]
        %v1219 = vor.u32 %v1217, %v1218
        %1220 = vset.pattern.permute.xlu0 5
        %1221 = vperm.xlu0 %1220, %v1139
        %v1222 = vpop.permute.xlu0 %1221
        %v1224 = vmul.f32 %v1219, %v1222
        %v1225 = vadd.f32 %v1212, %v1224
        %v1226 = vld [vmem:[%s915] ss:$16 sm:$0x3]
        %v1227 = vld [vmem:[%s915] ss:$16 sm:$0xc]
        %v1228 = vor.u32 %v1226, %v1227
        %v1229 = vld [vmem:[%s915] ss:$16 sm:$0x30]
        %v1230 = vor.u32 %v1228, %v1229
        %v1231 = vld [vmem:[%s915] ss:$16 sm:$0xc0]
        %v1232 = vor.u32 %v1230, %v1231
        %1233 = vset.pattern.permute.xlu0 6
        %1234 = vperm.xlu0 %1233, %v1139
        %v1235 = vpop.permute.xlu0 %1234
        %v1237 = vmul.f32 %v1232, %v1235
        %v1238 = vadd.f32 %v1225, %v1237
        %v1239 = vld [vmem:[%s937] ss:$16 sm:$0x3]
        %v1240 = vld [vmem:[%s937] ss:$16 sm:$0xc]
        %v1241 = vor.u32 %v1239, %v1240
        %v1242 = vld [vmem:[%s937] ss:$16 sm:$0x30]
        %v1243 = vor.u32 %v1241, %v1242
        %v1244 = vld [vmem:[%s937] ss:$16 sm:$0xc0]
        %v1245 = vor.u32 %v1243, %v1244
        %1246 = vset.pattern.permute.xlu0 7
        %1247 = vperm.xlu0 %1246, %v1139
        %v1248 = vpop.permute.xlu0 %1247
        %v1250 = vmul.f32 %v1245, %v1248
        %v1251 = vadd.f32 %v1238, %v1250
        %v1252 = vld [vmem:[%s959] ss:$16 sm:$0x3]
        %v1253 = vld [vmem:[%s959] ss:$16 sm:$0xc]
        %v1254 = vor.u32 %v1252, %v1253
        %v1255 = vld [vmem:[%s959] ss:$16 sm:$0x30]
        %v1256 = vor.u32 %v1254, %v1255
        %v1257 = vld [vmem:[%s959] ss:$16 sm:$0xc0]
        %v1258 = vor.u32 %v1256, %v1257
        %1259 = vset.pattern.permute.xlu0 8
        %1260 = vperm.xlu0 %1259, %v1139
        %v1261 = vpop.permute.xlu0 %1260
        %v1263 = vmul.f32 %v1258, %v1261
        %v1264 = vadd.f32 %v1251, %v1263
        %v1265 = vld [vmem:[%s981] ss:$16 sm:$0x3]
        %v1266 = vld [vmem:[%s981] ss:$16 sm:$0xc]
        %v1267 = vor.u32 %v1265, %v1266
        %v1268 = vld [vmem:[%s981] ss:$16 sm:$0x30]
        %v1269 = vor.u32 %v1267, %v1268
        %v1270 = vld [vmem:[%s981] ss:$16 sm:$0xc0]
        %v1271 = vor.u32 %v1269, %v1270
        %1272 = vset.pattern.permute.xlu0 9
        %1273 = vperm.xlu0 %1272, %v1139
        %v1274 = vpop.permute.xlu0 %1273
        %v1276 = vmul.f32 %v1271, %v1274
        %v1277 = vadd.f32 %v1264, %v1276
        %v1278 = vld [vmem:[%s1003] ss:$16 sm:$0x3]
        %v1279 = vld [vmem:[%s1003] ss:$16 sm:$0xc]
        %v1280 = vor.u32 %v1278, %v1279
        %v1281 = vld [vmem:[%s1003] ss:$16 sm:$0x30]
        %v1282 = vor.u32 %v1280, %v1281
        %v1283 = vld [vmem:[%s1003] ss:$16 sm:$0xc0]
        %v1284 = vor.u32 %v1282, %v1283
        %1285 = vset.pattern.permute.xlu0 10
        %1286 = vperm.xlu0 %1285, %v1139
        %v1287 = vpop.permute.xlu0 %1286
        %v1289 = vmul.f32 %v1284, %v1287
        %v1290 = vadd.f32 %v1277, %v1289
        %v1291 = vld [vmem:[%s1025] ss:$16 sm:$0x3]
        %v1292 = vld [vmem:[%s1025] ss:$16 sm:$0xc]
        %v1293 = vor.u32 %v1291, %v1292
        %v1294 = vld [vmem:[%s1025] ss:$16 sm:$0x30]
        %v1295 = vor.u32 %v1293, %v1294
        %v1296 = vld [vmem:[%s1025] ss:$16 sm:$0xc0]
        %v1297 = vor.u32 %v1295, %v1296
        %1298 = vset.pattern.permute.xlu0 11
        %1299 = vperm.xlu0 %1298, %v1139
        %v1300 = vpop.permute.xlu0 %1299
        %v1302 = vmul.f32 %v1297, %v1300
        %v1303 = vadd.f32 %v1290, %v1302
        %v1304 = vld [vmem:[%s1047] ss:$16 sm:$0x3]
        %v1305 = vld [vmem:[%s1047] ss:$16 sm:$0xc]
        %v1306 = vor.u32 %v1304, %v1305
        %v1307 = vld [vmem:[%s1047] ss:$16 sm:$0x30]
        %v1308 = vor.u32 %v1306, %v1307
        %v1309 = vld [vmem:[%s1047] ss:$16 sm:$0xc0]
        %v1310 = vor.u32 %v1308, %v1309
        %1311 = vset.pattern.permute.xlu0 12
        %1312 = vperm.xlu0 %1311, %v1139
        %v1313 = vpop.permute.xlu0 %1312
        %v1315 = vmul.f32 %v1310, %v1313
        %v1316 = vadd.f32 %v1303, %v1315
        %v1317 = vld [vmem:[%s1069] ss:$16 sm:$0x3]
        %v1318 = vld [vmem:[%s1069] ss:$16 sm:$0xc]
        %v1319 = vor.u32 %v1317, %v1318
        %v1320 = vld [vmem:[%s1069] ss:$16 sm:$0x30]
        %v1321 = vor.u32 %v1319, %v1320
        %v1322 = vld [vmem:[%s1069] ss:$16 sm:$0xc0]
        %v1323 = vor.u32 %v1321, %v1322
        %1324 = vset.pattern.permute.xlu0 13
        %1325 = vperm.xlu0 %1324, %v1139
        %v1326 = vpop.permute.xlu0 %1325
        %v1328 = vmul.f32 %v1323, %v1326
        %v1329 = vadd.f32 %v1316, %v1328
        %v1330 = vld [vmem:[%s1091] ss:$16 sm:$0x3]
        %v1331 = vld [vmem:[%s1091] ss:$16 sm:$0xc]
        %v1332 = vor.u32 %v1330, %v1331
        %v1333 = vld [vmem:[%s1091] ss:$16 sm:$0x30]
        %v1334 = vor.u32 %v1332, %v1333
        %v1335 = vld [vmem:[%s1091] ss:$16 sm:$0xc0]
        %v1336 = vor.u32 %v1334, %v1335
        %1337 = vset.pattern.permute.xlu0 14
        %1338 = vperm.xlu0 %1337, %v1139
        %v1339 = vpop.permute.xlu0 %1338
        %v1341 = vmul.f32 %v1336, %v1339
        %v1342 = vadd.f32 %v1329, %v1341
        %v1343 = vld [vmem:[%s1113] ss:$16 sm:$0x3]
        %v1344 = vld [vmem:[%s1113] ss:$16 sm:$0xc]
        %v1345 = vor.u32 %v1343, %v1344
        %v1346 = vld [vmem:[%s1113] ss:$16 sm:$0x30]
        %v1347 = vor.u32 %v1345, %v1346
        %v1348 = vld [vmem:[%s1113] ss:$16 sm:$0xc0]
        %v1349 = vor.u32 %v1347, %v1348
        %1350 = vset.pattern.permute.xlu0 15
        %1351 = vperm.xlu0 %1350, %v1139
        %v1352 = vpop.permute.xlu0 %1351
        %v1354 = vmul.f32 %v1349, %v1352
        %v1355 = vadd.f32 %v1342, %v1354
        %1356 = vst.msk [vmem:[#allocation7] sm:$0xff] %vm527, %v1355
        %v1357 = vld [vmem:[#allocation12] sm:$0xf]
        %v1358 = vld [vmem:[#allocation12 + $0x4] sm:$0xf]
        %v1359 = vld [vmem:[#allocation12 + $0x8] sm:$0xf]
        %v1360 = vld [vmem:[#allocation12 + $0xc] sm:$0xf]
        %v1365 = vunpack.c.l.b16 %v1357
        %v1366 = vunpack.c.l.b16 %v1358
        %v1367 = vunpack.c.l.b16 %v1359
        %v1368 = vunpack.c.l.b16 %v1360
        %v1369 = vpack.c.b16 %v1366, %v1365
        %v1370 = vpack.c.b16 %v1368, %v1367
        %1373 = vmatprep.subr.bf16.mxu0 0
        %1374 = vmatpush1.bf16.msra.mxu0 %v1369
        %1375 = vmatprep.subr.bf16.mxu0 0
        %1376 = vmatpush1.bf16.msra.mxu0 %v1370
        %1377 = vmatprep.subr.bf16.mxu0 0
        %1378 = vmatpush1.bf16.msra.mxu0 0
        %1379 = vmatprep.subr.bf16.mxu0 0
        %1380 = vmatpush1.bf16.msra.mxu0 0
        %1381 = vmatprep.subr.bf16.mxu0 0
        %1382 = vmatpush1.bf16.msra.mxu0 0
        %1383 = vmatprep.subr.bf16.mxu0 0
        %1384 = vmatpush1.bf16.msra.mxu0 0
        %1385 = vmatprep.subr.bf16.mxu0 0
        %1386 = vmatpush1.bf16.msra.mxu0 0
        %1387 = vmatprep.subr.bf16.mxu0 0
        %1388 = vmatpush1.bf16.msra.mxu0 0
        %1389 = vmatprep.subr.bf16.mxu0 0
        %1390 = vmatpush1.bf16.msra.mxu0 0
        %1391 = vmatprep.subr.bf16.mxu0 0
        %1392 = vmatpush1.bf16.msra.mxu0 0
        %1393 = vmatprep.subr.bf16.mxu0 0
        %1394 = vmatpush1.bf16.msra.mxu0 0
        %1395 = vmatprep.subr.bf16.mxu0 0
        %1396 = vmatpush1.bf16.msra.mxu0 0
        %1397 = vmatprep.subr.bf16.mxu0 0
        %1398 = vmatpush1.bf16.msra.mxu0 0
        %1399 = vmatprep.subr.bf16.mxu0 0
        %1400 = vmatpush1.bf16.msra.mxu0 0
        %1401 = vmatprep.subr.bf16.mxu0 0
        %1402 = vmatpush1.bf16.msra.mxu0 0
        %1403 = vmatprep.subr.bf16.mxu0 0
        %1404 = vmatpush1.bf16.msra.mxu0 0
        %1405 = vmatprep.mubr.bf16.mxu0 0
        %1406 = vmatmul.mubr.bf16.gmra.mrb[0].mxu0 %v483
        %v1407 = vpop.f32.mrb[0].mxu0
        %v1408 = vadd.f32 0.0, %v1407
        %v1409 = vpop.f32.mrb[0].mxu0
        %v1410 = vpop.f32.mrb[0].mxu0
        %v1411 = vpop.f32.mrb[0].mxu0
        %1412 = vdwg.mxu0
        %v1413 = vld [vmem:[#allocation7] sm:$0xff]
        %v1414 = vxor.u32 %v1408, 2147483648
        %v1415 = vmul.f32 %v1414, 1.442695
        %v1416 = vpow.pop %v1415
        %v1417 = vadd.f32 %v1416, 1.0
        %v1418 = vrcp.pop %v1417
        %v1419 = vmul.f32 1.0, %v1418
        %v1420 = vmul.f32 %v1408, %v1419
        %v1421 = vmul.f32 %v1413, %v1420
        %v1422 = vld [vmem:[%s10] sm:$0xf]
        %v1423 = vld [vmem:[%s10 + $0x4] sm:$0xf]
        %v1424 = vld [vmem:[%s10 + $0x8] sm:$0xf]
        %v1425 = vld [vmem:[%s10 + $0xc] sm:$0xf]
        %v1426 = vld [vmem:[%s10 + $0x10] sm:$0xf]
        %v1427 = vld [vmem:[%s10 + $0x14] sm:$0xf]
        %v1428 = vld [vmem:[%s10 + $0x18] sm:$0xf]
        %v1429 = vld [vmem:[%s10 + $0x1c] sm:$0xf]
        %v1430 = vpack.c.bf16 %v1421, %v1421
        %v1439 = vunpack.c.l.b16 %v1422
        %v1440 = vunpack.c.l.b16 %v1423
        %v1441 = vunpack.c.l.b16 %v1424
        %v1442 = vunpack.c.l.b16 %v1425
        %v1443 = vunpack.c.l.b16 %v1426
        %v1444 = vunpack.c.l.b16 %v1427
        %v1445 = vunpack.c.l.b16 %v1428
        %v1446 = vunpack.c.l.b16 %v1429
        %v1447 = vpack.c.b16 %v1440, %v1439
        %v1448 = vpack.c.b16 %v1442, %v1441
        %v1449 = vpack.c.b16 %v1444, %v1443
        %v1450 = vpack.c.b16 %v1446, %v1445
        %v1456 = vsel %vm527, %v1430, 0
        %1458 = vmatprep.subr.bf16.mxu0 0
        %1459 = vmatpush1.bf16.msra.mxu0 %v1447
        %1460 = vmatprep.subr.bf16.mxu0 0
        %1461 = vmatpush1.bf16.msra.mxu0 %v1448
        %1462 = vmatprep.subr.bf16.mxu0 0
        %1463 = vmatpush1.bf16.msra.mxu0 %v1449
        %1464 = vmatprep.subr.bf16.mxu0 0
        %1465 = vmatpush1.bf16.msra.mxu0 %v1450
        %1466 = vmatprep.subr.bf16.mxu0 0
        %1467 = vmatpush1.bf16.msra.mxu0 0
        %1468 = vmatprep.subr.bf16.mxu0 0
        %1469 = vmatpush1.bf16.msra.mxu0 0
        %1470 = vmatprep.subr.bf16.mxu0 0
        %1471 = vmatpush1.bf16.msra.mxu0 0
        %1472 = vmatprep.subr.bf16.mxu0 0
        %1473 = vmatpush1.bf16.msra.mxu0 0
        %1474 = vmatprep.subr.bf16.mxu0 0
        %1475 = vmatpush1.bf16.msra.mxu0 0
        %1476 = vmatprep.subr.bf16.mxu0 0
        %1477 = vmatpush1.bf16.msra.mxu0 0
        %1478 = vmatprep.subr.bf16.mxu0 0
        %1479 = vmatpush1.bf16.msra.mxu0 0
        %1480 = vmatprep.subr.bf16.mxu0 0
        %1481 = vmatpush1.bf16.msra.mxu0 0
        %1482 = vmatprep.subr.bf16.mxu0 0
        %1483 = vmatpush1.bf16.msra.mxu0 0
        %1484 = vmatprep.subr.bf16.mxu0 0
        %1485 = vmatpush1.bf16.msra.mxu0 0
        %1486 = vmatprep.subr.bf16.mxu0 0
        %1487 = vmatpush1.bf16.msra.mxu0 0
        %1488 = vmatprep.subr.bf16.mxu0 0
        %1489 = vmatpush1.bf16.msra.mxu0 0
        %1490 = vmatprep.mubr.bf16.mxu0 0
        %1491 = vmatmul.mubr.bf16.gmra.mrb[0].mxu0 %v1456
        %v1492 = vpop.f32.mrb[0].mxu0
        %v1493 = vadd.f32 0.0, %v1492
        %v1494 = vpop.f32.mrb[0].mxu0
        %v1495 = vpop.f32.mrb[0].mxu0
        %v1496 = vpop.f32.mrb[0].mxu0
        %1497 = vdwg.mxu0
        %1498 = vst.msk [vmem:[%s461] sm:$0xff] %vm481, %v1493
        %p1499 = scmp.lt.s32.totalorder %s26, 1
        %s1500 = scalar_select %p1499, %s26, 1
        %s1501 = smul.addr %s1500, 8
        %s1502 = scalar_lea.vmem %s11, %s1501
        // Predicated region
        $region96: #{run.5} parent=63 // pred_check
          %p1503 = pneg %p280
        $region97: #{run.5} parent=63 // pred_check_branch
          %1505 = sbr.rel (%p1503) target = $region99
        $region98: #{run.5} parent=63 // pred_region
          _
        $region99: #{run.5} parent=63 // pred_fallthru
          _
      $region64: #{run.5} parent=5 // pred_fallthru
        _
      %p1506 = scmp.le.s32.totalorder 2, %s21
      // Predicated region
      $region100: #{run.5} parent=5 // pred_check
        %p1507 = pneg %p1506
      $region101: #{run.5} parent=5 // pred_check_branch
        %1509 = sbr.rel (%p1507) target = $region103
      $region102: #{run.5} parent=5 // pred_region
        %s1510 = ssub.s32 %s21, 2
        // Predicated region
        $region104: #{run.5} parent=102 // pred_check
          %p1511 = pneg %p286
        $region105: #{run.5} parent=102 // pred_check_branch
          %1513 = sbr.rel (%p1511) target = $region107
        $region106: #{run.5} parent=102 // pred_region
          %p1514 = scmp.lt.s32.totalorder %s27, 1
          %s1515 = scalar_select %p1514, %s27, 1
          %s1516 = smul.addr %s1515, 8
          %s1517 = scalar_lea.vmem %s11, %s1516
        $region107: #{run.5} parent=102 // pred_fallthru
          _
      $region103: #{run.5} parent=5 // pred_fallthru
        _
    $region6: #{run.5} parent=1 // loop_footer
      %s25 = sadd.s32 1, %s21
    $region7: #{run.5} parent=1 // loop_footer_branch
      %20 = sbr.rel target = $region3
    $region8: #{run.5} parent=1 // loop_exit
      _
    %1518 = vsyncpa [#allocation11], 1
    %s1519 = scalar_lea.sflag [#allocation11], 1
    %1520 = vsyncpa %s1519, 1
    %1521 = vsyncpa [#allocation13], 1
    %1522 = vsyncpa [#allocation16], 1
    %1523 = vsyncpa [#allocation19], 1

// kernel: run.7
$region0: #{run.7}
  #allocation0 [shape = 'u32[]', space=smem, size = 0x4, offset = 0x4, fixed_abs, tag = 'smem constant byte address 0x4 - core index']
  #allocation1 [shape = 'u32[144,128]{1,0:T(1,128)}', space=vmem, size = 0x12000, scoped, tag = 'internal scratch']
  #allocation2 [shape = 'f32[19,64]{1,0:T(8,128)}', space=vmem, size = 0x3000, scoped, tag = 'scratch operand']
  #allocation3 [shape = 'f32[16,64]{1,0:T(8,128)}', space=vmem, size = 0x2000, scoped, tag = 'scratch operand']
  #allocation4 [shape = 'f32[16,64]{1,0:T(8,128)}', space=vmem, size = 0x2000, scoped, tag = 'scratch operand']
  #allocation5 [shape = 'f32[16,16]{1,0:T(8,128)}', space=vmem, size = 0x2000, scoped, tag = 'scratch operand']
  #allocation6 [shape = 'f32[16,16]{1,0:T(8,128)}', space=vmem, size = 0x2000, scoped, tag = 'scratch operand']
  #allocation7 [shape = 'f32[16,64]{1,0:T(8,128)}', space=vmem, size = 0x2000, scoped, tag = 'scratch operand']
  #allocation8 [shape = 'f32[256,64]{1,0:T(8,128)}', space=vmem, size = 0x20000, scoped, tag = 'scratch operand']
  #allocation9 [shape = 'f32[256,64]{1,0:T(8,128)}', space=vmem, size = 0x20000, scoped, tag = 'scratch operand']
  %s0 = inlined_call_operand.vmem [shape: f32[2,16,32], index: 0, kind: input, shape index: {}]
  %s1 = inlined_call_operand.vmem [shape: bf16[32,64], index: 1, kind: input, shape index: {}]
  %s2 = inlined_call_operand.vmem [shape: bf16[32,64], index: 2, kind: input, shape index: {}]
  %s3 = inlined_call_operand.vmem [shape: f32[4,64], index: 3, kind: input, shape index: {}]
  %s4 = inlined_call_operand.vmem [shape: f32[1,64], index: 4, kind: input, shape index: {}]
  %s5 = inlined_call_operand.vmem [shape: f32[64,34], index: 5, kind: input, shape index: {}]
  %s6 = inlined_call_operand.vmem [shape: f32[2,64], index: 6, kind: input, shape index: {}]
  %s7 = inlined_call_operand.vmem [shape: f32[1,64], index: 7, kind: input, shape index: {}]
  %s8 = inlined_call_operand.vmem [shape: f32[16,64], index: 8, kind: input, shape index: {}]
  %s9 = inlined_call_operand.vmem [shape: f32[1,64], index: 9, kind: input, shape index: {}]
  %s10 = inlined_call_operand.vmem [shape: bf16[64,32], index: 10, kind: input, shape index: {}]
  %s11 = inlined_call_operand.vmem [shape: f32[2,8,32], index: 11, kind: output, shape index: {}]
  %s12 = sld [smem:[#allocation0]]
  $region88: #{run.7} parent=0
    _
  %s14 = ssub.s32 1, %s12
  %s15 = scalar_select 0, %s14, %s12
  loop: start=0, step=1, limit=4
  $region2: #{run.7} parent=0 // loop_pre_header
    _
  $region3: #{run.7} parent=0 // loop_header
    %s17 = sphi 0, %s21
    %p18 = scmp.ge.s32.totalorder %s17, 4
    %s27 = sphi 0, %s29
    %s30 = sphi 0, %s27
    %s31 = sphi 0, %s30
    %s47 = sphi 0, %s31
    %s51 = sphi 0, %s51
    %s53 = sphi 0, %s51
    %s54 = sphi 0, %s53
    %s68 = sphi 0, %s54
    %s72 = sphi 0, %s72
    %s74 = sphi 0, %s72
    %s75 = sphi 0, %s74
    %s89 = sphi 0, %s75
    %s93 = sphi 0, %s93
    %s95 = sphi 0, %s93
    %s96 = sphi 0, %s95
    %s110 = sphi 0, %s96
    %s114 = sphi 0, %s114
    %s116 = sphi 0, %s114
    %s117 = sphi 0, %s116
    %s131 = sphi 0, %s117
    %s135 = sphi 0, %s135
    %s137 = sphi 0, %s135
    %s138 = sphi 0, %s137
    %s152 = sphi 0, %s138
    %s156 = sphi 0, %s156
    %s158 = sphi 0, %s156
    %s159 = sphi 0, %s158
    %s173 = sphi 0, %s159
    %s177 = sphi 0, %s177
    %s179 = sphi 0, %s177
    %s180 = sphi 0, %s179
    %s194 = sphi 0, %s180
    %s198 = sphi 0, %s198
    %s200 = sphi 0, %s198
    %s201 = sphi 0, %s200
    %s215 = sphi 0, %s201
    %s219 = sphi 0, %s219
    %s221 = sphi 0, %s219
    %s222 = sphi 0, %s221
    %s236 = sphi 0, %s222
    %s240 = sphi 0, %s240
    %s242 = sphi 0, %s240
    %s243 = sphi 0, %s242
    %s257 = sphi 0, %s243
    %s263 = sphi 0, %s265
    %s266 = sphi 0, %s263
    %s267 = sphi 0, %s266
    %s283 = sphi 0, %s267
  $region4: #{run.7} parent=0 // loop_header_branch
    %20 = sbr.rel (%p18) target = $region8
  $region5: #{run.7} parent=0 // loop_body
    %s22 = ssub.s32 %s17, 1
    %s23 = ssub.s32 %s17, 2
    %s24 = sadd.s32 %s17, 1
    %s25 = ssub.s32 %s17, %s24
    %p26 = scmp.eq.s32.totalorder %s25, 0
    %s28 = sadd.s32 %s27, 1
    %s29 = scalar_select %p26, %s27, %s28
    %p32 = pneg %p26
    %p33 = scmp.eq.s32.totalorder %s17, 1
    %p34 = por %p32, %p33
    %p35 = scmp.ne.s32.totalorder %s27, %s30
    %p36 = scmp.eq.s32.totalorder %s17, 0
    %p37 = por %p35, %p36
    %p38 = scmp.ne.s32.totalorder %s27, %s30
    %p39 = scmp.eq.s32.totalorder %s22, 1
    %p40 = por %p38, %p39
    %p41 = scmp.ne.s32.totalorder %s30, %s31
    %p42 = scmp.eq.s32.totalorder %s22, 0
    %p43 = por %p41, %p42
    %p44 = scmp.ne.s32.totalorder %s30, %s31
    %p45 = scmp.eq.s32.totalorder %s23, 1
    %p46 = por %p44, %p45
    %p48 = scmp.ne.s32.totalorder %s31, %s47
    %p49 = scmp.eq.s32.totalorder %s23, 0
    %p50 = por %p48, %p49
    %s52 = sadd.s32 %s51, 1
    %p55 = scmp.eq.s32.totalorder %s17, 1
    %p56 = scmp.ne.s32.totalorder %s51, %s53
    %p57 = scmp.eq.s32.totalorder %s17, 0
    %p58 = por %p56, %p57
    %p59 = scmp.ne.s32.totalorder %s51, %s53
    %p60 = scmp.eq.s32.totalorder %s22, 1
    %p61 = por %p59, %p60
    %p62 = scmp.ne.s32.totalorder %s53, %s54
    %p63 = scmp.eq.s32.totalorder %s22, 0
    %p64 = por %p62, %p63
    %p65 = scmp.ne.s32.totalorder %s53, %s54
    %p66 = scmp.eq.s32.totalorder %s23, 1
    %p67 = por %p65, %p66
    %p69 = scmp.ne.s32.totalorder %s54, %s68
    %p70 = scmp.eq.s32.totalorder %s23, 0
    %p71 = por %p69, %p70
    %s73 = sadd.s32 %s72, 1
    %p76 = scmp.eq.s32.totalorder %s17, 1
    %p77 = scmp.ne.s32.totalorder %s72, %s74
    %p78 = scmp.eq.s32.totalorder %s17, 0
    %p79 = por %p77, %p78
    %p80 = scmp.ne.s32.totalorder %s72, %s74
    %p81 = scmp.eq.s32.totalorder %s22, 1
    %p82 = por %p80, %p81
    %p83 = scmp.ne.s32.totalorder %s74, %s75
    %p84 = scmp.eq.s32.totalorder %s22, 0
    %p85 = por %p83, %p84
    %p86 = scmp.ne.s32.totalorder %s74, %s75
    %p87 = scmp.eq.s32.totalorder %s23, 1
    %p88 = por %p86, %p87
    %p90 = scmp.ne.s32.totalorder %s75, %s89
    %p91 = scmp.eq.s32.totalorder %s23, 0
    %p92 = por %p90, %p91
    %s94 = sadd.s32 %s93, 1
    %p97 = scmp.eq.s32.totalorder %s17, 1
    %p98 = scmp.ne.s32.totalorder %s93, %s95
    %p99 = scmp.eq.s32.totalorder %s17, 0
    %p100 = por %p98, %p99
    %p101 = scmp.ne.s32.totalorder %s93, %s95
    %p102 = scmp.eq.s32.totalorder %s22, 1
    %p103 = por %p101, %p102
    %p104 = scmp.ne.s32.totalorder %s95, %s96
    %p105 = scmp.eq.s32.totalorder %s22, 0
    %p106 = por %p104, %p105
    %p107 = scmp.ne.s32.totalorder %s95, %s96
    %p108 = scmp.eq.s32.totalorder %s23, 1
    %p109 = por %p107, %p108
    %p111 = scmp.ne.s32.totalorder %s96, %s110
    %p112 = scmp.eq.s32.totalorder %s23, 0
    %p113 = por %p111, %p112
    %s115 = sadd.s32 %s114, 1
    %p118 = scmp.eq.s32.totalorder %s17, 1
    %p119 = scmp.ne.s32.totalorder %s114, %s116
    %p120 = scmp.eq.s32.totalorder %s17, 0
    %p121 = por %p119, %p120
    %p122 = scmp.ne.s32.totalorder %s114, %s116
    %p123 = scmp.eq.s32.totalorder %s22, 1
    %p124 = por %p122, %p123
    %p125 = scmp.ne.s32.totalorder %s116, %s117
    %p126 = scmp.eq.s32.totalorder %s22, 0
    %p127 = por %p125, %p126
    %p128 = scmp.ne.s32.totalorder %s116, %s117
    %p129 = scmp.eq.s32.totalorder %s23, 1
    %p130 = por %p128, %p129
    %p132 = scmp.ne.s32.totalorder %s117, %s131
    %p133 = scmp.eq.s32.totalorder %s23, 0
    %p134 = por %p132, %p133
    %s136 = sadd.s32 %s135, 1
    %p139 = scmp.eq.s32.totalorder %s17, 1
    %p140 = scmp.ne.s32.totalorder %s135, %s137
    %p141 = scmp.eq.s32.totalorder %s17, 0
    %p142 = por %p140, %p141
    %p143 = scmp.ne.s32.totalorder %s135, %s137
    %p144 = scmp.eq.s32.totalorder %s22, 1
    %p145 = por %p143, %p144
    %p146 = scmp.ne.s32.totalorder %s137, %s138
    %p147 = scmp.eq.s32.totalorder %s22, 0
    %p148 = por %p146, %p147
    %p149 = scmp.ne.s32.totalorder %s137, %s138
    %p150 = scmp.eq.s32.totalorder %s23, 1
    %p151 = por %p149, %p150
    %p153 = scmp.ne.s32.totalorder %s138, %s152
    %p154 = scmp.eq.s32.totalorder %s23, 0
    %p155 = por %p153, %p154
    %s157 = sadd.s32 %s156, 1
    %p160 = scmp.eq.s32.totalorder %s17, 1
    %p161 = scmp.ne.s32.totalorder %s156, %s158
    %p162 = scmp.eq.s32.totalorder %s17, 0
    %p163 = por %p161, %p162
    %p164 = scmp.ne.s32.totalorder %s156, %s158
    %p165 = scmp.eq.s32.totalorder %s22, 1
    %p166 = por %p164, %p165
    %p167 = scmp.ne.s32.totalorder %s158, %s159
    %p168 = scmp.eq.s32.totalorder %s22, 0
    %p169 = por %p167, %p168
    %p170 = scmp.ne.s32.totalorder %s158, %s159
    %p171 = scmp.eq.s32.totalorder %s23, 1
    %p172 = por %p170, %p171
    %p174 = scmp.ne.s32.totalorder %s159, %s173
    %p175 = scmp.eq.s32.totalorder %s23, 0
    %p176 = por %p174, %p175
    %s178 = sadd.s32 %s177, 1
    %p181 = scmp.eq.s32.totalorder %s17, 1
    %p182 = scmp.ne.s32.totalorder %s177, %s179
    %p183 = scmp.eq.s32.totalorder %s17, 0
    %p184 = por %p182, %p183
    %p185 = scmp.ne.s32.totalorder %s177, %s179
    %p186 = scmp.eq.s32.totalorder %s22, 1
    %p187 = por %p185, %p186
    %p188 = scmp.ne.s32.totalorder %s179, %s180
    %p189 = scmp.eq.s32.totalorder %s22, 0
    %p190 = por %p188, %p189
    %p191 = scmp.ne.s32.totalorder %s179, %s180
    %p192 = scmp.eq.s32.totalorder %s23, 1
    %p193 = por %p191, %p192
    %p195 = scmp.ne.s32.totalorder %s180, %s194
    %p196 = scmp.eq.s32.totalorder %s23, 0
    %p197 = por %p195, %p196
    %s199 = sadd.s32 %s198, 1
    %p202 = scmp.eq.s32.totalorder %s17, 1
    %p203 = scmp.ne.s32.totalorder %s198, %s200
    %p204 = scmp.eq.s32.totalorder %s17, 0
    %p205 = por %p203, %p204
    %p206 = scmp.ne.s32.totalorder %s198, %s200
    %p207 = scmp.eq.s32.totalorder %s22, 1
    %p208 = por %p206, %p207
    %p209 = scmp.ne.s32.totalorder %s200, %s201
    %p210 = scmp.eq.s32.totalorder %s22, 0
    %p211 = por %p209, %p210
    %p212 = scmp.ne.s32.totalorder %s200, %s201
    %p213 = scmp.eq.s32.totalorder %s23, 1
    %p214 = por %p212, %p213
    %p216 = scmp.ne.s32.totalorder %s201, %s215
    %p217 = scmp.eq.s32.totalorder %s23, 0
    %p218 = por %p216, %p217
    %s220 = sadd.s32 %s219, 1
    %p223 = scmp.eq.s32.totalorder %s17, 1
    %p224 = scmp.ne.s32.totalorder %s219, %s221
    %p225 = scmp.eq.s32.totalorder %s17, 0
    %p226 = por %p224, %p225
    %p227 = scmp.ne.s32.totalorder %s219, %s221
    %p228 = scmp.eq.s32.totalorder %s22, 1
    %p229 = por %p227, %p228
    %p230 = scmp.ne.s32.totalorder %s221, %s222
    %p231 = scmp.eq.s32.totalorder %s22, 0
    %p232 = por %p230, %p231
    %p233 = scmp.ne.s32.totalorder %s221, %s222
    %p234 = scmp.eq.s32.totalorder %s23, 1
    %p235 = por %p233, %p234
    %p237 = scmp.ne.s32.totalorder %s222, %s236
    %p238 = scmp.eq.s32.totalorder %s23, 0
    %p239 = por %p237, %p238
    %s241 = sadd.s32 %s240, 1
    %p244 = scmp.eq.s32.totalorder %s17, 1
    %p245 = scmp.ne.s32.totalorder %s240, %s242
    %p246 = scmp.eq.s32.totalorder %s17, 0
    %p247 = por %p245, %p246
    %p248 = scmp.ne.s32.totalorder %s240, %s242
    %p249 = scmp.eq.s32.totalorder %s22, 1
    %p250 = por %p248, %p249
    %p251 = scmp.ne.s32.totalorder %s242, %s243
    %p252 = scmp.eq.s32.totalorder %s22, 0
    %p253 = por %p251, %p252
    %p254 = scmp.ne.s32.totalorder %s242, %s243
    %p255 = scmp.eq.s32.totalorder %s23, 1
    %p256 = por %p254, %p255
    %p258 = scmp.ne.s32.totalorder %s243, %s257
    %p259 = scmp.eq.s32.totalorder %s23, 0
    %p260 = por %p258, %p259
    %s261 = ssub.s32 %s17, %s24
    %p262 = scmp.eq.s32.totalorder %s261, 0
    %s264 = sadd.s32 %s263, 1
    %s265 = scalar_select %p262, %s263, %s264
    %p268 = pneg %p262
    %p269 = scmp.eq.s32.totalorder %s17, 1
    %p270 = por %p268, %p269
    %p271 = scmp.ne.s32.totalorder %s263, %s266
    %p272 = scmp.eq.s32.totalorder %s17, 0
    %p273 = por %p271, %p272
    %p274 = scmp.ne.s32.totalorder %s263, %s266
    %p275 = scmp.eq.s32.totalorder %s22, 1
    %p276 = por %p274, %p275
    %p277 = scmp.ne.s32.totalorder %s266, %s267
    %p278 = scmp.eq.s32.totalorder %s22, 0
    %p279 = por %p277, %p278
    %p280 = scmp.ne.s32.totalorder %s266, %s267
    %p281 = scmp.eq.s32.totalorder %s23, 1
    %p282 = por %p280, %p281
    %p284 = scmp.ne.s32.totalorder %s267, %s283
    %p285 = scmp.eq.s32.totalorder %s23, 0
    %p286 = por %p284, %p285
    %p287 = scmp.le.s32.totalorder 1, %s17
    %p288 = scmp.lt.s32.totalorder %s17, 3
    %p289 = pnand %p287, %p288
    %p290 = pneg %p289
    // Predicated region
    $region9: #{run.7} parent=5 // pred_check
      _
    $region10: #{run.7} parent=5 // pred_check_branch
      %292 = sbr.rel (%p289) target = $region12
    $region11: #{run.7} parent=5 // pred_region
      %s293 = ssub.s32 %s17, 1
      // Predicated region
      $region13: #{run.7} parent=11 // pred_check
        %p294 = pneg %p64
      $region14: #{run.7} parent=11 // pred_check_branch
        %296 = sbr.rel (%p294) target = $region16
      $region15: #{run.7} parent=11 // pred_region
        _
      $region16: #{run.7} parent=11 // pred_fallthru
        _
      // Predicated region
      $region17: #{run.7} parent=11 // pred_check
        %p297 = pneg %p85
      $region18: #{run.7} parent=11 // pred_check_branch
        %299 = sbr.rel (%p297) target = $region20
      $region19: #{run.7} parent=11 // pred_region
        _
      $region20: #{run.7} parent=11 // pred_fallthru
        _
      // Predicated region
      $region21: #{run.7} parent=11 // pred_check
        %p300 = pneg %p106
      $region22: #{run.7} parent=11 // pred_check_branch
        %302 = sbr.rel (%p300) target = $region24
      $region23: #{run.7} parent=11 // pred_region
        _
      $region24: #{run.7} parent=11 // pred_fallthru
        _
      // Predicated region
      $region25: #{run.7} parent=11 // pred_check
        %p303 = pneg %p127
      $region26: #{run.7} parent=11 // pred_check_branch
        %305 = sbr.rel (%p303) target = $region28
      $region27: #{run.7} parent=11 // pred_region
        _
      $region28: #{run.7} parent=11 // pred_fallthru
        _
      // Predicated region
      $region29: #{run.7} parent=11 // pred_check
        %p306 = pneg %p148
      $region30: #{run.7} parent=11 // pred_check_branch
        %308 = sbr.rel (%p306) target = $region32
      $region31: #{run.7} parent=11 // pred_region
        _
      $region32: #{run.7} parent=11 // pred_fallthru
        _
      // Predicated region
      $region33: #{run.7} parent=11 // pred_check
        %p309 = pneg %p169
      $region34: #{run.7} parent=11 // pred_check_branch
        %311 = sbr.rel (%p309) target = $region36
      $region35: #{run.7} parent=11 // pred_region
        _
      $region36: #{run.7} parent=11 // pred_fallthru
        _
      // Predicated region
      $region37: #{run.7} parent=11 // pred_check
        %p312 = pneg %p190
      $region38: #{run.7} parent=11 // pred_check_branch
        %314 = sbr.rel (%p312) target = $region40
      $region39: #{run.7} parent=11 // pred_region
        _
      $region40: #{run.7} parent=11 // pred_fallthru
        _
      // Predicated region
      $region41: #{run.7} parent=11 // pred_check
        %p315 = pneg %p211
      $region42: #{run.7} parent=11 // pred_check_branch
        %317 = sbr.rel (%p315) target = $region44
      $region43: #{run.7} parent=11 // pred_region
        _
      $region44: #{run.7} parent=11 // pred_fallthru
        _
      // Predicated region
      $region45: #{run.7} parent=11 // pred_check
        %p318 = pneg %p232
      $region46: #{run.7} parent=11 // pred_check_branch
        %320 = sbr.rel (%p318) target = $region48
      $region47: #{run.7} parent=11 // pred_region
        _
      $region48: #{run.7} parent=11 // pred_fallthru
        _
      // Predicated region
      $region49: #{run.7} parent=11 // pred_check
        %p321 = pneg %p253
      $region50: #{run.7} parent=11 // pred_check_branch
        %323 = sbr.rel (%p321) target = $region52
      $region51: #{run.7} parent=11 // pred_region
        _
      $region52: #{run.7} parent=11 // pred_fallthru
        _
    $region12: #{run.7} parent=5 // pred_fallthru
      _
    %p324 = scmp.lt.s32.totalorder %s17, 2
    // Predicated region
    $region53: #{run.7} parent=5 // pred_check
      %p325 = pneg %p324
    $region54: #{run.7} parent=5 // pred_check_branch
      %327 = sbr.rel (%p325) target = $region56
    $region55: #{run.7} parent=5 // pred_region
      // Predicated region
      $region57: #{run.7} parent=55 // pred_check
        %p328 = pneg %p37
      $region58: #{run.7} parent=55 // pred_check_branch
        %330 = sbr.rel (%p328) target = $region60
      $region59: #{run.7} parent=55 // pred_region
        %p331 = scmp.lt.s32.totalorder %s17, 1
        %s332 = scalar_select %p331, %s17, 1
        %s333 = smul.addr %s332, 2
        %s334 = smul.addr %s333, 8
        %s335 = scalar_lea.vmem %s0, %s334
      $region60: #{run.7} parent=55 // pred_fallthru
        _
    $region56: #{run.7} parent=5 // pred_fallthru
      _
    %p336 = scmp.le.s32.totalorder 1, %s17
    %p337 = scmp.lt.s32.totalorder %s17, 3
    %p338 = pnand %p336, %p337
    %p339 = pneg %p338
    // Predicated region
    $region61: #{run.7} parent=5 // pred_check
      _
    $region62: #{run.7} parent=5 // pred_check_branch
      %341 = sbr.rel (%p338) target = $region64
    $region63: #{run.7} parent=5 // pred_region
      %s342 = ssub.s32 %s17, 1
      %p343 = scmp.lt.s32.totalorder %s22, 1
      %s344 = scalar_select %p343, %s22, 1
      %s345 = smul.addr %s344, 2
      %s346 = smul.addr %s345, 8
      %s347 = scalar_lea.vmem %s0, %s346
      %p348 = pneg %p43
      %p349 = pneg %p40
      %p350 = pneg %p64
      %p351 = pneg %p61
      %p352 = pneg %p85
      %p353 = pneg %p82
      %p354 = pneg %p106
      %p355 = pneg %p103
      %p356 = pneg %p127
      %p357 = pneg %p124
      %p358 = pneg %p148
      %p359 = pneg %p145
      %p360 = pneg %p169
      %p361 = pneg %p166
      %p362 = pneg %p190
      %p363 = pneg %p187
      %p364 = pneg %p211
      %p365 = pneg %p208
      %p366 = pneg %p232
      %p367 = pneg %p229
      %p368 = pneg %p253
      %p369 = pneg %p250
      %p370 = pneg %p279
      %p371 = pneg %p276
      %p372 = scmp.lt.s32.totalorder %s22, 1
      %s373 = scalar_select %p372, %s22, 1
      %s374 = smul.addr %s373, 8
      %s375 = scalar_lea.vmem %s11, %s374
      %p376 = scmp.lt.s32.totalorder %s22, 1
      %s377 = scalar_select %p376, %s22, 1
      %s378 = smul.addr %s377, 2
      %s379 = smul.addr %s378, 8
      %s380 = scalar_lea.vmem %s0, %s379
      %p381 = scmp.lt.s32.totalorder %s22, 1
      %s382 = scalar_select %p381, %s22, 1
      %s383 = smul.addr %s382, 8
      %s384 = scalar_lea.vmem %s11, %s383
      %v386 = vld [vmem:[%s380] sm:$0xff]
      %v387 = vld [vmem:[%s380 + $0x8] sm:$0xff]
      %v388 = vld [vmem:[%s1] sm:$0xf]
      %v389 = vld [vmem:[%s1 + $0x4] sm:$0xf]
      %v390 = vld [vmem:[%s1 + $0x8] sm:$0xf]
      %v391 = vld [vmem:[%s1 + $0xc] sm:$0xf]
      %v392 = vpack.c.bf16 %v387, %v386
      %v397 = vunpack.c.l.b16 %v388
      %v398 = vunpack.c.l.b16 %v389
      %v399 = vunpack.c.l.b16 %v390
      %v400 = vunpack.c.l.b16 %v391
      %v401 = vpack.c.b16 %v398, %v397
      %v402 = vpack.c.b16 %v400, %v399
      %vm405 = vcmask 261120
      %v407 = vsel %vm405, %v392, 0
      %409 = vmatprep.subr.bf16.mxu0 0
      %410 = vmatpush1.bf16.msra.mxu0 %v401
      %411 = vmatprep.subr.bf16.mxu0 0
      %412 = vmatpush1.bf16.msra.mxu0 %v402
      %413 = vmatprep.subr.bf16.mxu0 0
      %414 = vmatpush1.bf16.msra.mxu0 0
      %415 = vmatprep.subr.bf16.mxu0 0
      %416 = vmatpush1.bf16.msra.mxu0 0
      %417 = vmatprep.subr.bf16.mxu0 0
      %418 = vmatpush1.bf16.msra.mxu0 0
      %419 = vmatprep.subr.bf16.mxu0 0
      %420 = vmatpush1.bf16.msra.mxu0 0
      %421 = vmatprep.subr.bf16.mxu0 0
      %422 = vmatpush1.bf16.msra.mxu0 0
      %423 = vmatprep.subr.bf16.mxu0 0
      %424 = vmatpush1.bf16.msra.mxu0 0
      %425 = vmatprep.subr.bf16.mxu0 0
      %426 = vmatpush1.bf16.msra.mxu0 0
      %427 = vmatprep.subr.bf16.mxu0 0
      %428 = vmatpush1.bf16.msra.mxu0 0
      %429 = vmatprep.subr.bf16.mxu0 0
      %430 = vmatpush1.bf16.msra.mxu0 0
      %431 = vmatprep.subr.bf16.mxu0 0
      %432 = vmatpush1.bf16.msra.mxu0 0
      %433 = vmatprep.subr.bf16.mxu0 0
      %434 = vmatpush1.bf16.msra.mxu0 0
      %435 = vmatprep.subr.bf16.mxu0 0
      %436 = vmatpush1.bf16.msra.mxu0 0
      %437 = vmatprep.subr.bf16.mxu0 0
      %438 = vmatpush1.bf16.msra.mxu0 0
      %439 = vmatprep.subr.bf16.mxu0 0
      %440 = vmatpush1.bf16.msra.mxu0 0
      %441 = vmatprep.mubr.bf16.mxu0 0
      %442 = vmatmul.mubr.bf16.gmra.mrb[0].mxu0 %v407
      %v443 = vpop.f32.mrb[0].mxu0
      %v444 = vadd.f32 0.0, %v443
      %v445 = vpop.f32.mrb[0].mxu0
      %v446 = vpop.f32.mrb[0].mxu0
      %v447 = vadd.f32 0.0, %v446
      %v448 = vpop.f32.mrb[0].mxu0
      %449 = vdwg.mxu0
      %vm450 = vcmask 518144
      %451 = vst.msk [vmem:[#allocation2] sm:$0x7] %vm450, 0.0
      %vm452 = vcmask 523264
      %453 = vst.msk [vmem:[#allocation2 + $0x3] sm:$0xff] %vm452, %v444
      %454 = vst.msk [vmem:[#allocation2 + $0xb] sm:$0xff] %vm452, %v447
      %v455 = vld [vmem:[%s3] sm:$0xf]
      %v456 = vld [vmem:[#allocation2] sm:$0xff]
      %v457 = vld [vmem:[#allocation2 + $0x8] sm:$0xff]
      %v458 = vlaneseq
      %v459 = vshrl.u32 %v458, 7
      %v460 = vsub.s32 0, %v459
      %v461 = vrot.slane %v455, %v460
      %v462 = vmul.f32 %v456, %v461
      %v463 = vmul.f32 %v457, %v461
      %v464 = vadd.f32 %v462, 0.0
      %v465 = vadd.f32 %v463, 0.0
      %v466 = vld [vmem:[#allocation2 + $0x1] sm:$0xff]
      %v467 = vld [vmem:[#allocation2 + $0x9] sm:$0xff]
      %v468 = vlaneseq
      %v469 = vshrl.u32 %v468, 7
      %v470 = vsub.s32 1, %v469
      %v471 = vrot.slane %v455, %v470
      %v472 = vmul.f32 %v466, %v471
      %v473 = vmul.f32 %v467, %v471
      %v474 = vadd.f32 %v464, %v472
      %v475 = vadd.f32 %v465, %v473
      %v476 = vld [vmem:[#allocation2 + $0x2] sm:$0xff]
      %v477 = vld [vmem:[#allocation2 + $0xa] sm:$0xff]
      %v478 = vlaneseq
      %v479 = vshrl.u32 %v478, 7
      %v480 = vsub.s32 2, %v479
      %v481 = vrot.slane %v455, %v480
      %v482 = vmul.f32 %v476, %v481
      %v483 = vmul.f32 %v477, %v481
      %v484 = vadd.f32 %v474, %v482
      %v485 = vadd.f32 %v475, %v483
      %v486 = vld [vmem:[#allocation2 + $0x3] sm:$0xff]
      %v487 = vld [vmem:[#allocation2 + $0xb] sm:$0xff]
      %v488 = vlaneseq
      %v489 = vshrl.u32 %v488, 7
      %v490 = vsub.s32 3, %v489
      %v491 = vrot.slane %v455, %v490
      %v492 = vmul.f32 %v486, %v491
      %v493 = vmul.f32 %v487, %v491
      %v494 = vadd.f32 %v484, %v492
      %v495 = vadd.f32 %v485, %v493
      %v496 = vld [vmem:[%s4] sm:$0x1]
      %v498 = vlaneseq
      %v499 = vshrl.u32 %v498, 7
      %v500 = vsub.s32 0, %v499
      %v501 = vrot.slane %v496, %v500
      %v503 = vadd.f32 %v494, %v501
      %v504 = vadd.f32 %v495, %v501
      %v505 = vxor.u32 %v503, 2147483648
      %v506 = vxor.u32 %v504, 2147483648
      %v507 = vmul.f32 %v505, 1.442695
      %v508 = vpow.pop %v507
      %v509 = vmul.f32 %v506, 1.442695
      %v510 = vpow.pop %v509
      %v511 = vadd.f32 %v508, 1.0
      %v512 = vadd.f32 %v510, 1.0
      %v513 = vrcp.pop %v511
      %v514 = vmul.f32 1.0, %v513
      %v515 = vrcp.pop %v512
      %v516 = vmul.f32 1.0, %v515
      %v517 = vmul.f32 %v503, %v514
      %v518 = vmul.f32 %v504, %v516
      %519 = vst.msk [vmem:[#allocation3] sm:$0xff] %vm452, %v517
      %520 = vst.msk [vmem:[#allocation3 + $0x8] sm:$0xff] %vm452, %v518
      %v521 = vld [vmem:[%s5] sm:$0xff]
      %v522 = vld [vmem:[%s5 + $0x8] sm:$0xff]
      %v523 = vld [vmem:[%s5 + $0x10] sm:$0xff]
      %v524 = vld [vmem:[%s5 + $0x18] sm:$0xff]
      %v525 = vld [vmem:[%s5 + $0x20] sm:$0xff]
      %v526 = vld [vmem:[%s5 + $0x28] sm:$0xff]
      %v527 = vld [vmem:[%s5 + $0x30] sm:$0xff]
      %v528 = vld [vmem:[%s5 + $0x38] sm:$0xff]
      %v530 = vsel %vm452, %v517, 0
      %v533 = vsel %vm452, %v518, 0
      %535 = vmatprep.subr.mxu0 0.0
      %536 = vmatpush1.msra.mxu0 %v521
      %537 = vmatprep.subr.mxu0 0.0
      %538 = vmatpush1.msra.mxu0 %v522
      %539 = vmatprep.subr.mxu0 0.0
      %540 = vmatpush1.msra.mxu0 %v523
      %541 = vmatprep.subr.mxu0 0.0
      %542 = vmatpush1.msra.mxu0 %v524
      %543 = vmatprep.subr.mxu0 0.0
      %544 = vmatpush1.msra.mxu0 %v525
      %545 = vmatprep.subr.mxu0 0.0
      %546 = vmatpush1.msra.mxu0 %v526
      %547 = vmatprep.subr.mxu0 0.0
      %548 = vmatpush1.msra.mxu0 %v527
      %549 = vmatprep.subr.mxu0 0.0
      %550 = vmatpush1.msra.mxu0 %v528
      %551 = vmatprep.subr.mxu0 0.0
      %552 = vmatpush1.msra.mxu0 0.0
      %553 = vmatprep.subr.mxu0 0.0
      %554 = vmatpush1.msra.mxu0 0.0
      %555 = vmatprep.subr.mxu0 0.0
      %556 = vmatpush1.msra.mxu0 0.0
      %557 = vmatprep.subr.mxu0 0.0
      %558 = vmatpush1.msra.mxu0 0.0
      %559 = vmatprep.subr.mxu0 0.0
      %560 = vmatpush1.msra.mxu0 0.0
      %561 = vmatprep.subr.mxu0 0.0
      %562 = vmatpush1.msra.mxu0 0.0
      %563 = vmatprep.subr.mxu0 0.0
      %564 = vmatpush1.msra.mxu0 0.0
      %565 = vmatprep.subr.mxu0 0.0
      %566 = vmatpush1.msra.mxu0 0.0
      %567 = vmatprep.subr.mxu0 0.0
      %568 = vmatpush1.msra.mxu0 0.0
      %569 = vmatprep.subr.mxu0 0.0
      %570 = vmatpush1.msra.mxu0 0.0
      %571 = vmatprep.subr.mxu0 0.0
      %572 = vmatpush1.msra.mxu0 0.0
      %573 = vmatprep.subr.mxu0 0.0
      %574 = vmatpush1.msra.mxu0 0.0
      %575 = vmatprep.subr.mxu0 0.0
      %576 = vmatpush1.msra.mxu0 0.0
      %577 = vmatprep.subr.mxu0 0.0
      %578 = vmatpush1.msra.mxu0 0.0
      %579 = vmatprep.subr.mxu0 0.0
      %580 = vmatpush1.msra.mxu0 0.0
      %581 = vmatprep.subr.mxu0 0.0
      %582 = vmatpush1.msra.mxu0 0.0
      %583 = vmatprep.subr.mxu0 0.0
      %584 = vmatpush1.msra.mxu0 0.0
      %585 = vmatprep.subr.mxu0 0.0
      %586 = vmatpush1.msra.mxu0 0.0
      %587 = vmatprep.subr.mxu0 0.0
      %588 = vmatpush1.msra.mxu0 0.0
      %589 = vmatprep.subr.mxu0 0.0
      %590 = vmatpush1.msra.mxu0 0.0
      %591 = vmatprep.subr.mxu0 0.0
      %592 = vmatpush1.msra.mxu0 0.0
      %593 = vmatprep.subr.mxu0 0.0
      %594 = vmatpush1.msra.mxu0 0.0
      %595 = vmatprep.subr.mxu0 0.0
      %596 = vmatpush1.msra.mxu0 0.0
      %597 = vmatprep.subr.mxu0 0.0
      %598 = vmatpush1.msra.mxu0 0.0
      %599 = vmatprep.mubr.f32.mxu0 0.0
      %600 = vmatmul.mubr.f32.gmra.mrb[0].mxu0 %v530
      %v601 = vpop.f32.mrb[0].mxu0
      %v602 = vadd.f32 0.0, %v601
      %v603 = vpop.f32.mrb[0].mxu0
      %604 = vmatprep.mubr.f32.mxu0 0.0
      %605 = vmatmul.mubr.f32.gmra.mrb[0].mxu0 %v533
      %v606 = vpop.f32.mrb[0].mxu0
      %v607 = vadd.f32 0.0, %v606
      %v608 = vpop.f32.mrb[0].mxu0
      %609 = vdwg.mxu0
      %v610 = vld [vmem:[%s6] sm:$0x3]
      %v611 = vld [vmem:[%s7] sm:$0x1]
      %v613 = vlaneseq
      %v614 = vshrl.u32 %v613, 7
      %v615 = vsub.s32 0, %v614
      %v616 = vrot.slane %v611, %v615
      %vm618 = vcmask 15360
      %v620 = vsel %vm618, %v602, 0
      %v623 = vsel %vm618, %v607, 0
      %vm625 = vcmask 1041408
      %v627 = vsel %vm625, %v610, 0
      %629 = vmatprep.subr.mxu0 0.0
      %630 = vmatpush1.msra.mxu0 %v627
      %631 = vmatprep.subr.mxu0 0.0
      %632 = vmatpush1.msra.mxu0 0.0
      %633 = vmatprep.subr.mxu0 0.0
      %634 = vmatpush1.msra.mxu0 0.0
      %635 = vmatprep.subr.mxu0 0.0
      %636 = vmatpush1.msra.mxu0 0.0
      %637 = vmatprep.subr.mxu0 0.0
      %638 = vmatpush1.msra.mxu0 0.0
      %639 = vmatprep.subr.mxu0 0.0
      %640 = vmatpush1.msra.mxu0 0.0
      %641 = vmatprep.subr.mxu0 0.0
      %642 = vmatpush1.msra.mxu0 0.0
      %643 = vmatprep.subr.mxu0 0.0
      %644 = vmatpush1.msra.mxu0 0.0
      %645 = vmatprep.subr.mxu0 0.0
      %646 = vmatpush1.msra.mxu0 0.0
      %647 = vmatprep.subr.mxu0 0.0
      %648 = vmatpush1.msra.mxu0 0.0
      %649 = vmatprep.subr.mxu0 0.0
      %650 = vmatpush1.msra.mxu0 0.0
      %651 = vmatprep.subr.mxu0 0.0
      %652 = vmatpush1.msra.mxu0 0.0
      %653 = vmatprep.subr.mxu0 0.0
      %654 = vmatpush1.msra.mxu0 0.0
      %655 = vmatprep.subr.mxu0 0.0
      %656 = vmatpush1.msra.mxu0 0.0
      %657 = vmatprep.subr.mxu0 0.0
      %658 = vmatpush1.msra.mxu0 0.0
      %659 = vmatprep.subr.mxu0 0.0
      %660 = vmatpush1.msra.mxu0 0.0
      %661 = vmatprep.subr.mxu0 0.0
      %662 = vmatpush1.msra.mxu0 0.0
      %663 = vmatprep.subr.mxu0 0.0
      %664 = vmatpush1.msra.mxu0 0.0
      %665 = vmatprep.subr.mxu0 0.0
      %666 = vmatpush1.msra.mxu0 0.0
      %667 = vmatprep.subr.mxu0 0.0
      %668 = vmatpush1.msra.mxu0 0.0
      %669 = vmatprep.subr.mxu0 0.0
      %670 = vmatpush1.msra.mxu0 0.0
      %671 = vmatprep.subr.mxu0 0.0
      %672 = vmatpush1.msra.mxu0 0.0
      %673 = vmatprep.subr.mxu0 0.0
      %674 = vmatpush1.msra.mxu0 0.0
      %675 = vmatprep.subr.mxu0 0.0
      %676 = vmatpush1.msra.mxu0 0.0
      %677 = vmatprep.subr.mxu0 0.0
      %678 = vmatpush1.msra.mxu0 0.0
      %679 = vmatprep.subr.mxu0 0.0
      %680 = vmatpush1.msra.mxu0 0.0
      %681 = vmatprep.subr.mxu0 0.0
      %682 = vmatpush1.msra.mxu0 0.0
      %683 = vmatprep.subr.mxu0 0.0
      %684 = vmatpush1.msra.mxu0 0.0
      %685 = vmatprep.subr.mxu0 0.0
      %686 = vmatpush1.msra.mxu0 0.0
      %687 = vmatprep.subr.mxu0 0.0
      %688 = vmatpush1.msra.mxu0 0.0
      %689 = vmatprep.subr.mxu0 0.0
      %690 = vmatpush1.msra.mxu0 0.0
      %691 = vmatprep.subr.mxu0 0.0
      %692 = vmatpush1.msra.mxu0 0.0
      %693 = vmatprep.mubr.f32.mxu0 0.0
      %694 = vmatmul.mubr.f32.gmra.mrb[0].mxu0 %v620
      %v695 = vpop.f32.mrb[0].mxu0
      %v696 = vadd.f32 %v616, %v695
      %v697 = vpop.f32.mrb[0].mxu0
      %698 = vmatprep.mubr.f32.mxu0 0.0
      %699 = vmatmul.mubr.f32.gmra.mrb[0].mxu0 %v623
      %v700 = vpop.f32.mrb[0].mxu0
      %v701 = vadd.f32 %v616, %v700
      %v702 = vpop.f32.mrb[0].mxu0
      %703 = vdwg.mxu0
      %v704 = vmax.f32 %v696, 0.0
      %v705 = vmax.f32 %v701, 0.0
      %v706 = vand.u32 2147483647, %v696
      %v707 = vand.u32 2147483647, %v701
      %v708 = vsub.f32 0.0, %v706
      %v709 = vsub.f32 0.0, %v707
      %v710 = vmul.f32 %v708, 1.442695
      %v711 = vpow.pop %v710
      %v712 = vmul.f32 %v709, 1.442695
      %v713 = vpow.pop %v712
      %v714 = vadd.f32 %v711, 1.0
      %v715 = vadd.f32 %v713, 1.0
      %v716 = vlog2.pop %v714
      %v717 = vmul.f32 %v716, 0.6931472
      %v718 = vlog2.pop %v715
      %v719 = vmul.f32 %v718, 0.6931472
      %v720 = vadd.f32 %v704, %v717
      %v721 = vadd.f32 %v705, %v719
      %722 = vst.msk [vmem:[#allocation4] sm:$0xff] %vm452, %v720
      %723 = vst.msk [vmem:[#allocation4 + $0x8] sm:$0xff] %vm452, %v721
      %724 = vrot.lane.b32.xlu0 %v602, 126
      %v725 = vpop.permute.xlu0 %724
      %726 = vrot.lane.b32.xlu0 %v607, 126
      %v727 = vpop.permute.xlu0 %726
      %vm730 = vcmask 130048
      %731 = vst.msk [vmem:[#allocation5] sm:$0xff] %vm730, %v725
      %732 = vst.msk [vmem:[#allocation5 + $0x8] sm:$0xff] %vm730, %v727
      %733 = vrot.lane.b32.xlu0 %v602, 110
      %v734 = vpop.permute.xlu0 %733
      %735 = vrot.lane.b32.xlu0 %v607, 110
      %v736 = vpop.permute.xlu0 %735
      %739 = vst.msk [vmem:[#allocation6] sm:$0xff] %vm730, %v734
      %740 = vst.msk [vmem:[#allocation6 + $0x8] sm:$0xff] %vm730, %v736
      %v741 = vld [vmem:[%s8] sm:$0xff]
      %v742 = vld [vmem:[%s8 + $0x8] sm:$0xff]
      %v743 = vld [vmem:[%s9] sm:$0x1]
      %v744 = vld [vmem:[#allocation4] sm:$0xff]
      %v745 = vld [vmem:[#allocation4 + $0x8] sm:$0xff]
      %v746 = vld [vmem:[#allocation3] sm:$0xff]
      %v747 = vld [vmem:[#allocation3 + $0x8] sm:$0xff]
      %v748 = vld [vmem:[#allocation5] sm:$0xff]
      %v749 = vld [vmem:[#allocation5 + $0x8] sm:$0xff]
      %v750 = vmul.f32 %v744, %v746
      %v751 = vmul.f32 %v745, %v747
      %v752 = vlaneseq
      %v753 = vshrl.u32 %v752, 7
      %v754 = vsub.s32 0, %v753
      %v755 = vrot.slane %v741, %v754
      %v756 = vmul.f32 %v744, %v755
      %v757 = vmul.f32 %v745, %v755
      %v758 = vmul.f32 %v756, 1.442695
      %v759 = vpow.pop %v758
      %v760 = vmul.f32 %v757, 1.442695
      %v761 = vpow.pop %v760
      %762 = vst [vmem:[#allocation8] ss:$16 sm:$0x3] %v759
      %763 = vst [vmem:[#allocation8] ss:$16 sm:$0xc] %v759
      %764 = vst [vmem:[#allocation8] ss:$16 sm:$0x30] %v759
      %765 = vst [vmem:[#allocation8] ss:$16 sm:$0xc0] %v759
      %s766 = scalar_lea.vmem [#allocation8], 128
      %767 = vst [vmem:[%s766] ss:$16 sm:$0x3] %v761
      %768 = vst [vmem:[%s766] ss:$16 sm:$0xc] %v761
      %769 = vst [vmem:[%s766] ss:$16 sm:$0x30] %v761
      %770 = vst [vmem:[%s766] ss:$16 sm:$0xc0] %v761
      %772 = vset.pattern.permute.xlu0 0
      %773 = vperm.xlu0 %772, %v748
      %v774 = vpop.permute.xlu0 %773
      %777 = vset.pattern.permute.xlu0 0
      %778 = vperm.xlu0 %777, %v749
      %v779 = vpop.permute.xlu0 %778
      %v781 = vmul.f32 %v774, %v750
      %v782 = vmul.f32 %v779, %v751
      %783 = vst [vmem:[#allocation9] ss:$16 sm:$0x3] %v781
      %784 = vst [vmem:[#allocation9] ss:$16 sm:$0xc] %v781
      %785 = vst [vmem:[#allocation9] ss:$16 sm:$0x30] %v781
      %786 = vst [vmem:[#allocation9] ss:$16 sm:$0xc0] %v781
      %s787 = scalar_lea.vmem [#allocation9], 128
      %788 = vst [vmem:[%s787] ss:$16 sm:$0x3] %v782
      %789 = vst [vmem:[%s787] ss:$16 sm:$0xc] %v782
      %790 = vst [vmem:[%s787] ss:$16 sm:$0x30] %v782
      %791 = vst [vmem:[%s787] ss:$16 sm:$0xc0] %v782
      %v792 = vlaneseq
      %v793 = vshrl.u32 %v792, 7
      %v794 = vsub.s32 1, %v793
      %v795 = vrot.slane %v741, %v794
      %v796 = vmul.f32 %v744, %v795
      %v797 = vmul.f32 %v745, %v795
      %v798 = vmul.f32 %v796, 1.442695
      %v799 = vpow.pop %v798
      %v800 = vmul.f32 %v797, 1.442695
      %v801 = vpow.pop %v800
      %s802 = scalar_lea.vmem [#allocation8], 1
      %803 = vst [vmem:[%s802] ss:$16 sm:$0x3] %v799
      %804 = vst [vmem:[%s802] ss:$16 sm:$0xc] %v799
      %805 = vst [vmem:[%s802] ss:$16 sm:$0x30] %v799
      %806 = vst [vmem:[%s802] ss:$16 sm:$0xc0] %v799
      %s807 = scalar_lea.vmem [#allocation8], 129
      %808 = vst [vmem:[%s807] ss:$16 sm:$0x3] %v801
      %809 = vst [vmem:[%s807] ss:$16 sm:$0xc] %v801
      %810 = vst [vmem:[%s807] ss:$16 sm:$0x30] %v801
      %811 = vst [vmem:[%s807] ss:$16 sm:$0xc0] %v801
      %812 = vset.pattern.permute.xlu0 1
      %813 = vperm.xlu0 %812, %v748
      %v814 = vpop.permute.xlu0 %813
      %816 = vset.pattern.permute.xlu0 1
      %817 = vperm.xlu0 %816, %v749
      %v818 = vpop.permute.xlu0 %817
      %v820 = vmul.f32 %v814, %v750
      %v821 = vmul.f32 %v818, %v751
      %s822 = scalar_lea.vmem [#allocation9], 1
      %823 = vst [vmem:[%s822] ss:$16 sm:$0x3] %v820
      %824 = vst [vmem:[%s822] ss:$16 sm:$0xc] %v820
      %825 = vst [vmem:[%s822] ss:$16 sm:$0x30] %v820
      %826 = vst [vmem:[%s822] ss:$16 sm:$0xc0] %v820
      %s827 = scalar_lea.vmem [#allocation9], 129
      %828 = vst [vmem:[%s827] ss:$16 sm:$0x3] %v821
      %829 = vst [vmem:[%s827] ss:$16 sm:$0xc] %v821
      %830 = vst [vmem:[%s827] ss:$16 sm:$0x30] %v821
      %831 = vst [vmem:[%s827] ss:$16 sm:$0xc0] %v821
      %v832 = vlaneseq
      %v833 = vshrl.u32 %v832, 7
      %v834 = vsub.s32 2, %v833
      %v835 = vrot.slane %v741, %v834
      %v836 = vmul.f32 %v744, %v835
      %v837 = vmul.f32 %v745, %v835
      %v838 = vmul.f32 %v836, 1.442695
      %v839 = vpow.pop %v838
      %v840 = vmul.f32 %v837, 1.442695
      %v841 = vpow.pop %v840
      %s842 = scalar_lea.vmem [#allocation8], 2
      %843 = vst [vmem:[%s842] ss:$16 sm:$0x3] %v839
      %844 = vst [vmem:[%s842] ss:$16 sm:$0xc] %v839
      %845 = vst [vmem:[%s842] ss:$16 sm:$0x30] %v839
      %846 = vst [vmem:[%s842] ss:$16 sm:$0xc0] %v839
      %s847 = scalar_lea.vmem [#allocation8], 130
      %848 = vst [vmem:[%s847] ss:$16 sm:$0x3] %v841
      %849 = vst [vmem:[%s847] ss:$16 sm:$0xc] %v841
      %850 = vst [vmem:[%s847] ss:$16 sm:$0x30] %v841
      %851 = vst [vmem:[%s847] ss:$16 sm:$0xc0] %v841
      %852 = vset.pattern.permute.xlu0 2
      %853 = vperm.xlu0 %852, %v748
      %v854 = vpop.permute.xlu0 %853
      %856 = vset.pattern.permute.xlu0 2
      %857 = vperm.xlu0 %856, %v749
      %v858 = vpop.permute.xlu0 %857
      %v860 = vmul.f32 %v854, %v750
      %v861 = vmul.f32 %v858, %v751
      %s862 = scalar_lea.vmem [#allocation9], 2
      %863 = vst [vmem:[%s862] ss:$16 sm:$0x3] %v860
      %864 = vst [vmem:[%s862] ss:$16 sm:$0xc] %v860
      %865 = vst [vmem:[%s862] ss:$16 sm:$0x30] %v860
      %866 = vst [vmem:[%s862] ss:$16 sm:$0xc0] %v860
      %s867 = scalar_lea.vmem [#allocation9], 130
      %868 = vst [vmem:[%s867] ss:$16 sm:$0x3] %v861
      %869 = vst [vmem:[%s867] ss:$16 sm:$0xc] %v861
      %870 = vst [vmem:[%s867] ss:$16 sm:$0x30] %v861
      %871 = vst [vmem:[%s867] ss:$16 sm:$0xc0] %v861
      %v872 = vlaneseq
      %v873 = vshrl.u32 %v872, 7
      %v874 = vsub.s32 3, %v873
      %v875 = vrot.slane %v741, %v874
      %v876 = vmul.f32 %v744, %v875
      %v877 = vmul.f32 %v745, %v875
      %v878 = vmul.f32 %v876, 1.442695
      %v879 = vpow.pop %v878
      %v880 = vmul.f32 %v877, 1.442695
      %v881 = vpow.pop %v880
      %s882 = scalar_lea.vmem [#allocation8], 3
      %883 = vst [vmem:[%s882] ss:$16 sm:$0x3] %v879
      %884 = vst [vmem:[%s882] ss:$16 sm:$0xc] %v879
      %885 = vst [vmem:[%s882] ss:$16 sm:$0x30] %v879
      %886 = vst [vmem:[%s882] ss:$16 sm:$0xc0] %v879
      %s887 = scalar_lea.vmem [#allocation8], 131
      %888 = vst [vmem:[%s887] ss:$16 sm:$0x3] %v881
      %889 = vst [vmem:[%s887] ss:$16 sm:$0xc] %v881
      %890 = vst [vmem:[%s887] ss:$16 sm:$0x30] %v881
      %891 = vst [vmem:[%s887] ss:$16 sm:$0xc0] %v881
      %892 = vset.pattern.permute.xlu0 3
      %893 = vperm.xlu0 %892, %v748
      %v894 = vpop.permute.xlu0 %893
      %896 = vset.pattern.permute.xlu0 3
      %897 = vperm.xlu0 %896, %v749
      %v898 = vpop.permute.xlu0 %897
      %v900 = vmul.f32 %v894, %v750
      %v901 = vmul.f32 %v898, %v751
      %s902 = scalar_lea.vmem [#allocation9], 3
      %903 = vst [vmem:[%s902] ss:$16 sm:$0x3] %v900
      %904 = vst [vmem:[%s902] ss:$16 sm:$0xc] %v900
      %905 = vst [vmem:[%s902] ss:$16 sm:$0x30] %v900
      %906 = vst [vmem:[%s902] ss:$16 sm:$0xc0] %v900
      %s907 = scalar_lea.vmem [#allocation9], 131
      %908 = vst [vmem:[%s907] ss:$16 sm:$0x3] %v901
      %909 = vst [vmem:[%s907] ss:$16 sm:$0xc] %v901
      %910 = vst [vmem:[%s907] ss:$16 sm:$0x30] %v901
      %911 = vst [vmem:[%s907] ss:$16 sm:$0xc0] %v901
      %v912 = vlaneseq
      %v913 = vshrl.u32 %v912, 7
      %v914 = vsub.s32 4, %v913
      %v915 = vrot.slane %v741, %v914
      %v916 = vmul.f32 %v744, %v915
      %v917 = vmul.f32 %v745, %v915
      %v918 = vmul.f32 %v916, 1.442695
      %v919 = vpow.pop %v918
      %v920 = vmul.f32 %v917, 1.442695
      %v921 = vpow.pop %v920
      %s922 = scalar_lea.vmem [#allocation8], 4
      %923 = vst [vmem:[%s922] ss:$16 sm:$0x3] %v919
      %924 = vst [vmem:[%s922] ss:$16 sm:$0xc] %v919
      %925 = vst [vmem:[%s922] ss:$16 sm:$0x30] %v919
      %926 = vst [vmem:[%s922] ss:$16 sm:$0xc0] %v919
      %s927 = scalar_lea.vmem [#allocation8], 132
      %928 = vst [vmem:[%s927] ss:$16 sm:$0x3] %v921
      %929 = vst [vmem:[%s927] ss:$16 sm:$0xc] %v921
      %930 = vst [vmem:[%s927] ss:$16 sm:$0x30] %v921
      %931 = vst [vmem:[%s927] ss:$16 sm:$0xc0] %v921
      %932 = vset.pattern.permute.xlu0 4
      %933 = vperm.xlu0 %932, %v748
      %v934 = vpop.permute.xlu0 %933
      %936 = vset.pattern.permute.xlu0 4
      %937 = vperm.xlu0 %936, %v749
      %v938 = vpop.permute.xlu0 %937
      %v940 = vmul.f32 %v934, %v750
      %v941 = vmul.f32 %v938, %v751
      %s942 = scalar_lea.vmem [#allocation9], 4
      %943 = vst [vmem:[%s942] ss:$16 sm:$0x3] %v940
      %944 = vst [vmem:[%s942] ss:$16 sm:$0xc] %v940
      %945 = vst [vmem:[%s942] ss:$16 sm:$0x30] %v940
      %946 = vst [vmem:[%s942] ss:$16 sm:$0xc0] %v940
      %s947 = scalar_lea.vmem [#allocation9], 132
      %948 = vst [vmem:[%s947] ss:$16 sm:$0x3] %v941
      %949 = vst [vmem:[%s947] ss:$16 sm:$0xc] %v941
      %950 = vst [vmem:[%s947] ss:$16 sm:$0x30] %v941
      %951 = vst [vmem:[%s947] ss:$16 sm:$0xc0] %v941
      %v952 = vlaneseq
      %v953 = vshrl.u32 %v952, 7
      %v954 = vsub.s32 5, %v953
      %v955 = vrot.slane %v741, %v954
      %v956 = vmul.f32 %v744, %v955
      %v957 = vmul.f32 %v745, %v955
      %v958 = vmul.f32 %v956, 1.442695
      %v959 = vpow.pop %v958
      %v960 = vmul.f32 %v957, 1.442695
      %v961 = vpow.pop %v960
      %s962 = scalar_lea.vmem [#allocation8], 5
      %963 = vst [vmem:[%s962] ss:$16 sm:$0x3] %v959
      %964 = vst [vmem:[%s962] ss:$16 sm:$0xc] %v959
      %965 = vst [vmem:[%s962] ss:$16 sm:$0x30] %v959
      %966 = vst [vmem:[%s962] ss:$16 sm:$0xc0] %v959
      %s967 = scalar_lea.vmem [#allocation8], 133
      %968 = vst [vmem:[%s967] ss:$16 sm:$0x3] %v961
      %969 = vst [vmem:[%s967] ss:$16 sm:$0xc] %v961
      %970 = vst [vmem:[%s967] ss:$16 sm:$0x30] %v961
      %971 = vst [vmem:[%s967] ss:$16 sm:$0xc0] %v961
      %972 = vset.pattern.permute.xlu0 5
      %973 = vperm.xlu0 %972, %v748
      %v974 = vpop.permute.xlu0 %973
      %976 = vset.pattern.permute.xlu0 5
      %977 = vperm.xlu0 %976, %v749
      %v978 = vpop.permute.xlu0 %977
      %v980 = vmul.f32 %v974, %v750
      %v981 = vmul.f32 %v978, %v751
      %s982 = scalar_lea.vmem [#allocation9], 5
      %983 = vst [vmem:[%s982] ss:$16 sm:$0x3] %v980
      %984 = vst [vmem:[%s982] ss:$16 sm:$0xc] %v980
      %985 = vst [vmem:[%s982] ss:$16 sm:$0x30] %v980
      %986 = vst [vmem:[%s982] ss:$16 sm:$0xc0] %v980
      %s987 = scalar_lea.vmem [#allocation9], 133
      %988 = vst [vmem:[%s987] ss:$16 sm:$0x3] %v981
      %989 = vst [vmem:[%s987] ss:$16 sm:$0xc] %v981
      %990 = vst [vmem:[%s987] ss:$16 sm:$0x30] %v981
      %991 = vst [vmem:[%s987] ss:$16 sm:$0xc0] %v981
      %v992 = vlaneseq
      %v993 = vshrl.u32 %v992, 7
      %v994 = vsub.s32 6, %v993
      %v995 = vrot.slane %v741, %v994
      %v996 = vmul.f32 %v744, %v995
      %v997 = vmul.f32 %v745, %v995
      %v998 = vmul.f32 %v996, 1.442695
      %v999 = vpow.pop %v998
      %v1000 = vmul.f32 %v997, 1.442695
      %v1001 = vpow.pop %v1000
      %s1002 = scalar_lea.vmem [#allocation8], 6
      %1003 = vst [vmem:[%s1002] ss:$16 sm:$0x3] %v999
      %1004 = vst [vmem:[%s1002] ss:$16 sm:$0xc] %v999
      %1005 = vst [vmem:[%s1002] ss:$16 sm:$0x30] %v999
      %1006 = vst [vmem:[%s1002] ss:$16 sm:$0xc0] %v999
      %s1007 = scalar_lea.vmem [#allocation8], 134
      %1008 = vst [vmem:[%s1007] ss:$16 sm:$0x3] %v1001
      %1009 = vst [vmem:[%s1007] ss:$16 sm:$0xc] %v1001
      %1010 = vst [vmem:[%s1007] ss:$16 sm:$0x30] %v1001
      %1011 = vst [vmem:[%s1007] ss:$16 sm:$0xc0] %v1001
      %1012 = vset.pattern.permute.xlu0 6
      %1013 = vperm.xlu0 %1012, %v748
      %v1014 = vpop.permute.xlu0 %1013
      %1016 = vset.pattern.permute.xlu0 6
      %1017 = vperm.xlu0 %1016, %v749
      %v1018 = vpop.permute.xlu0 %1017
      %v1020 = vmul.f32 %v1014, %v750
      %v1021 = vmul.f32 %v1018, %v751
      %s1022 = scalar_lea.vmem [#allocation9], 6
      %1023 = vst [vmem:[%s1022] ss:$16 sm:$0x3] %v1020
      %1024 = vst [vmem:[%s1022] ss:$16 sm:$0xc] %v1020
      %1025 = vst [vmem:[%s1022] ss:$16 sm:$0x30] %v1020
      %1026 = vst [vmem:[%s1022] ss:$16 sm:$0xc0] %v1020
      %s1027 = scalar_lea.vmem [#allocation9], 134
      %1028 = vst [vmem:[%s1027] ss:$16 sm:$0x3] %v1021
      %1029 = vst [vmem:[%s1027] ss:$16 sm:$0xc] %v1021
      %1030 = vst [vmem:[%s1027] ss:$16 sm:$0x30] %v1021
      %1031 = vst [vmem:[%s1027] ss:$16 sm:$0xc0] %v1021
      %v1032 = vlaneseq
      %v1033 = vshrl.u32 %v1032, 7
      %v1034 = vsub.s32 7, %v1033
      %v1035 = vrot.slane %v741, %v1034
      %v1036 = vmul.f32 %v744, %v1035
      %v1037 = vmul.f32 %v745, %v1035
      %v1038 = vmul.f32 %v1036, 1.442695
      %v1039 = vpow.pop %v1038
      %v1040 = vmul.f32 %v1037, 1.442695
      %v1041 = vpow.pop %v1040
      %s1042 = scalar_lea.vmem [#allocation8], 7
      %1043 = vst [vmem:[%s1042] ss:$16 sm:$0x3] %v1039
      %1044 = vst [vmem:[%s1042] ss:$16 sm:$0xc] %v1039
      %1045 = vst [vmem:[%s1042] ss:$16 sm:$0x30] %v1039
      %1046 = vst [vmem:[%s1042] ss:$16 sm:$0xc0] %v1039
      %s1047 = scalar_lea.vmem [#allocation8], 135
      %1048 = vst [vmem:[%s1047] ss:$16 sm:$0x3] %v1041
      %1049 = vst [vmem:[%s1047] ss:$16 sm:$0xc] %v1041
      %1050 = vst [vmem:[%s1047] ss:$16 sm:$0x30] %v1041
      %1051 = vst [vmem:[%s1047] ss:$16 sm:$0xc0] %v1041
      %1052 = vset.pattern.permute.xlu0 7
      %1053 = vperm.xlu0 %1052, %v748
      %v1054 = vpop.permute.xlu0 %1053
      %1056 = vset.pattern.permute.xlu0 7
      %1057 = vperm.xlu0 %1056, %v749
      %v1058 = vpop.permute.xlu0 %1057
      %v1060 = vmul.f32 %v1054, %v750
      %v1061 = vmul.f32 %v1058, %v751
      %s1062 = scalar_lea.vmem [#allocation9], 7
      %1063 = vst [vmem:[%s1062] ss:$16 sm:$0x3] %v1060
      %1064 = vst [vmem:[%s1062] ss:$16 sm:$0xc] %v1060
      %1065 = vst [vmem:[%s1062] ss:$16 sm:$0x30] %v1060
      %1066 = vst [vmem:[%s1062] ss:$16 sm:$0xc0] %v1060
      %s1067 = scalar_lea.vmem [#allocation9], 135
      %1068 = vst [vmem:[%s1067] ss:$16 sm:$0x3] %v1061
      %1069 = vst [vmem:[%s1067] ss:$16 sm:$0xc] %v1061
      %1070 = vst [vmem:[%s1067] ss:$16 sm:$0x30] %v1061
      %1071 = vst [vmem:[%s1067] ss:$16 sm:$0xc0] %v1061
      %v1072 = vlaneseq
      %v1073 = vshrl.u32 %v1072, 7
      %v1074 = vsub.s32 0, %v1073
      %v1075 = vrot.slane %v742, %v1074
      %v1076 = vmul.f32 %v744, %v1075
      %v1077 = vmul.f32 %v745, %v1075
      %v1078 = vmul.f32 %v1076, 1.442695
      %v1079 = vpow.pop %v1078
      %v1080 = vmul.f32 %v1077, 1.442695
      %v1081 = vpow.pop %v1080
      %s1082 = scalar_lea.vmem [#allocation8], 8
      %1083 = vst [vmem:[%s1082] ss:$16 sm:$0x3] %v1079
      %1084 = vst [vmem:[%s1082] ss:$16 sm:$0xc] %v1079
      %1085 = vst [vmem:[%s1082] ss:$16 sm:$0x30] %v1079
      %1086 = vst [vmem:[%s1082] ss:$16 sm:$0xc0] %v1079
      %s1087 = scalar_lea.vmem [#allocation8], 136
      %1088 = vst [vmem:[%s1087] ss:$16 sm:$0x3] %v1081
      %1089 = vst [vmem:[%s1087] ss:$16 sm:$0xc] %v1081
      %1090 = vst [vmem:[%s1087] ss:$16 sm:$0x30] %v1081
      %1091 = vst [vmem:[%s1087] ss:$16 sm:$0xc0] %v1081
      %1092 = vset.pattern.permute.xlu0 8
      %1093 = vperm.xlu0 %1092, %v748
      %v1094 = vpop.permute.xlu0 %1093
      %1096 = vset.pattern.permute.xlu0 8
      %1097 = vperm.xlu0 %1096, %v749
      %v1098 = vpop.permute.xlu0 %1097
      %v1100 = vmul.f32 %v1094, %v750
      %v1101 = vmul.f32 %v1098, %v751
      %s1102 = scalar_lea.vmem [#allocation9], 8
      %1103 = vst [vmem:[%s1102] ss:$16 sm:$0x3] %v1100
      %1104 = vst [vmem:[%s1102] ss:$16 sm:$0xc] %v1100
      %1105 = vst [vmem:[%s1102] ss:$16 sm:$0x30] %v1100
      %1106 = vst [vmem:[%s1102] ss:$16 sm:$0xc0] %v1100
      %s1107 = scalar_lea.vmem [#allocation9], 136
      %1108 = vst [vmem:[%s1107] ss:$16 sm:$0x3] %v1101
      %1109 = vst [vmem:[%s1107] ss:$16 sm:$0xc] %v1101
      %1110 = vst [vmem:[%s1107] ss:$16 sm:$0x30] %v1101
      %1111 = vst [vmem:[%s1107] ss:$16 sm:$0xc0] %v1101
      %v1112 = vlaneseq
      %v1113 = vshrl.u32 %v1112, 7
      %v1114 = vsub.s32 1, %v1113
      %v1115 = vrot.slane %v742, %v1114
      %v1116 = vmul.f32 %v744, %v1115
      %v1117 = vmul.f32 %v745, %v1115
      %v1118 = vmul.f32 %v1116, 1.442695
      %v1119 = vpow.pop %v1118
      %v1120 = vmul.f32 %v1117, 1.442695
      %v1121 = vpow.pop %v1120
      %s1122 = scalar_lea.vmem [#allocation8], 9
      %1123 = vst [vmem:[%s1122] ss:$16 sm:$0x3] %v1119
      %1124 = vst [vmem:[%s1122] ss:$16 sm:$0xc] %v1119
      %1125 = vst [vmem:[%s1122] ss:$16 sm:$0x30] %v1119
      %1126 = vst [vmem:[%s1122] ss:$16 sm:$0xc0] %v1119
      %s1127 = scalar_lea.vmem [#allocation8], 137
      %1128 = vst [vmem:[%s1127] ss:$16 sm:$0x3] %v1121
      %1129 = vst [vmem:[%s1127] ss:$16 sm:$0xc] %v1121
      %1130 = vst [vmem:[%s1127] ss:$16 sm:$0x30] %v1121
      %1131 = vst [vmem:[%s1127] ss:$16 sm:$0xc0] %v1121
      %1132 = vset.pattern.permute.xlu0 9
      %1133 = vperm.xlu0 %1132, %v748
      %v1134 = vpop.permute.xlu0 %1133
      %1136 = vset.pattern.permute.xlu0 9
      %1137 = vperm.xlu0 %1136, %v749
      %v1138 = vpop.permute.xlu0 %1137
      %v1140 = vmul.f32 %v1134, %v750
      %v1141 = vmul.f32 %v1138, %v751
      %s1142 = scalar_lea.vmem [#allocation9], 9
      %1143 = vst [vmem:[%s1142] ss:$16 sm:$0x3] %v1140
      %1144 = vst [vmem:[%s1142] ss:$16 sm:$0xc] %v1140
      %1145 = vst [vmem:[%s1142] ss:$16 sm:$0x30] %v1140
      %1146 = vst [vmem:[%s1142] ss:$16 sm:$0xc0] %v1140
      %s1147 = scalar_lea.vmem [#allocation9], 137
      %1148 = vst [vmem:[%s1147] ss:$16 sm:$0x3] %v1141
      %1149 = vst [vmem:[%s1147] ss:$16 sm:$0xc] %v1141
      %1150 = vst [vmem:[%s1147] ss:$16 sm:$0x30] %v1141
      %1151 = vst [vmem:[%s1147] ss:$16 sm:$0xc0] %v1141
      %v1152 = vlaneseq
      %v1153 = vshrl.u32 %v1152, 7
      %v1154 = vsub.s32 2, %v1153
      %v1155 = vrot.slane %v742, %v1154
      %v1156 = vmul.f32 %v744, %v1155
      %v1157 = vmul.f32 %v745, %v1155
      %v1158 = vmul.f32 %v1156, 1.442695
      %v1159 = vpow.pop %v1158
      %v1160 = vmul.f32 %v1157, 1.442695
      %v1161 = vpow.pop %v1160
      %s1162 = scalar_lea.vmem [#allocation8], 10
      %1163 = vst [vmem:[%s1162] ss:$16 sm:$0x3] %v1159
      %1164 = vst [vmem:[%s1162] ss:$16 sm:$0xc] %v1159
      %1165 = vst [vmem:[%s1162] ss:$16 sm:$0x30] %v1159
      %1166 = vst [vmem:[%s1162] ss:$16 sm:$0xc0] %v1159
      %s1167 = scalar_lea.vmem [#allocation8], 138
      %1168 = vst [vmem:[%s1167] ss:$16 sm:$0x3] %v1161
      %1169 = vst [vmem:[%s1167] ss:$16 sm:$0xc] %v1161
      %1170 = vst [vmem:[%s1167] ss:$16 sm:$0x30] %v1161
      %1171 = vst [vmem:[%s1167] ss:$16 sm:$0xc0] %v1161
      %1172 = vset.pattern.permute.xlu0 10
      %1173 = vperm.xlu0 %1172, %v748
      %v1174 = vpop.permute.xlu0 %1173
      %1176 = vset.pattern.permute.xlu0 10
      %1177 = vperm.xlu0 %1176, %v749
      %v1178 = vpop.permute.xlu0 %1177
      %v1180 = vmul.f32 %v1174, %v750
      %v1181 = vmul.f32 %v1178, %v751
      %s1182 = scalar_lea.vmem [#allocation9], 10
      %1183 = vst [vmem:[%s1182] ss:$16 sm:$0x3] %v1180
      %1184 = vst [vmem:[%s1182] ss:$16 sm:$0xc] %v1180
      %1185 = vst [vmem:[%s1182] ss:$16 sm:$0x30] %v1180
      %1186 = vst [vmem:[%s1182] ss:$16 sm:$0xc0] %v1180
      %s1187 = scalar_lea.vmem [#allocation9], 138
      %1188 = vst [vmem:[%s1187] ss:$16 sm:$0x3] %v1181
      %1189 = vst [vmem:[%s1187] ss:$16 sm:$0xc] %v1181
      %1190 = vst [vmem:[%s1187] ss:$16 sm:$0x30] %v1181
      %1191 = vst [vmem:[%s1187] ss:$16 sm:$0xc0] %v1181
      %v1192 = vlaneseq
      %v1193 = vshrl.u32 %v1192, 7
      %v1194 = vsub.s32 3, %v1193
      %v1195 = vrot.slane %v742, %v1194
      %v1196 = vmul.f32 %v744, %v1195
      %v1197 = vmul.f32 %v745, %v1195
      %v1198 = vmul.f32 %v1196, 1.442695
      %v1199 = vpow.pop %v1198
      %v1200 = vmul.f32 %v1197, 1.442695
      %v1201 = vpow.pop %v1200
      %s1202 = scalar_lea.vmem [#allocation8], 11
      %1203 = vst [vmem:[%s1202] ss:$16 sm:$0x3] %v1199
      %1204 = vst [vmem:[%s1202] ss:$16 sm:$0xc] %v1199
      %1205 = vst [vmem:[%s1202] ss:$16 sm:$0x30] %v1199
      %1206 = vst [vmem:[%s1202] ss:$16 sm:$0xc0] %v1199
      %s1207 = scalar_lea.vmem [#allocation8], 139
      %1208 = vst [vmem:[%s1207] ss:$16 sm:$0x3] %v1201
      %1209 = vst [vmem:[%s1207] ss:$16 sm:$0xc] %v1201
      %1210 = vst [vmem:[%s1207] ss:$16 sm:$0x30] %v1201
      %1211 = vst [vmem:[%s1207] ss:$16 sm:$0xc0] %v1201
      %1212 = vset.pattern.permute.xlu0 11
      %1213 = vperm.xlu0 %1212, %v748
      %v1214 = vpop.permute.xlu0 %1213
      %1216 = vset.pattern.permute.xlu0 11
      %1217 = vperm.xlu0 %1216, %v749
      %v1218 = vpop.permute.xlu0 %1217
      %v1220 = vmul.f32 %v1214, %v750
      %v1221 = vmul.f32 %v1218, %v751
      %s1222 = scalar_lea.vmem [#allocation9], 11
      %1223 = vst [vmem:[%s1222] ss:$16 sm:$0x3] %v1220
      %1224 = vst [vmem:[%s1222] ss:$16 sm:$0xc] %v1220
      %1225 = vst [vmem:[%s1222] ss:$16 sm:$0x30] %v1220
      %1226 = vst [vmem:[%s1222] ss:$16 sm:$0xc0] %v1220
      %s1227 = scalar_lea.vmem [#allocation9], 139
      %1228 = vst [vmem:[%s1227] ss:$16 sm:$0x3] %v1221
      %1229 = vst [vmem:[%s1227] ss:$16 sm:$0xc] %v1221
      %1230 = vst [vmem:[%s1227] ss:$16 sm:$0x30] %v1221
      %1231 = vst [vmem:[%s1227] ss:$16 sm:$0xc0] %v1221
      %v1232 = vlaneseq
      %v1233 = vshrl.u32 %v1232, 7
      %v1234 = vsub.s32 4, %v1233
      %v1235 = vrot.slane %v742, %v1234
      %v1236 = vmul.f32 %v744, %v1235
      %v1237 = vmul.f32 %v745, %v1235
      %v1238 = vmul.f32 %v1236, 1.442695
      %v1239 = vpow.pop %v1238
      %v1240 = vmul.f32 %v1237, 1.442695
      %v1241 = vpow.pop %v1240
      %s1242 = scalar_lea.vmem [#allocation8], 12
      %1243 = vst [vmem:[%s1242] ss:$16 sm:$0x3] %v1239
      %1244 = vst [vmem:[%s1242] ss:$16 sm:$0xc] %v1239
      %1245 = vst [vmem:[%s1242] ss:$16 sm:$0x30] %v1239
      %1246 = vst [vmem:[%s1242] ss:$16 sm:$0xc0] %v1239
      %s1247 = scalar_lea.vmem [#allocation8], 140
      %1248 = vst [vmem:[%s1247] ss:$16 sm:$0x3] %v1241
      %1249 = vst [vmem:[%s1247] ss:$16 sm:$0xc] %v1241
      %1250 = vst [vmem:[%s1247] ss:$16 sm:$0x30] %v1241
      %1251 = vst [vmem:[%s1247] ss:$16 sm:$0xc0] %v1241
      %1252 = vset.pattern.permute.xlu0 12
      %1253 = vperm.xlu0 %1252, %v748
      %v1254 = vpop.permute.xlu0 %1253
      %1256 = vset.pattern.permute.xlu0 12
      %1257 = vperm.xlu0 %1256, %v749
      %v1258 = vpop.permute.xlu0 %1257
      %v1260 = vmul.f32 %v1254, %v750
      %v1261 = vmul.f32 %v1258, %v751
      %s1262 = scalar_lea.vmem [#allocation9], 12
      %1263 = vst [vmem:[%s1262] ss:$16 sm:$0x3] %v1260
      %1264 = vst [vmem:[%s1262] ss:$16 sm:$0xc] %v1260
      %1265 = vst [vmem:[%s1262] ss:$16 sm:$0x30] %v1260
      %1266 = vst [vmem:[%s1262] ss:$16 sm:$0xc0] %v1260
      %s1267 = scalar_lea.vmem [#allocation9], 140
      %1268 = vst [vmem:[%s1267] ss:$16 sm:$0x3] %v1261
      %1269 = vst [vmem:[%s1267] ss:$16 sm:$0xc] %v1261
      %1270 = vst [vmem:[%s1267] ss:$16 sm:$0x30] %v1261
      %1271 = vst [vmem:[%s1267] ss:$16 sm:$0xc0] %v1261
      %v1272 = vlaneseq
      %v1273 = vshrl.u32 %v1272, 7
      %v1274 = vsub.s32 5, %v1273
      %v1275 = vrot.slane %v742, %v1274
      %v1276 = vmul.f32 %v744, %v1275
      %v1277 = vmul.f32 %v745, %v1275
      %v1278 = vmul.f32 %v1276, 1.442695
      %v1279 = vpow.pop %v1278
      %v1280 = vmul.f32 %v1277, 1.442695
      %v1281 = vpow.pop %v1280
      %s1282 = scalar_lea.vmem [#allocation8], 13
      %1283 = vst [vmem:[%s1282] ss:$16 sm:$0x3] %v1279
      %1284 = vst [vmem:[%s1282] ss:$16 sm:$0xc] %v1279
      %1285 = vst [vmem:[%s1282] ss:$16 sm:$0x30] %v1279
      %1286 = vst [vmem:[%s1282] ss:$16 sm:$0xc0] %v1279
      %s1287 = scalar_lea.vmem [#allocation8], 141
      %1288 = vst [vmem:[%s1287] ss:$16 sm:$0x3] %v1281
      %1289 = vst [vmem:[%s1287] ss:$16 sm:$0xc] %v1281
      %1290 = vst [vmem:[%s1287] ss:$16 sm:$0x30] %v1281
      %1291 = vst [vmem:[%s1287] ss:$16 sm:$0xc0] %v1281
      %1292 = vset.pattern.permute.xlu0 13
      %1293 = vperm.xlu0 %1292, %v748
      %v1294 = vpop.permute.xlu0 %1293
      %1296 = vset.pattern.permute.xlu0 13
      %1297 = vperm.xlu0 %1296, %v749
      %v1298 = vpop.permute.xlu0 %1297
      %v1300 = vmul.f32 %v1294, %v750
      %v1301 = vmul.f32 %v1298, %v751
      %s1302 = scalar_lea.vmem [#allocation9], 13
      %1303 = vst [vmem:[%s1302] ss:$16 sm:$0x3] %v1300
      %1304 = vst [vmem:[%s1302] ss:$16 sm:$0xc] %v1300
      %1305 = vst [vmem:[%s1302] ss:$16 sm:$0x30] %v1300
      %1306 = vst [vmem:[%s1302] ss:$16 sm:$0xc0] %v1300
      %s1307 = scalar_lea.vmem [#allocation9], 141
      %1308 = vst [vmem:[%s1307] ss:$16 sm:$0x3] %v1301
      %1309 = vst [vmem:[%s1307] ss:$16 sm:$0xc] %v1301
      %1310 = vst [vmem:[%s1307] ss:$16 sm:$0x30] %v1301
      %1311 = vst [vmem:[%s1307] ss:$16 sm:$0xc0] %v1301
      %v1312 = vlaneseq
      %v1313 = vshrl.u32 %v1312, 7
      %v1314 = vsub.s32 6, %v1313
      %v1315 = vrot.slane %v742, %v1314
      %v1316 = vmul.f32 %v744, %v1315
      %v1317 = vmul.f32 %v745, %v1315
      %v1318 = vmul.f32 %v1316, 1.442695
      %v1319 = vpow.pop %v1318
      %v1320 = vmul.f32 %v1317, 1.442695
      %v1321 = vpow.pop %v1320
      %s1322 = scalar_lea.vmem [#allocation8], 14
      %1323 = vst [vmem:[%s1322] ss:$16 sm:$0x3] %v1319
      %1324 = vst [vmem:[%s1322] ss:$16 sm:$0xc] %v1319
      %1325 = vst [vmem:[%s1322] ss:$16 sm:$0x30] %v1319
      %1326 = vst [vmem:[%s1322] ss:$16 sm:$0xc0] %v1319
      %s1327 = scalar_lea.vmem [#allocation8], 142
      %1328 = vst [vmem:[%s1327] ss:$16 sm:$0x3] %v1321
      %1329 = vst [vmem:[%s1327] ss:$16 sm:$0xc] %v1321
      %1330 = vst [vmem:[%s1327] ss:$16 sm:$0x30] %v1321
      %1331 = vst [vmem:[%s1327] ss:$16 sm:$0xc0] %v1321
      %1332 = vset.pattern.permute.xlu0 14
      %1333 = vperm.xlu0 %1332, %v748
      %v1334 = vpop.permute.xlu0 %1333
      %1336 = vset.pattern.permute.xlu0 14
      %1337 = vperm.xlu0 %1336, %v749
      %v1338 = vpop.permute.xlu0 %1337
      %v1340 = vmul.f32 %v1334, %v750
      %v1341 = vmul.f32 %v1338, %v751
      %s1342 = scalar_lea.vmem [#allocation9], 14
      %1343 = vst [vmem:[%s1342] ss:$16 sm:$0x3] %v1340
      %1344 = vst [vmem:[%s1342] ss:$16 sm:$0xc] %v1340
      %1345 = vst [vmem:[%s1342] ss:$16 sm:$0x30] %v1340
      %1346 = vst [vmem:[%s1342] ss:$16 sm:$0xc0] %v1340
      %s1347 = scalar_lea.vmem [#allocation9], 142
      %1348 = vst [vmem:[%s1347] ss:$16 sm:$0x3] %v1341
      %1349 = vst [vmem:[%s1347] ss:$16 sm:$0xc] %v1341
      %1350 = vst [vmem:[%s1347] ss:$16 sm:$0x30] %v1341
      %1351 = vst [vmem:[%s1347] ss:$16 sm:$0xc0] %v1341
      %v1352 = vlaneseq
      %v1353 = vshrl.u32 %v1352, 7
      %v1354 = vsub.s32 7, %v1353
      %v1355 = vrot.slane %v742, %v1354
      %v1356 = vmul.f32 %v744, %v1355
      %v1357 = vmul.f32 %v745, %v1355
      %v1358 = vmul.f32 %v1356, 1.442695
      %v1359 = vpow.pop %v1358
      %v1360 = vmul.f32 %v1357, 1.442695
      %v1361 = vpow.pop %v1360
      %s1362 = scalar_lea.vmem [#allocation8], 15
      %1363 = vst [vmem:[%s1362] ss:$16 sm:$0x3] %v1359
      %1364 = vst [vmem:[%s1362] ss:$16 sm:$0xc] %v1359
      %1365 = vst [vmem:[%s1362] ss:$16 sm:$0x30] %v1359
      %1366 = vst [vmem:[%s1362] ss:$16 sm:$0xc0] %v1359
      %s1367 = scalar_lea.vmem [#allocation8], 143
      %1368 = vst [vmem:[%s1367] ss:$16 sm:$0x3] %v1361
      %1369 = vst [vmem:[%s1367] ss:$16 sm:$0xc] %v1361
      %1370 = vst [vmem:[%s1367] ss:$16 sm:$0x30] %v1361
      %1371 = vst [vmem:[%s1367] ss:$16 sm:$0xc0] %v1361
      %1372 = vset.pattern.permute.xlu0 15
      %1373 = vperm.xlu0 %1372, %v748
      %v1374 = vpop.permute.xlu0 %1373
      %1376 = vset.pattern.permute.xlu0 15
      %1377 = vperm.xlu0 %1376, %v749
      %v1378 = vpop.permute.xlu0 %1377
      %v1380 = vmul.f32 %v1374, %v750
      %v1381 = vmul.f32 %v1378, %v751
      %s1382 = scalar_lea.vmem [#allocation9], 15
      %1383 = vst [vmem:[%s1382] ss:$16 sm:$0x3] %v1380
      %1384 = vst [vmem:[%s1382] ss:$16 sm:$0xc] %v1380
      %1385 = vst [vmem:[%s1382] ss:$16 sm:$0x30] %v1380
      %1386 = vst [vmem:[%s1382] ss:$16 sm:$0xc0] %v1380
      %s1387 = scalar_lea.vmem [#allocation9], 143
      %1388 = vst [vmem:[%s1387] ss:$16 sm:$0x3] %v1381
      %1389 = vst [vmem:[%s1387] ss:$16 sm:$0xc] %v1381
      %1390 = vst [vmem:[%s1387] ss:$16 sm:$0x30] %v1381
      %1391 = vst [vmem:[%s1387] ss:$16 sm:$0xc0] %v1381
      loop: start=0, step=1, limit=16
      $region65: #{run.7} parent=63 // loop_pre_header
        _
      $region66: #{run.7} parent=63 // loop_header
        %s1393 = sphi 0, %s1397
        %p1394 = scmp.ge.s32.totalorder %s1393, 16
        %v1398 = vphi 0.0, %v1409
        %v1399 = vphi 0.0, %v1410
      $region67: #{run.7} parent=63 // loop_header_branch
        %1396 = sbr.rel (%p1394) target = $region71
      $region68: #{run.7} parent=63 // loop_body
        %s1400 = smul.u32 %s1393, 16
        %s1401 = scalar_lea.vmem [#allocation8], %s1400
        %v1402 = vld [vmem:[%s1401] sm:$0xff]
        %v1403 = vld [vmem:[%s1401 + $0x8] sm:$0xff]
        %v1404 = vmul.f32 %v1402, %v1398
        %v1405 = vmul.f32 %v1403, %v1399
        %s1406 = scalar_lea.vmem [#allocation9], %s1400
        %v1407 = vld [vmem:[%s1406] sm:$0xff]
        %v1408 = vld [vmem:[%s1406 + $0x8] sm:$0xff]
        %v1409 = vadd.f32 %v1404, %v1407
        %v1410 = vadd.f32 %v1405, %v1408
        %1411 = vst.msk [vmem:[%s1406] sm:$0xff] %vm452, %v1409
        %1412 = vst.msk [vmem:[%s1406 + $0x8] sm:$0xff] %vm452, %v1410
      $region69: #{run.7} parent=63 // loop_footer
        %s1397 = sadd.s32 1, %s1393
      $region70: #{run.7} parent=63 // loop_footer_branch
        %1392 = sbr.rel target = $region66
      $region71: #{run.7} parent=63 // loop_exit
        _
      %s1413 = sadd.s32 0, 16
      %p1414 = scmp.gt.s32.totalorder %s1413, 8
      // Predicated region
      $region72: #{run.7} parent=63 // pred_check
        %p1415 = pneg %p1414
      $region73: #{run.7} parent=63 // pred_check_branch
        %1417 = sbr.rel (%p1415) target = $region75
      $region74: #{run.7} parent=63 // pred_region
        %v1418 = vld [vmem:[#allocation6] sm:$0xff]
        %v1419 = vld [vmem:[#allocation6 + $0x8] sm:$0xff]
        %v1421 = vlaneseq
        %v1422 = vshrl.u32 %v1421, 7
        %v1423 = vsub.s32 0, %v1422
        %v1424 = vrot.slane %v743, %v1423
        %v1426 = vmul.f32 %v1424, %v746
        %v1427 = vmul.f32 %v1424, %v747
        %v1428 = vld [vmem:[#allocation9] ss:$16 sm:$0x3]
        %v1429 = vld [vmem:[#allocation9] ss:$16 sm:$0xc]
        %v1430 = vor.u32 %v1428, %v1429
        %v1431 = vld [vmem:[#allocation9] ss:$16 sm:$0x30]
        %v1432 = vor.u32 %v1430, %v1431
        %v1433 = vld [vmem:[#allocation9] ss:$16 sm:$0xc0]
        %v1434 = vor.u32 %v1432, %v1433
        %v1435 = vld [vmem:[%s787] ss:$16 sm:$0x3]
        %v1436 = vld [vmem:[%s787] ss:$16 sm:$0xc]
        %v1437 = vor.u32 %v1435, %v1436
        %v1438 = vld [vmem:[%s787] ss:$16 sm:$0x30]
        %v1439 = vor.u32 %v1437, %v1438
        %v1440 = vld [vmem:[%s787] ss:$16 sm:$0xc0]
        %v1441 = vor.u32 %v1439, %v1440
        %1443 = vset.pattern.permute.xlu0 0
        %1444 = vperm.xlu0 %1443, %v1418
        %v1445 = vpop.permute.xlu0 %1444
        %1448 = vset.pattern.permute.xlu0 0
        %1449 = vperm.xlu0 %1448, %v1419
        %v1450 = vpop.permute.xlu0 %1449
        %v1452 = vmul.f32 %v1434, %v1445
        %v1453 = vmul.f32 %v1441, %v1450
        %v1454 = vadd.f32 %v1426, %v1452
        %v1455 = vadd.f32 %v1427, %v1453
        %v1456 = vld [vmem:[%s822] ss:$16 sm:$0x3]
        %v1457 = vld [vmem:[%s822] ss:$16 sm:$0xc]
        %v1458 = vor.u32 %v1456, %v1457
        %v1459 = vld [vmem:[%s822] ss:$16 sm:$0x30]
        %v1460 = vor.u32 %v1458, %v1459
        %v1461 = vld [vmem:[%s822] ss:$16 sm:$0xc0]
        %v1462 = vor.u32 %v1460, %v1461
        %v1463 = vld [vmem:[%s827] ss:$16 sm:$0x3]
        %v1464 = vld [vmem:[%s827] ss:$16 sm:$0xc]
        %v1465 = vor.u32 %v1463, %v1464
        %v1466 = vld [vmem:[%s827] ss:$16 sm:$0x30]
        %v1467 = vor.u32 %v1465, %v1466
        %v1468 = vld [vmem:[%s827] ss:$16 sm:$0xc0]
        %v1469 = vor.u32 %v1467, %v1468
        %1470 = vset.pattern.permute.xlu0 1
        %1471 = vperm.xlu0 %1470, %v1418
        %v1472 = vpop.permute.xlu0 %1471
        %1474 = vset.pattern.permute.xlu0 1
        %1475 = vperm.xlu0 %1474, %v1419
        %v1476 = vpop.permute.xlu0 %1475
        %v1478 = vmul.f32 %v1462, %v1472
        %v1479 = vmul.f32 %v1469, %v1476
        %v1480 = vadd.f32 %v1454, %v1478
        %v1481 = vadd.f32 %v1455, %v1479
        %v1482 = vld [vmem:[%s862] ss:$16 sm:$0x3]
        %v1483 = vld [vmem:[%s862] ss:$16 sm:$0xc]
        %v1484 = vor.u32 %v1482, %v1483
        %v1485 = vld [vmem:[%s862] ss:$16 sm:$0x30]
        %v1486 = vor.u32 %v1484, %v1485
        %v1487 = vld [vmem:[%s862] ss:$16 sm:$0xc0]
        %v1488 = vor.u32 %v1486, %v1487
        %v1489 = vld [vmem:[%s867] ss:$16 sm:$0x3]
        %v1490 = vld [vmem:[%s867] ss:$16 sm:$0xc]
        %v1491 = vor.u32 %v1489, %v1490
        %v1492 = vld [vmem:[%s867] ss:$16 sm:$0x30]
        %v1493 = vor.u32 %v1491, %v1492
        %v1494 = vld [vmem:[%s867] ss:$16 sm:$0xc0]
        %v1495 = vor.u32 %v1493, %v1494
        %1496 = vset.pattern.permute.xlu0 2
        %1497 = vperm.xlu0 %1496, %v1418
        %v1498 = vpop.permute.xlu0 %1497
        %1500 = vset.pattern.permute.xlu0 2
        %1501 = vperm.xlu0 %1500, %v1419
        %v1502 = vpop.permute.xlu0 %1501
        %v1504 = vmul.f32 %v1488, %v1498
        %v1505 = vmul.f32 %v1495, %v1502
        %v1506 = vadd.f32 %v1480, %v1504
        %v1507 = vadd.f32 %v1481, %v1505
        %v1508 = vld [vmem:[%s902] ss:$16 sm:$0x3]
        %v1509 = vld [vmem:[%s902] ss:$16 sm:$0xc]
        %v1510 = vor.u32 %v1508, %v1509
        %v1511 = vld [vmem:[%s902] ss:$16 sm:$0x30]
        %v1512 = vor.u32 %v1510, %v1511
        %v1513 = vld [vmem:[%s902] ss:$16 sm:$0xc0]
        %v1514 = vor.u32 %v1512, %v1513
        %v1515 = vld [vmem:[%s907] ss:$16 sm:$0x3]
        %v1516 = vld [vmem:[%s907] ss:$16 sm:$0xc]
        %v1517 = vor.u32 %v1515, %v1516
        %v1518 = vld [vmem:[%s907] ss:$16 sm:$0x30]
        %v1519 = vor.u32 %v1517, %v1518
        %v1520 = vld [vmem:[%s907] ss:$16 sm:$0xc0]
        %v1521 = vor.u32 %v1519, %v1520
        %1522 = vset.pattern.permute.xlu0 3
        %1523 = vperm.xlu0 %1522, %v1418
        %v1524 = vpop.permute.xlu0 %1523
        %1526 = vset.pattern.permute.xlu0 3
        %1527 = vperm.xlu0 %1526, %v1419
        %v1528 = vpop.permute.xlu0 %1527
        %v1530 = vmul.f32 %v1514, %v1524
        %v1531 = vmul.f32 %v1521, %v1528
        %v1532 = vadd.f32 %v1506, %v1530
        %v1533 = vadd.f32 %v1507, %v1531
        %v1534 = vld [vmem:[%s942] ss:$16 sm:$0x3]
        %v1535 = vld [vmem:[%s942] ss:$16 sm:$0xc]
        %v1536 = vor.u32 %v1534, %v1535
        %v1537 = vld [vmem:[%s942] ss:$16 sm:$0x30]
        %v1538 = vor.u32 %v1536, %v1537
        %v1539 = vld [vmem:[%s942] ss:$16 sm:$0xc0]
        %v1540 = vor.u32 %v1538, %v1539
        %v1541 = vld [vmem:[%s947] ss:$16 sm:$0x3]
        %v1542 = vld [vmem:[%s947] ss:$16 sm:$0xc]
        %v1543 = vor.u32 %v1541, %v1542
        %v1544 = vld [vmem:[%s947] ss:$16 sm:$0x30]
        %v1545 = vor.u32 %v1543, %v1544
        %v1546 = vld [vmem:[%s947] ss:$16 sm:$0xc0]
        %v1547 = vor.u32 %v1545, %v1546
        %1548 = vset.pattern.permute.xlu0 4
        %1549 = vperm.xlu0 %1548, %v1418
        %v1550 = vpop.permute.xlu0 %1549
        %1552 = vset.pattern.permute.xlu0 4
        %1553 = vperm.xlu0 %1552, %v1419
        %v1554 = vpop.permute.xlu0 %1553
        %v1556 = vmul.f32 %v1540, %v1550
        %v1557 = vmul.f32 %v1547, %v1554
        %v1558 = vadd.f32 %v1532, %v1556
        %v1559 = vadd.f32 %v1533, %v1557
        %v1560 = vld [vmem:[%s982] ss:$16 sm:$0x3]
        %v1561 = vld [vmem:[%s982] ss:$16 sm:$0xc]
        %v1562 = vor.u32 %v1560, %v1561
        %v1563 = vld [vmem:[%s982] ss:$16 sm:$0x30]
        %v1564 = vor.u32 %v1562, %v1563
        %v1565 = vld [vmem:[%s982] ss:$16 sm:$0xc0]
        %v1566 = vor.u32 %v1564, %v1565
        %v1567 = vld [vmem:[%s987] ss:$16 sm:$0x3]
        %v1568 = vld [vmem:[%s987] ss:$16 sm:$0xc]
        %v1569 = vor.u32 %v1567, %v1568
        %v1570 = vld [vmem:[%s987] ss:$16 sm:$0x30]
        %v1571 = vor.u32 %v1569, %v1570
        %v1572 = vld [vmem:[%s987] ss:$16 sm:$0xc0]
        %v1573 = vor.u32 %v1571, %v1572
        %1574 = vset.pattern.permute.xlu0 5
        %1575 = vperm.xlu0 %1574, %v1418
        %v1576 = vpop.permute.xlu0 %1575
        %1578 = vset.pattern.permute.xlu0 5
        %1579 = vperm.xlu0 %1578, %v1419
        %v1580 = vpop.permute.xlu0 %1579
        %v1582 = vmul.f32 %v1566, %v1576
        %v1583 = vmul.f32 %v1573, %v1580
        %v1584 = vadd.f32 %v1558, %v1582
        %v1585 = vadd.f32 %v1559, %v1583
        %v1586 = vld [vmem:[%s1022] ss:$16 sm:$0x3]
        %v1587 = vld [vmem:[%s1022] ss:$16 sm:$0xc]
        %v1588 = vor.u32 %v1586, %v1587
        %v1589 = vld [vmem:[%s1022] ss:$16 sm:$0x30]
        %v1590 = vor.u32 %v1588, %v1589
        %v1591 = vld [vmem:[%s1022] ss:$16 sm:$0xc0]
        %v1592 = vor.u32 %v1590, %v1591
        %v1593 = vld [vmem:[%s1027] ss:$16 sm:$0x3]
        %v1594 = vld [vmem:[%s1027] ss:$16 sm:$0xc]
        %v1595 = vor.u32 %v1593, %v1594
        %v1596 = vld [vmem:[%s1027] ss:$16 sm:$0x30]
        %v1597 = vor.u32 %v1595, %v1596
        %v1598 = vld [vmem:[%s1027] ss:$16 sm:$0xc0]
        %v1599 = vor.u32 %v1597, %v1598
        %1600 = vset.pattern.permute.xlu0 6
        %1601 = vperm.xlu0 %1600, %v1418
        %v1602 = vpop.permute.xlu0 %1601
        %1604 = vset.pattern.permute.xlu0 6
        %1605 = vperm.xlu0 %1604, %v1419
        %v1606 = vpop.permute.xlu0 %1605
        %v1608 = vmul.f32 %v1592, %v1602
        %v1609 = vmul.f32 %v1599, %v1606
        %v1610 = vadd.f32 %v1584, %v1608
        %v1611 = vadd.f32 %v1585, %v1609
        %v1612 = vld [vmem:[%s1062] ss:$16 sm:$0x3]
        %v1613 = vld [vmem:[%s1062] ss:$16 sm:$0xc]
        %v1614 = vor.u32 %v1612, %v1613
        %v1615 = vld [vmem:[%s1062] ss:$16 sm:$0x30]
        %v1616 = vor.u32 %v1614, %v1615
        %v1617 = vld [vmem:[%s1062] ss:$16 sm:$0xc0]
        %v1618 = vor.u32 %v1616, %v1617
        %v1619 = vld [vmem:[%s1067] ss:$16 sm:$0x3]
        %v1620 = vld [vmem:[%s1067] ss:$16 sm:$0xc]
        %v1621 = vor.u32 %v1619, %v1620
        %v1622 = vld [vmem:[%s1067] ss:$16 sm:$0x30]
        %v1623 = vor.u32 %v1621, %v1622
        %v1624 = vld [vmem:[%s1067] ss:$16 sm:$0xc0]
        %v1625 = vor.u32 %v1623, %v1624
        %1626 = vset.pattern.permute.xlu0 7
        %1627 = vperm.xlu0 %1626, %v1418
        %v1628 = vpop.permute.xlu0 %1627
        %1630 = vset.pattern.permute.xlu0 7
        %1631 = vperm.xlu0 %1630, %v1419
        %v1632 = vpop.permute.xlu0 %1631
        %v1634 = vmul.f32 %v1618, %v1628
        %v1635 = vmul.f32 %v1625, %v1632
        %v1636 = vadd.f32 %v1610, %v1634
        %v1637 = vadd.f32 %v1611, %v1635
        %v1638 = vld [vmem:[%s1102] ss:$16 sm:$0x3]
        %v1639 = vld [vmem:[%s1102] ss:$16 sm:$0xc]
        %v1640 = vor.u32 %v1638, %v1639
        %v1641 = vld [vmem:[%s1102] ss:$16 sm:$0x30]
        %v1642 = vor.u32 %v1640, %v1641
        %v1643 = vld [vmem:[%s1102] ss:$16 sm:$0xc0]
        %v1644 = vor.u32 %v1642, %v1643
        %v1645 = vld [vmem:[%s1107] ss:$16 sm:$0x3]
        %v1646 = vld [vmem:[%s1107] ss:$16 sm:$0xc]
        %v1647 = vor.u32 %v1645, %v1646
        %v1648 = vld [vmem:[%s1107] ss:$16 sm:$0x30]
        %v1649 = vor.u32 %v1647, %v1648
        %v1650 = vld [vmem:[%s1107] ss:$16 sm:$0xc0]
        %v1651 = vor.u32 %v1649, %v1650
        %1652 = vset.pattern.permute.xlu0 8
        %1653 = vperm.xlu0 %1652, %v1418
        %v1654 = vpop.permute.xlu0 %1653
        %1656 = vset.pattern.permute.xlu0 8
        %1657 = vperm.xlu0 %1656, %v1419
        %v1658 = vpop.permute.xlu0 %1657
        %v1660 = vmul.f32 %v1644, %v1654
        %v1661 = vmul.f32 %v1651, %v1658
        %v1662 = vadd.f32 %v1636, %v1660
        %v1663 = vadd.f32 %v1637, %v1661
        %v1664 = vld [vmem:[%s1142] ss:$16 sm:$0x3]
        %v1665 = vld [vmem:[%s1142] ss:$16 sm:$0xc]
        %v1666 = vor.u32 %v1664, %v1665
        %v1667 = vld [vmem:[%s1142] ss:$16 sm:$0x30]
        %v1668 = vor.u32 %v1666, %v1667
        %v1669 = vld [vmem:[%s1142] ss:$16 sm:$0xc0]
        %v1670 = vor.u32 %v1668, %v1669
        %v1671 = vld [vmem:[%s1147] ss:$16 sm:$0x3]
        %v1672 = vld [vmem:[%s1147] ss:$16 sm:$0xc]
        %v1673 = vor.u32 %v1671, %v1672
        %v1674 = vld [vmem:[%s1147] ss:$16 sm:$0x30]
        %v1675 = vor.u32 %v1673, %v1674
        %v1676 = vld [vmem:[%s1147] ss:$16 sm:$0xc0]
        %v1677 = vor.u32 %v1675, %v1676
        %1678 = vset.pattern.permute.xlu0 9
        %1679 = vperm.xlu0 %1678, %v1418
        %v1680 = vpop.permute.xlu0 %1679
        %1682 = vset.pattern.permute.xlu0 9
        %1683 = vperm.xlu0 %1682, %v1419
        %v1684 = vpop.permute.xlu0 %1683
        %v1686 = vmul.f32 %v1670, %v1680
        %v1687 = vmul.f32 %v1677, %v1684
        %v1688 = vadd.f32 %v1662, %v1686
        %v1689 = vadd.f32 %v1663, %v1687
        %v1690 = vld [vmem:[%s1182] ss:$16 sm:$0x3]
        %v1691 = vld [vmem:[%s1182] ss:$16 sm:$0xc]
        %v1692 = vor.u32 %v1690, %v1691
        %v1693 = vld [vmem:[%s1182] ss:$16 sm:$0x30]
        %v1694 = vor.u32 %v1692, %v1693
        %v1695 = vld [vmem:[%s1182] ss:$16 sm:$0xc0]
        %v1696 = vor.u32 %v1694, %v1695
        %v1697 = vld [vmem:[%s1187] ss:$16 sm:$0x3]
        %v1698 = vld [vmem:[%s1187] ss:$16 sm:$0xc]
        %v1699 = vor.u32 %v1697, %v1698
        %v1700 = vld [vmem:[%s1187] ss:$16 sm:$0x30]
        %v1701 = vor.u32 %v1699, %v1700
        %v1702 = vld [vmem:[%s1187] ss:$16 sm:$0xc0]
        %v1703 = vor.u32 %v1701, %v1702
        %1704 = vset.pattern.permute.xlu0 10
        %1705 = vperm.xlu0 %1704, %v1418
        %v1706 = vpop.permute.xlu0 %1705
        %1708 = vset.pattern.permute.xlu0 10
        %1709 = vperm.xlu0 %1708, %v1419
        %v1710 = vpop.permute.xlu0 %1709
        %v1712 = vmul.f32 %v1696, %v1706
        %v1713 = vmul.f32 %v1703, %v1710
        %v1714 = vadd.f32 %v1688, %v1712
        %v1715 = vadd.f32 %v1689, %v1713
        %v1716 = vld [vmem:[%s1222] ss:$16 sm:$0x3]
        %v1717 = vld [vmem:[%s1222] ss:$16 sm:$0xc]
        %v1718 = vor.u32 %v1716, %v1717
        %v1719 = vld [vmem:[%s1222] ss:$16 sm:$0x30]
        %v1720 = vor.u32 %v1718, %v1719
        %v1721 = vld [vmem:[%s1222] ss:$16 sm:$0xc0]
        %v1722 = vor.u32 %v1720, %v1721
        %v1723 = vld [vmem:[%s1227] ss:$16 sm:$0x3]
        %v1724 = vld [vmem:[%s1227] ss:$16 sm:$0xc]
        %v1725 = vor.u32 %v1723, %v1724
        %v1726 = vld [vmem:[%s1227] ss:$16 sm:$0x30]
        %v1727 = vor.u32 %v1725, %v1726
        %v1728 = vld [vmem:[%s1227] ss:$16 sm:$0xc0]
        %v1729 = vor.u32 %v1727, %v1728
        %1730 = vset.pattern.permute.xlu0 11
        %1731 = vperm.xlu0 %1730, %v1418
        %v1732 = vpop.permute.xlu0 %1731
        %1734 = vset.pattern.permute.xlu0 11
        %1735 = vperm.xlu0 %1734, %v1419
        %v1736 = vpop.permute.xlu0 %1735
        %v1738 = vmul.f32 %v1722, %v1732
        %v1739 = vmul.f32 %v1729, %v1736
        %v1740 = vadd.f32 %v1714, %v1738
        %v1741 = vadd.f32 %v1715, %v1739
        %v1742 = vld [vmem:[%s1262] ss:$16 sm:$0x3]
        %v1743 = vld [vmem:[%s1262] ss:$16 sm:$0xc]
        %v1744 = vor.u32 %v1742, %v1743
        %v1745 = vld [vmem:[%s1262] ss:$16 sm:$0x30]
        %v1746 = vor.u32 %v1744, %v1745
        %v1747 = vld [vmem:[%s1262] ss:$16 sm:$0xc0]
        %v1748 = vor.u32 %v1746, %v1747
        %v1749 = vld [vmem:[%s1267] ss:$16 sm:$0x3]
        %v1750 = vld [vmem:[%s1267] ss:$16 sm:$0xc]
        %v1751 = vor.u32 %v1749, %v1750
        %v1752 = vld [vmem:[%s1267] ss:$16 sm:$0x30]
        %v1753 = vor.u32 %v1751, %v1752
        %v1754 = vld [vmem:[%s1267] ss:$16 sm:$0xc0]
        %v1755 = vor.u32 %v1753, %v1754
        %1756 = vset.pattern.permute.xlu0 12
        %1757 = vperm.xlu0 %1756, %v1418
        %v1758 = vpop.permute.xlu0 %1757
        %1760 = vset.pattern.permute.xlu0 12
        %1761 = vperm.xlu0 %1760, %v1419
        %v1762 = vpop.permute.xlu0 %1761
        %v1764 = vmul.f32 %v1748, %v1758
        %v1765 = vmul.f32 %v1755, %v1762
        %v1766 = vadd.f32 %v1740, %v1764
        %v1767 = vadd.f32 %v1741, %v1765
        %v1768 = vld [vmem:[%s1302] ss:$16 sm:$0x3]
        %v1769 = vld [vmem:[%s1302] ss:$16 sm:$0xc]
        %v1770 = vor.u32 %v1768, %v1769
        %v1771 = vld [vmem:[%s1302] ss:$16 sm:$0x30]
        %v1772 = vor.u32 %v1770, %v1771
        %v1773 = vld [vmem:[%s1302] ss:$16 sm:$0xc0]
        %v1774 = vor.u32 %v1772, %v1773
        %v1775 = vld [vmem:[%s1307] ss:$16 sm:$0x3]
        %v1776 = vld [vmem:[%s1307] ss:$16 sm:$0xc]
        %v1777 = vor.u32 %v1775, %v1776
        %v1778 = vld [vmem:[%s1307] ss:$16 sm:$0x30]
        %v1779 = vor.u32 %v1777, %v1778
        %v1780 = vld [vmem:[%s1307] ss:$16 sm:$0xc0]
        %v1781 = vor.u32 %v1779, %v1780
        %1782 = vset.pattern.permute.xlu0 13
        %1783 = vperm.xlu0 %1782, %v1418
        %v1784 = vpop.permute.xlu0 %1783
        %1786 = vset.pattern.permute.xlu0 13
        %1787 = vperm.xlu0 %1786, %v1419
        %v1788 = vpop.permute.xlu0 %1787
        %v1790 = vmul.f32 %v1774, %v1784
        %v1791 = vmul.f32 %v1781, %v1788
        %v1792 = vadd.f32 %v1766, %v1790
        %v1793 = vadd.f32 %v1767, %v1791
        %v1794 = vld [vmem:[%s1342] ss:$16 sm:$0x3]
        %v1795 = vld [vmem:[%s1342] ss:$16 sm:$0xc]
        %v1796 = vor.u32 %v1794, %v1795
        %v1797 = vld [vmem:[%s1342] ss:$16 sm:$0x30]
        %v1798 = vor.u32 %v1796, %v1797
        %v1799 = vld [vmem:[%s1342] ss:$16 sm:$0xc0]
        %v1800 = vor.u32 %v1798, %v1799
        %v1801 = vld [vmem:[%s1347] ss:$16 sm:$0x3]
        %v1802 = vld [vmem:[%s1347] ss:$16 sm:$0xc]
        %v1803 = vor.u32 %v1801, %v1802
        %v1804 = vld [vmem:[%s1347] ss:$16 sm:$0x30]
        %v1805 = vor.u32 %v1803, %v1804
        %v1806 = vld [vmem:[%s1347] ss:$16 sm:$0xc0]
        %v1807 = vor.u32 %v1805, %v1806
        %1808 = vset.pattern.permute.xlu0 14
        %1809 = vperm.xlu0 %1808, %v1418
        %v1810 = vpop.permute.xlu0 %1809
        %1812 = vset.pattern.permute.xlu0 14
        %1813 = vperm.xlu0 %1812, %v1419
        %v1814 = vpop.permute.xlu0 %1813
        %v1816 = vmul.f32 %v1800, %v1810
        %v1817 = vmul.f32 %v1807, %v1814
        %v1818 = vadd.f32 %v1792, %v1816
        %v1819 = vadd.f32 %v1793, %v1817
        %v1820 = vld [vmem:[%s1382] ss:$16 sm:$0x3]
        %v1821 = vld [vmem:[%s1382] ss:$16 sm:$0xc]
        %v1822 = vor.u32 %v1820, %v1821
        %v1823 = vld [vmem:[%s1382] ss:$16 sm:$0x30]
        %v1824 = vor.u32 %v1822, %v1823
        %v1825 = vld [vmem:[%s1382] ss:$16 sm:$0xc0]
        %v1826 = vor.u32 %v1824, %v1825
        %v1827 = vld [vmem:[%s1387] ss:$16 sm:$0x3]
        %v1828 = vld [vmem:[%s1387] ss:$16 sm:$0xc]
        %v1829 = vor.u32 %v1827, %v1828
        %v1830 = vld [vmem:[%s1387] ss:$16 sm:$0x30]
        %v1831 = vor.u32 %v1829, %v1830
        %v1832 = vld [vmem:[%s1387] ss:$16 sm:$0xc0]
        %v1833 = vor.u32 %v1831, %v1832
        %1834 = vset.pattern.permute.xlu0 15
        %1835 = vperm.xlu0 %1834, %v1418
        %v1836 = vpop.permute.xlu0 %1835
        %1838 = vset.pattern.permute.xlu0 15
        %1839 = vperm.xlu0 %1838, %v1419
        %v1840 = vpop.permute.xlu0 %1839
        %v1842 = vmul.f32 %v1826, %v1836
        %v1843 = vmul.f32 %v1833, %v1840
        %v1844 = vadd.f32 %v1818, %v1842
        %v1845 = vadd.f32 %v1819, %v1843
        %1846 = vst.msk [vmem:[#allocation7] sm:$0xff] %vm452, %v1844
        %1847 = vst.msk [vmem:[#allocation7 + $0x8] sm:$0xff] %vm452, %v1845
      $region75: #{run.7} parent=63 // pred_fallthru
        _
      %v1848 = vld [vmem:[%s2] sm:$0xf]
      %v1849 = vld [vmem:[%s2 + $0x4] sm:$0xf]
      %v1850 = vld [vmem:[%s2 + $0x8] sm:$0xf]
      %v1851 = vld [vmem:[%s2 + $0xc] sm:$0xf]
      %v1852 = vpack.c.bf16 %v387, %v387
      %v1857 = vunpack.c.l.b16 %v1848
      %v1858 = vunpack.c.l.b16 %v1849
      %v1859 = vunpack.c.l.b16 %v1850
      %v1860 = vunpack.c.l.b16 %v1851
      %v1861 = vpack.c.b16 %v1858, %v1857
      %v1862 = vpack.c.b16 %v1860, %v1859
      %v1866 = vsel %vm405, %v1852, 0
      %1868 = vmatprep.subr.bf16.mxu0 0
      %1869 = vmatpush1.bf16.msra.mxu0 %v1861
      %1870 = vmatprep.subr.bf16.mxu0 0
      %1871 = vmatpush1.bf16.msra.mxu0 %v1862
      %1872 = vmatprep.subr.bf16.mxu0 0
      %1873 = vmatpush1.bf16.msra.mxu0 0
      %1874 = vmatprep.subr.bf16.mxu0 0
      %1875 = vmatpush1.bf16.msra.mxu0 0
      %1876 = vmatprep.subr.bf16.mxu0 0
      %1877 = vmatpush1.bf16.msra.mxu0 0
      %1878 = vmatprep.subr.bf16.mxu0 0
      %1879 = vmatpush1.bf16.msra.mxu0 0
      %1880 = vmatprep.subr.bf16.mxu0 0
      %1881 = vmatpush1.bf16.msra.mxu0 0
      %1882 = vmatprep.subr.bf16.mxu0 0
      %1883 = vmatpush1.bf16.msra.mxu0 0
      %1884 = vmatprep.subr.bf16.mxu0 0
      %1885 = vmatpush1.bf16.msra.mxu0 0
      %1886 = vmatprep.subr.bf16.mxu0 0
      %1887 = vmatpush1.bf16.msra.mxu0 0
      %1888 = vmatprep.subr.bf16.mxu0 0
      %1889 = vmatpush1.bf16.msra.mxu0 0
      %1890 = vmatprep.subr.bf16.mxu0 0
      %1891 = vmatpush1.bf16.msra.mxu0 0
      %1892 = vmatprep.subr.bf16.mxu0 0
      %1893 = vmatpush1.bf16.msra.mxu0 0
      %1894 = vmatprep.subr.bf16.mxu0 0
      %1895 = vmatpush1.bf16.msra.mxu0 0
      %1896 = vmatprep.subr.bf16.mxu0 0
      %1897 = vmatpush1.bf16.msra.mxu0 0
      %1898 = vmatprep.subr.bf16.mxu0 0
      %1899 = vmatpush1.bf16.msra.mxu0 0
      %1900 = vmatprep.mubr.bf16.mxu0 0
      %1901 = vmatmul.mubr.bf16.gmra.mrb[0].mxu0 %v1866
      %v1902 = vpop.f32.mrb[0].mxu0
      %v1903 = vadd.f32 0.0, %v1902
      %v1904 = vpop.f32.mrb[0].mxu0
      %v1905 = vpop.f32.mrb[0].mxu0
      %v1906 = vpop.f32.mrb[0].mxu0
      %1907 = vdwg.mxu0
      %v1908 = vld [vmem:[#allocation7 + $0x8] sm:$0xff]
      %v1909 = vxor.u32 %v1903, 2147483648
      %v1910 = vmul.f32 %v1909, 1.442695
      %v1911 = vpow.pop %v1910
      %v1912 = vadd.f32 %v1911, 1.0
      %v1913 = vrcp.pop %v1912
      %v1914 = vmul.f32 1.0, %v1913
      %v1915 = vmul.f32 %v1903, %v1914
      %v1916 = vmul.f32 %v1908, %v1915
      %v1917 = vld [vmem:[%s10] sm:$0xf]
      %v1918 = vld [vmem:[%s10 + $0x4] sm:$0xf]
      %v1919 = vld [vmem:[%s10 + $0x8] sm:$0xf]
      %v1920 = vld [vmem:[%s10 + $0xc] sm:$0xf]
      %v1921 = vld [vmem:[%s10 + $0x10] sm:$0xf]
      %v1922 = vld [vmem:[%s10 + $0x14] sm:$0xf]
      %v1923 = vld [vmem:[%s10 + $0x18] sm:$0xf]
      %v1924 = vld [vmem:[%s10 + $0x1c] sm:$0xf]
      %v1925 = vpack.c.bf16 %v1916, %v1916
      %v1934 = vunpack.c.l.b16 %v1917
      %v1935 = vunpack.c.l.b16 %v1918
      %v1936 = vunpack.c.l.b16 %v1919
      %v1937 = vunpack.c.l.b16 %v1920
      %v1938 = vunpack.c.l.b16 %v1921
      %v1939 = vunpack.c.l.b16 %v1922
      %v1940 = vunpack.c.l.b16 %v1923
      %v1941 = vunpack.c.l.b16 %v1924
      %v1942 = vpack.c.b16 %v1935, %v1934
      %v1943 = vpack.c.b16 %v1937, %v1936
      %v1944 = vpack.c.b16 %v1939, %v1938
      %v1945 = vpack.c.b16 %v1941, %v1940
      %v1951 = vsel %vm452, %v1925, 0
      %1953 = vmatprep.subr.bf16.mxu0 0
      %1954 = vmatpush1.bf16.msra.mxu0 %v1942
      %1955 = vmatprep.subr.bf16.mxu0 0
      %1956 = vmatpush1.bf16.msra.mxu0 %v1943
      %1957 = vmatprep.subr.bf16.mxu0 0
      %1958 = vmatpush1.bf16.msra.mxu0 %v1944
      %1959 = vmatprep.subr.bf16.mxu0 0
      %1960 = vmatpush1.bf16.msra.mxu0 %v1945
      %1961 = vmatprep.subr.bf16.mxu0 0
      %1962 = vmatpush1.bf16.msra.mxu0 0
      %1963 = vmatprep.subr.bf16.mxu0 0
      %1964 = vmatpush1.bf16.msra.mxu0 0
      %1965 = vmatprep.subr.bf16.mxu0 0
      %1966 = vmatpush1.bf16.msra.mxu0 0
      %1967 = vmatprep.subr.bf16.mxu0 0
      %1968 = vmatpush1.bf16.msra.mxu0 0
      %1969 = vmatprep.subr.bf16.mxu0 0
      %1970 = vmatpush1.bf16.msra.mxu0 0
      %1971 = vmatprep.subr.bf16.mxu0 0
      %1972 = vmatpush1.bf16.msra.mxu0 0
      %1973 = vmatprep.subr.bf16.mxu0 0
      %1974 = vmatpush1.bf16.msra.mxu0 0
      %1975 = vmatprep.subr.bf16.mxu0 0
      %1976 = vmatpush1.bf16.msra.mxu0 0
      %1977 = vmatprep.subr.bf16.mxu0 0
      %1978 = vmatpush1.bf16.msra.mxu0 0
      %1979 = vmatprep.subr.bf16.mxu0 0
      %1980 = vmatpush1.bf16.msra.mxu0 0
      %1981 = vmatprep.subr.bf16.mxu0 0
      %1982 = vmatpush1.bf16.msra.mxu0 0
      %1983 = vmatprep.subr.bf16.mxu0 0
      %1984 = vmatpush1.bf16.msra.mxu0 0
      %1985 = vmatprep.mubr.bf16.mxu0 0
      %1986 = vmatmul.mubr.bf16.gmra.mrb[0].mxu0 %v1951
      %v1987 = vpop.f32.mrb[0].mxu0
      %v1988 = vadd.f32 0.0, %v1987
      %v1989 = vpop.f32.mrb[0].mxu0
      %v1990 = vpop.f32.mrb[0].mxu0
      %v1991 = vpop.f32.mrb[0].mxu0
      %1992 = vdwg.mxu0
      %1993 = vst.msk [vmem:[%s384] sm:$0xff] %vm405, %v1988
      %p1994 = scmp.lt.s32.totalorder %s22, 1
      %s1995 = scalar_select %p1994, %s22, 1
      %s1996 = smul.addr %s1995, 8
      %s1997 = scalar_lea.vmem %s11, %s1996
      // Predicated region
      $region76: #{run.7} parent=63 // pred_check
        %p1998 = pneg %p276
      $region77: #{run.7} parent=63 // pred_check_branch
        %2000 = sbr.rel (%p1998) target = $region79
      $region78: #{run.7} parent=63 // pred_region
        _
      $region79: #{run.7} parent=63 // pred_fallthru
        _
    $region64: #{run.7} parent=5 // pred_fallthru
      _
    %p2001 = scmp.le.s32.totalorder 2, %s17
    // Predicated region
    $region80: #{run.7} parent=5 // pred_check
      %p2002 = pneg %p2001
    $region81: #{run.7} parent=5 // pred_check_branch
      %2004 = sbr.rel (%p2002) target = $region83
    $region82: #{run.7} parent=5 // pred_region
      %s2005 = ssub.s32 %s17, 2
      // Predicated region
      $region84: #{run.7} parent=82 // pred_check
        %p2006 = pneg %p282
      $region85: #{run.7} parent=82 // pred_check_branch
        %2008 = sbr.rel (%p2006) target = $region87
      $region86: #{run.7} parent=82 // pred_region
        %p2009 = scmp.lt.s32.totalorder %s23, 1
        %s2010 = scalar_select %p2009, %s23, 1
        %s2011 = smul.addr %s2010, 8
        %s2012 = scalar_lea.vmem %s11, %s2011
      $region87: #{run.7} parent=82 // pred_fallthru
        _
    $region83: #{run.7} parent=5 // pred_fallthru
      _
  $region6: #{run.7} parent=0 // loop_footer
    %s21 = sadd.s32 1, %s17
  $region7: #{run.7} parent=0 // loop_footer_branch
    %16 = sbr.rel target = $region3
  $region8: #{run.7} parent=0 // loop_exit
    _

</llo_original>
